<compile_context>
chip_gen: v6e
topology: v6e:2x2x1
jax: 0.10.0
libtpu: 0.0.40
codegen_flags: <defaults>
</compile_context>

<pallas_src>
import functools

import jax
import jax.numpy as jnp
import numpy as np
from jax import lax
from jax.experimental import pallas as pl
from jax.experimental.pallas import tpu as pltpu


# --------------------------- XLA-side im2col prep ---------------------------
def _im2col_3x3(x):
    """x: (N, H, W, C) -> (N, H*W, 9*C) patches for a 3x3 / pad=1 conv.

    K (last dim) is ordered (dy, dx, cin), matching prepare_params' weights.
    """
    N, H, W, C = x.shape
    xp = jnp.pad(x, ((0, 0), (1, 1), (1, 1), (0, 0)))
    cols = jnp.concatenate(
        [xp[:, dy:dy + H, dx:dx + W, :] for dy in range(3) for dx in range(3)],
        axis=-1)
    return cols.reshape(N, H * W, 9 * C)


def _im2col_3x3_pooled(x):
    """Per-output-column-parity patches for conv(3x3, pad=1) fused w/ 2x2 pool.

    x: (N, H, W, C) -> two arrays (N, H*(W//2), 9*C); array `p` holds, at row
    h*(W//2) + wo, the 3x3 patch around conv-output column w = 2*wo + p.
    """
    N, H, W, C = x.shape
    Wo = W // 2
    xp = jnp.pad(x, ((0, 0), (1, 1), (1, 1), (0, 0)))
    out = []
    for par in range(2):
        slabs = [xp[:, dy:dy + H, par + dx:par + dx + 2 * Wo - 1:2, :]
                 for dy in range(3) for dx in range(3)]
        out.append(jnp.concatenate(slabs, axis=-1).reshape(N, H * Wo, 9 * C))
    return out


# ---------------- conv1: single im2col matmul + bias + ReLU -----------------
def matmul_bias_relu_kernel(x_ref, w_ref, b_ref, o_ref):
    # x_ref: (1, mb, K) bf16 ; w_ref: (K, Cout) bf16 ; b_ref: (1, Cout) f32
    y = jnp.dot(x_ref[0], w_ref[...], preferred_element_type=jnp.float32)
    o_ref[0] = jnp.maximum(y + b_ref[...], 0.0).astype(o_ref.dtype)


def matmul_bias_relu(x, w, b, *, mblocks):
    # x: (N, M, K) bf16 ; w: (K, Cout) bf16 ; b: (1, Cout) f32 -> (N, M, Cout) bf16
    N, M, K = x.shape
    Cout = w.shape[1]
    mb = M // mblocks
    return pl.pallas_call(
        matmul_bias_relu_kernel,
        out_shape=jax.ShapeDtypeStruct((N, M, Cout), jnp.bfloat16),
        grid=(N, mblocks),
        in_specs=[
            pl.BlockSpec((1, mb, K), lambda n, r: (n, r, 0)),
            pl.BlockSpec((K, Cout), lambda n, r: (0, 0)),
            pl.BlockSpec((1, Cout), lambda n, r: (0, 0)),
        ],
        out_specs=pl.BlockSpec((1, mb, Cout), lambda n, r: (n, r, 0)),
        compiler_params=pltpu.CompilerParams(
            dimension_semantics=("parallel", "parallel")),
    )(x, w, b)


# -------- fused 3x3 conv (pad=1) + bias + ReLU + 2x2 maxpool (im2col) -------
def conv_pool_kernel(p0_ref, p1_ref, w_ref, b_ref, o_ref, *, hb, Wo):
    # p{0,1}_ref: (1, 2*hb*Wo, 9*Cin) bf16 patches, parity 0/1 of the output col
    # w_ref     : (9*Cin, Cout) bf16 ; b_ref: (1, Cout) f32
    # o_ref     : (1, hb, Wo, Cout) pooled output block
    w = w_ref[...]
    # ONE K=9*Cin matmul per column parity (fills the MXU systolic depth).
    y0 = jnp.dot(p0_ref[0], w, preferred_element_type=jnp.float32)
    y1 = jnp.dot(p1_ref[0], w, preferred_element_type=jnp.float32)
    colmax = jnp.maximum(y0, y1)                     # max over output-col parity
    cout = colmax.shape[-1]
    z = colmax.reshape(hb, 2, Wo, cout)              # split rows h = 2*ho + hp
    pooled = jnp.maximum(z[:, 0], z[:, 1])           # (hb, Wo, Cout)
    # relu(pool(conv)+b) == pool(relu(conv+b)): per-channel bias, max monotone.
    o_ref[0] = jnp.maximum(pooled + b_ref[...], 0.0).astype(o_ref.dtype)


def conv3x3_relu_pool(x, w, b, *, hb):
    # x: (N, H, W, Cin) bf16 ; w: (9*Cin, Cout) bf16 ; b: (1, Cout) f32
    # -> (N, H//2, W//2, Cout) bf16
    N, H, W, Cin = x.shape
    Cout = w.shape[-1]
    Ho, Wo = H // 2, W // 2
    K = 9 * Cin
    mb = 2 * hb * Wo                                  # patch rows per grid step

    p0, p1 = _im2col_3x3_pooled(x)                    # (N, H*Wo, 9*Cin) each
    kernel = functools.partial(conv_pool_kernel, hb=hb, Wo=Wo)
    patch_spec = pl.BlockSpec((1, mb, K), lambda n, r: (n, r, 0))
    return pl.pallas_call(
        kernel,
        out_shape=jax.ShapeDtypeStruct((N, Ho, Wo, Cout), jnp.bfloat16),
        grid=(N, Ho // hb),
        in_specs=[patch_spec, patch_spec,
                  pl.BlockSpec((K, Cout), lambda n, r: (0, 0)),
                  pl.BlockSpec((1, Cout), lambda n, r: (0, 0))],
        out_specs=pl.BlockSpec((1, hb, Wo, Cout), lambda n, r: (n, r, 0, 0)),
        compiler_params=pltpu.CompilerParams(
            dimension_semantics=("parallel", "parallel")),
    )(p0, p1, w, b)


# ------------------- fused fc1 + ReLU + fc2 (K-tiled fc1) -------------------
def fused_mlp_kernel(x_ref, w1_ref, b1_ref, w2_ref, b2_ref, o_ref, acc_ref):
    k = pl.program_id(1)

    @pl.when(k == 0)
    def _():
        acc_ref[...] = jnp.zeros_like(acc_ref)

    acc_ref[...] += jnp.dot(x_ref[...], w1_ref[...],
                            preferred_element_type=jnp.float32)

    @pl.when(k == pl.num_programs(1) - 1)
    def _():
        h = jnp.maximum(acc_ref[...] + b1_ref[...], 0.0)
        o_ref[...] = (jnp.dot(h, w2_ref[...],
                              preferred_element_type=jnp.float32)
                      + b2_ref[...]).astype(o_ref.dtype)


def fused_mlp(x, w1, b1, w2, b2, *, tk=1024):
    # x: (N, Din) bf16 ; w1: (Din, Dh) bf16 ; w2: (Dh, Dout) f32
    N, Din = x.shape
    Dh = w1.shape[1]
    Dout = w2.shape[1]
    bm = N if N <= 128 else 128                       # batch block (v7x VMEM / 2nd TC)
    nb = pl.cdiv(N, bm)
    nk = Din // tk
    return pl.pallas_call(
        fused_mlp_kernel,
        out_shape=jax.ShapeDtypeStruct((N, Dout), jnp.float32),
        grid=(nb, nk),
        in_specs=[
            pl.BlockSpec((bm, tk), lambda b, k: (b, k)),
            pl.BlockSpec((tk, Dh), lambda b, k: (k, 0)),
            pl.BlockSpec((1, Dh), lambda b, k: (0, 0)),
            pl.BlockSpec((Dh, Dout), lambda b, k: (0, 0)),
            pl.BlockSpec((1, Dout), lambda b, k: (0, 0)),
        ],
        out_specs=pl.BlockSpec((bm, Dout), lambda b, k: (b, 0)),
        scratch_shapes=[pltpu.VMEM((bm, Dh), jnp.float32)],
        compiler_params=pltpu.CompilerParams(
            dimension_semantics=("parallel", "arbitrary")),
    )(x, w1, b1, w2, b2)


# ----------------------- parameters (PyTorch shapes) ------------------------
def init_params(key):
    ks = jax.random.split(key, 10)

    def conv_w(k, cout, cin):
        return 0.1 * jax.random.normal(k, (cout, cin, 3, 3), jnp.float32)

    return {
        "conv1_w": conv_w(ks[0], 32, 3),
        "conv1_b": 0.01 * jax.random.normal(ks[1], (32,), jnp.float32),
        "conv2_w": conv_w(ks[2], 64, 32),
        "conv2_b": 0.01 * jax.random.normal(ks[3], (64,), jnp.float32),
        "conv3_w": conv_w(ks[4], 128, 64),
        "conv3_b": 0.01 * jax.random.normal(ks[5], (128,), jnp.float32),
        "fc1_w": 0.02 * jax.random.normal(ks[6], (128, 128 * 8 * 8), jnp.float32),
        "fc1_b": 0.01 * jax.random.normal(ks[7], (128,), jnp.float32),
        "fc2_w": 0.05 * jax.random.normal(ks[8], (10, 128), jnp.float32),
        "fc2_b": 0.01 * jax.random.normal(ks[9], (10,), jnp.float32),
    }


def prepare_params(p):
    """One-time conversion of PyTorch-layout params to kernel layouts."""
    def cw(w):  # (Cout, Cin, 3, 3) -> (9*Cin, Cout) bf16, K ordered (dy, dx, cin)
        cout, cin = w.shape[0], w.shape[1]
        return (jnp.transpose(w, (2, 3, 1, 0))
                .reshape(9 * cin, cout).astype(jnp.bfloat16))

    # conv1 im2col weight, K padded 27 -> 32 (zero rows; patches padded too).
    w1 = jnp.pad(cw(p["conv1_w"]), ((0, 5), (0, 0)))
    # fc1 weight permuted so it accepts the NHWC flatten of (N, 8, 8, 128)
    # (torch flattens NCHW: index c*64 + h*8 + w).
    fc1 = jnp.transpose(p["fc1_w"].reshape(128, 128, 8, 8), (2, 3, 1, 0))
    fc1 = fc1.reshape(8 * 8 * 128, 128).astype(jnp.bfloat16)
    return {
        "w1": w1, "b1": p["conv1_b"][None, :],
        "w2": cw(p["conv2_w"]), "b2": p["conv2_b"][None, :],
        "w3": cw(p["conv3_w"]), "b3": p["conv3_b"][None, :],
        "fc1_w": fc1, "fc1_b": p["fc1_b"][None, :],
        "fc2_w": p["fc2_w"].T, "fc2_b": p["fc2_b"][None, :],
    }


# ------------------------------ forward pass --------------------------------
@jax.jit
def cifar10_forward(x_nchw, kp):
    N = x_nchw.shape[0]
    x = jnp.transpose(x_nchw, (0, 2, 3, 1)).astype(jnp.bfloat16)   # (N,32,32,3)

    # conv1 + ReLU: one K=32 (padded from 27) im2col matmul per row-block.
    cols = _im2col_3x3(x)                                          # (N, 1024, 27)
    cols = jnp.pad(cols, ((0, 0), (0, 0), (0, 5)))                 # K -> 32
    x = matmul_bias_relu(cols, kp["w1"], kp["b1"], mblocks=4)      # (N, 1024, 32)
    x = x.reshape(N, 32, 32, 32)

    # conv2 + ReLU + 2x2 maxpool (fused), K = 288
    x = conv3x3_relu_pool(x, kp["w2"], kp["b2"], hb=4)             # (N, 16, 16, 64)
    # conv3 + ReLU + 2x2 maxpool (fused), K = 576
    x = conv3x3_relu_pool(x, kp["w3"], kp["b3"], hb=8)             # (N, 8, 8, 128)

    # NHWC flatten (fc1 weight pre-permuted to match) + fused fc1/fc2
    x = x.reshape(N, 8 * 8 * 128)
    return fused_mlp(x, kp["fc1_w"], kp["fc1_b"], kp["fc2_w"], kp["fc2_b"])


# ------------------------- pure-JAX reference (check) -----------------------
def reference_forward(x, p):
    prec = lax.Precision.HIGHEST

    def conv(x, w, b):
        y = lax.conv_general_dilated(
            x, w, (1, 1), ((1, 1), (1, 1)),
            dimension_numbers=("NCHW", "OIHW", "NCHW"), precision=prec)
        return jax.nn.relu(y + b[None, :, None, None])

    def pool(x):
        return lax.reduce_window(x, -jnp.inf, lax.max,
                                 (1, 1, 2, 2), (1, 1, 2, 2), "VALID")

    x = conv(x, p["conv1_w"], p["conv1_b"])
    x = pool(conv(x, p["conv2_w"], p["conv2_b"]))
    x = pool(conv(x, p["conv3_w"], p["conv3_b"]))
    x = x.reshape(x.shape[0], -1)
    x = jax.nn.relu(jnp.dot(x, p["fc1_w"].T, precision=prec) + p["fc1_b"])
    return jnp.dot(x, p["fc2_w"].T, precision=prec) + p["fc2_b"]


if __name__ == "__main__":
    key = jax.random.PRNGKey(0)
    pkey, xkey = jax.random.split(key)
    params = init_params(pkey)
    kparams = prepare_params(params)                   # one-time weight prep
    x = jax.random.normal(xkey, (2, 3, 32, 32), jnp.float32)

    out = jax.block_until_ready(cifar10_forward(x, kparams))
    assert out.shape == (2, 10)

    ref = jax.block_until_ready(reference_forward(x, params))
    # Kernels use bf16 matmul operands with f32 accumulation (per perf review);
    # tolerance is set accordingly vs. the f32 HIGHEST-precision reference.
    np.testing.assert_allclose(np.asarray(out), np.asarray(ref),
                               rtol=2e-2, atol=2e-2)

    print("KERNEL_OK")
</pallas_src>

<mosaic_0001>
module attributes {stable_mosaic.version = 11 : i64} {
  func.func @matmul_bias_relu_kernel(%arg0: i32, %arg1: i32, %arg2: memref<1x256x32xbf16, #tpu.memory_space<vmem>>, %arg3: memref<32x32xbf16, #tpu.memory_space<vmem>>, %arg4: memref<1x32xf32, #tpu.memory_space<vmem>>, %arg5: memref<1x256x32xbf16, #tpu.memory_space<vmem>>) attributes {dimension_semantics = [#tpu.dimension_semantics<parallel>, #tpu.dimension_semantics<parallel>], iteration_bounds = array<i64: 2, 4>, scalar_prefetch = 0 : i64, scratch_operands = 0 : i64, tpu.core_type = #tpu.core_type<tc>, window_params = [{transform_indices = @transform_0, window_bounds = array<i64: 1, 256, 32>}, {pipeline_mode = #tpu.pipeline_mode<synchronous>, transform_indices = @transform_1, window_bounds = array<i64: 32, 32>}, {pipeline_mode = #tpu.pipeline_mode<synchronous>, transform_indices = @transform_2, window_bounds = array<i64: 1, 32>}, {transform_indices = @transform_3, window_bounds = array<i64: 1, 256, 32>}]} {
    %c0 = arith.constant 0 : index
    %c0_0 = arith.constant 0 : index
    %c0_1 = arith.constant 0 : index
    %0 = vector.load %arg2[%c0, %c0_0, %c0_1] : memref<1x256x32xbf16, #tpu.memory_space<vmem>>, vector<1x256x32xbf16>
    %1 = vector.shape_cast %0 : vector<1x256x32xbf16> to vector<256x32xbf16>
    %c0_2 = arith.constant 0 : index
    %c0_3 = arith.constant 0 : index
    %2 = vector.load %arg3[%c0_2, %c0_3] : memref<32x32xbf16, #tpu.memory_space<vmem>>, vector<32x32xbf16>
    %cst = arith.constant dense<0.000000e+00> : vector<256x32xf32>
    %3 = tpu.matmul %1, %2, %cst {dimension_numbers = #tpu.dot_dimension_numbers<[1], [0], [0], [1], [0, 0, 1, 1], [], []>} : vector<256x32xbf16>, vector<32x32xbf16>, vector<256x32xf32> -> vector<256x32xf32>
    %c0_4 = arith.constant 0 : index
    %c0_5 = arith.constant 0 : index
    %4 = vector.load %arg4[%c0_4, %c0_5] : memref<1x32xf32, #tpu.memory_space<vmem>>, vector<1x32xf32>
    %5 = vector.broadcast %4 : vector<1x32xf32> to vector<256x32xf32>
    %6 = arith.addf %3, %5 : vector<256x32xf32>
    %cst_6 = arith.constant 0.000000e+00 : f32
    %7 = vector.broadcast %cst_6 : f32 to vector<256x32xf32>
    %8 = arith.maximumf %6, %7 : vector<256x32xf32>
    %9 = arith.truncf %8 : vector<256x32xf32> to vector<256x32xbf16>
    %c0_7 = arith.constant 0 : index
    %c0_8 = arith.constant 0 : index
    %c0_9 = arith.constant 0 : index
    %10 = vector.load %arg5[%c0_7, %c0_8, %c0_9] : memref<1x256x32xbf16, #tpu.memory_space<vmem>>, vector<1x256x32xbf16>
    %11 = vector.shape_cast %10 : vector<1x256x32xbf16> to vector<256x32xbf16>
    %12 = vector.shape_cast %9 : vector<256x32xbf16> to vector<1x256x32xbf16>
    tpu.vector_store %arg5[%c0_7, %c0_8, %c0_9], %12 {strides = array<i32>} : memref<1x256x32xbf16, #tpu.memory_space<vmem>>, vector<1x256x32xbf16>,
    return
  }
  func.func @transform_0(%arg0: i32, %arg1: i32) -> (i32, i32, i32) {
    %c0_i32 = arith.constant 0 : i32
    %c0_i32_0 = arith.constant 0 : i32
    return %arg0, %arg1, %c0_i32 : i32, i32, i32
  }
  func.func @transform_1(%arg0: i32, %arg1: i32) -> (i32, i32) {
    %c0_i32 = arith.constant 0 : i32
    %c0_i32_0 = arith.constant 0 : i32
    %c0_i32_1 = arith.constant 0 : i32
    return %c0_i32, %c0_i32_0 : i32, i32
  }
  func.func @transform_2(%arg0: i32, %arg1: i32) -> (i32, i32) {
    %c0_i32 = arith.constant 0 : i32
    %c0_i32_0 = arith.constant 0 : i32
    %c0_i32_1 = arith.constant 0 : i32
    return %c0_i32, %c0_i32_0 : i32, i32
  }
  func.func @transform_3(%arg0: i32, %arg1: i32) -> (i32, i32, i32) {
    %c0_i32 = arith.constant 0 : i32
    %c0_i32_0 = arith.constant 0 : i32
    return %arg0, %arg1, %c0_i32 : i32, i32, i32
  }
}

module attributes {stable_mosaic.version = 11 : i64} {
  func.func @conv_pool_kernel(%arg0: i32, %arg1: i32, %arg2: memref<1x128x288xbf16, #tpu.memory_space<vmem>>, %arg3: memref<1x128x288xbf16, #tpu.memory_space<vmem>>, %arg4: memref<288x64xbf16, #tpu.memory_space<vmem>>, %arg5: memref<1x64xf32, #tpu.memory_space<vmem>>, %arg6: memref<1x4x16x64xbf16, #tpu.memory_space<vmem>>) attributes {dimension_semantics = [#tpu.dimension_semantics<parallel>, #tpu.dimension_semantics<parallel>], iteration_bounds = array<i64: 2, 4>, scalar_prefetch = 0 : i64, scratch_operands = 0 : i64, tpu.core_type = #tpu.core_type<tc>, window_params = [{transform_indices = @transform_0, window_bounds = array<i64: 1, 128, 288>}, {transform_indices = @transform_1, window_bounds = array<i64: 1, 128, 288>}, {pipeline_mode = #tpu.pipeline_mode<synchronous>, transform_indices = @transform_2, window_bounds = array<i64: 288, 64>}, {pipeline_mode = #tpu.pipeline_mode<synchronous>, transform_indices = @transform_3, window_bounds = array<i64: 1, 64>}, {transform_indices = @transform_4, window_bounds = array<i64: 1, 4, 16, 64>}]} {
    %c0 = arith.constant 0 : index
    %c0_0 = arith.constant 0 : index
    %0 = vector.load %arg4[%c0, %c0_0] : memref<288x64xbf16, #tpu.memory_space<vmem>>, vector<288x64xbf16>
    %c0_1 = arith.constant 0 : index
    %c0_2 = arith.constant 0 : index
    %c0_3 = arith.constant 0 : index
    %1 = vector.load %arg2[%c0_1, %c0_2, %c0_3] : memref<1x128x288xbf16, #tpu.memory_space<vmem>>, vector<1x128x288xbf16>
    %2 = vector.shape_cast %1 : vector<1x128x288xbf16> to vector<128x288xbf16>
    %cst = arith.constant dense<0.000000e+00> : vector<128x64xf32>
    %3 = tpu.matmul %2, %0, %cst {dimension_numbers = #tpu.dot_dimension_numbers<[1], [0], [0], [1], [0, 0, 1, 1], [], []>} : vector<128x288xbf16>, vector<288x64xbf16>, vector<128x64xf32> -> vector<128x64xf32>
    %c0_4 = arith.constant 0 : index
    %c0_5 = arith.constant 0 : index
    %c0_6 = arith.constant 0 : index
    %4 = vector.load %arg3[%c0_4, %c0_5, %c0_6] : memref<1x128x288xbf16, #tpu.memory_space<vmem>>, vector<1x128x288xbf16>
    %5 = vector.shape_cast %4 : vector<1x128x288xbf16> to vector<128x288xbf16>
    %cst_7 = arith.constant dense<0.000000e+00> : vector<128x64xf32>
    %6 = tpu.matmul %5, %0, %cst_7 {dimension_numbers = #tpu.dot_dimension_numbers<[1], [0], [0], [1], [0, 0, 1, 1], [], []>} : vector<128x288xbf16>, vector<288x64xbf16>, vector<128x64xf32> -> vector<128x64xf32>
    %7 = arith.maximumf %3, %6 : vector<128x64xf32>
    %8 = vector.shape_cast %7 : vector<128x64xf32> to vector<4x2x16x64xf32>
    %9 = vector.extract_strided_slice %8 {offsets = [0, 0, 0, 0], sizes = [4, 1, 16, 64], strides = [1, 1, 1, 1]} : vector<4x2x16x64xf32> to vector<4x1x16x64xf32>
    %10 = vector.shape_cast %9 : vector<4x1x16x64xf32> to vector<4x16x64xf32>
    %11 = vector.extract_strided_slice %8 {offsets = [0, 1, 0, 0], sizes = [4, 1, 16, 64], strides = [1, 1, 1, 1]} : vector<4x2x16x64xf32> to vector<4x1x16x64xf32>
    %12 = vector.shape_cast %11 : vector<4x1x16x64xf32> to vector<4x16x64xf32>
    %13 = arith.maximumf %10, %12 : vector<4x16x64xf32>
    %c0_8 = arith.constant 0 : index
    %c0_9 = arith.constant 0 : index
    %14 = vector.load %arg5[%c0_8, %c0_9] : memref<1x64xf32, #tpu.memory_space<vmem>>, vector<1x64xf32>
    %15 = vector.shape_cast %14 : vector<1x64xf32> to vector<1x1x64xf32>
    %16 = vector.broadcast %15 : vector<1x1x64xf32> to vector<4x16x64xf32>
    %17 = arith.addf %13, %16 : vector<4x16x64xf32>
    %cst_10 = arith.constant 0.000000e+00 : f32
    %18 = vector.broadcast %cst_10 : f32 to vector<4x16x64xf32>
    %19 = arith.maximumf %17, %18 : vector<4x16x64xf32>
    %20 = arith.truncf %19 : vector<4x16x64xf32> to vector<4x16x64xbf16>
    %c0_11 = arith.constant 0 : index
    %c0_12 = arith.constant 0 : index
    %c0_13 = arith.constant 0 : index
    %c0_14 = arith.constant 0 : index
    %21 = vector.load %arg6[%c0_11, %c0_12, %c0_13, %c0_14] : memref<1x4x16x64xbf16, #tpu.memory_space<vmem>>, vector<1x4x16x64xbf16>
    %22 = vector.shape_cast %21 : vector<1x4x16x64xbf16> to vector<4x16x64xbf16>
    %23 = vector.shape_cast %20 : vector<4x16x64xbf16> to vector<1x4x16x64xbf16>
    tpu.vector_store %arg6[%c0_11, %c0_12, %c0_13, %c0_14], %23 {strides = array<i32>} : memref<1x4x16x64xbf16, #tpu.memory_space<vmem>>, vector<1x4x16x64xbf16>,
    return
  }
  func.func @transform_0(%arg0: i32, %arg1: i32) -> (i32, i32, i32) {
    %c0_i32 = arith.constant 0 : i32
    %c0_i32_0 = arith.constant 0 : i32
    return %arg0, %arg1, %c0_i32 : i32, i32, i32
  }
  func.func @transform_1(%arg0: i32, %arg1: i32) -> (i32, i32, i32) {
    %c0_i32 = arith.constant 0 : i32
    %c0_i32_0 = arith.constant 0 : i32
    return %arg0, %arg1, %c0_i32 : i32, i32, i32
  }
  func.func @transform_2(%arg0: i32, %arg1: i32) -> (i32, i32) {
    %c0_i32 = arith.constant 0 : i32
    %c0_i32_0 = arith.constant 0 : i32
    %c0_i32_1 = arith.constant 0 : i32
    return %c0_i32, %c0_i32_0 : i32, i32
  }
  func.func @transform_3(%arg0: i32, %arg1: i32) -> (i32, i32) {
    %c0_i32 = arith.constant 0 : i32
    %c0_i32_0 = arith.constant 0 : i32
    %c0_i32_1 = arith.constant 0 : i32
    return %c0_i32, %c0_i32_0 : i32, i32
  }
  func.func @transform_4(%arg0: i32, %arg1: i32) -> (i32, i32, i32, i32) {
    %c0_i32 = arith.constant 0 : i32
    %c0_i32_0 = arith.constant 0 : i32
    %c0_i32_1 = arith.constant 0 : i32
    return %arg0, %arg1, %c0_i32, %c0_i32_0 : i32, i32, i32, i32
  }
}

module attributes {stable_mosaic.version = 11 : i64} {
  func.func @conv_pool_kernel(%arg0: i32, %arg1: i32, %arg2: memref<1x128x576xbf16, #tpu.memory_space<vmem>>, %arg3: memref<1x128x576xbf16, #tpu.memory_space<vmem>>, %arg4: memref<576x128xbf16, #tpu.memory_space<vmem>>, %arg5: memref<1x128xf32, #tpu.memory_space<vmem>>, %arg6: memref<1x8x8x128xbf16, #tpu.memory_space<vmem>>) attributes {dimension_semantics = [#tpu.dimension_semantics<parallel>, #tpu.dimension_semantics<parallel>], iteration_bounds = array<i64: 2, 1>, scalar_prefetch = 0 : i64, scratch_operands = 0 : i64, tpu.core_type = #tpu.core_type<tc>, window_params = [{transform_indices = @transform_0, window_bounds = array<i64: 1, 128, 576>}, {transform_indices = @transform_1, window_bounds = array<i64: 1, 128, 576>}, {pipeline_mode = #tpu.pipeline_mode<synchronous>, transform_indices = @transform_2, window_bounds = array<i64: 576, 128>}, {pipeline_mode = #tpu.pipeline_mode<synchronous>, transform_indices = @transform_3, window_bounds = array<i64: 1, 128>}, {transform_indices = @transform_4, window_bounds = array<i64: 1, 8, 8, 128>}]} {
    %c0 = arith.constant 0 : index
    %c0_0 = arith.constant 0 : index
    %0 = vector.load %arg4[%c0, %c0_0] : memref<576x128xbf16, #tpu.memory_space<vmem>>, vector<576x128xbf16>
    %c0_1 = arith.constant 0 : index
    %c0_2 = arith.constant 0 : index
    %c0_3 = arith.constant 0 : index
    %1 = vector.load %arg2[%c0_1, %c0_2, %c0_3] : memref<1x128x576xbf16, #tpu.memory_space<vmem>>, vector<1x128x576xbf16>
    %2 = vector.shape_cast %1 : vector<1x128x576xbf16> to vector<128x576xbf16>
    %cst = arith.constant dense<0.000000e+00> : vector<128x128xf32>
    %3 = tpu.matmul %2, %0, %cst {dimension_numbers = #tpu.dot_dimension_numbers<[1], [0], [0], [1], [0, 0, 1, 1], [], []>} : vector<128x576xbf16>, vector<576x128xbf16>, vector<128x128xf32> -> vector<128x128xf32>
    %c0_4 = arith.constant 0 : index
    %c0_5 = arith.constant 0 : index
    %c0_6 = arith.constant 0 : index
    %4 = vector.load %arg3[%c0_4, %c0_5, %c0_6] : memref<1x128x576xbf16, #tpu.memory_space<vmem>>, vector<1x128x576xbf16>
    %5 = vector.shape_cast %4 : vector<1x128x576xbf16> to vector<128x576xbf16>
    %cst_7 = arith.constant dense<0.000000e+00> : vector<128x128xf32>
    %6 = tpu.matmul %5, %0, %cst_7 {dimension_numbers = #tpu.dot_dimension_numbers<[1], [0], [0], [1], [0, 0, 1, 1], [], []>} : vector<128x576xbf16>, vector<576x128xbf16>, vector<128x128xf32> -> vector<128x128xf32>
    %7 = arith.maximumf %3, %6 : vector<128x128xf32>
    %8 = vector.shape_cast %7 : vector<128x128xf32> to vector<8x2x8x128xf32>
    %9 = vector.extract_strided_slice %8 {offsets = [0, 0, 0, 0], sizes = [8, 1, 8, 128], strides = [1, 1, 1, 1]} : vector<8x2x8x128xf32> to vector<8x1x8x128xf32>
    %10 = vector.shape_cast %9 : vector<8x1x8x128xf32> to vector<8x8x128xf32>
    %11 = vector.extract_strided_slice %8 {offsets = [0, 1, 0, 0], sizes = [8, 1, 8, 128], strides = [1, 1, 1, 1]} : vector<8x2x8x128xf32> to vector<8x1x8x128xf32>
    %12 = vector.shape_cast %11 : vector<8x1x8x128xf32> to vector<8x8x128xf32>
    %13 = arith.maximumf %10, %12 : vector<8x8x128xf32>
    %c0_8 = arith.constant 0 : index
    %c0_9 = arith.constant 0 : index
    %14 = vector.load %arg5[%c0_8, %c0_9] : memref<1x128xf32, #tpu.memory_space<vmem>>, vector<1x128xf32>
    %15 = vector.shape_cast %14 : vector<1x128xf32> to vector<1x1x128xf32>
    %16 = vector.broadcast %15 : vector<1x1x128xf32> to vector<8x8x128xf32>
    %17 = arith.addf %13, %16 : vector<8x8x128xf32>
    %cst_10 = arith.constant 0.000000e+00 : f32
    %18 = vector.broadcast %cst_10 : f32 to vector<8x8x128xf32>
    %19 = arith.maximumf %17, %18 : vector<8x8x128xf32>
    %20 = arith.truncf %19 : vector<8x8x128xf32> to vector<8x8x128xbf16>
    %c0_11 = arith.constant 0 : index
    %c0_12 = arith.constant 0 : index
    %c0_13 = arith.constant 0 : index
    %c0_14 = arith.constant 0 : index
    %21 = vector.load %arg6[%c0_11, %c0_12, %c0_13, %c0_14] : memref<1x8x8x128xbf16, #tpu.memory_space<vmem>>, vector<1x8x8x128xbf16>
    %22 = vector.shape_cast %21 : vector<1x8x8x128xbf16> to vector<8x8x128xbf16>
    %23 = vector.shape_cast %20 : vector<8x8x128xbf16> to vector<1x8x8x128xbf16>
    tpu.vector_store %arg6[%c0_11, %c0_12, %c0_13, %c0_14], %23 {strides = array<i32>} : memref<1x8x8x128xbf16, #tpu.memory_space<vmem>>, vector<1x8x8x128xbf16>,
    return
  }
  func.func @transform_0(%arg0: i32, %arg1: i32) -> (i32, i32, i32) {
    %c0_i32 = arith.constant 0 : i32
    %c0_i32_0 = arith.constant 0 : i32
    return %arg0, %arg1, %c0_i32 : i32, i32, i32
  }
  func.func @transform_1(%arg0: i32, %arg1: i32) -> (i32, i32, i32) {
    %c0_i32 = arith.constant 0 : i32
    %c0_i32_0 = arith.constant 0 : i32
    return %arg0, %arg1, %c0_i32 : i32, i32, i32
  }
  func.func @transform_2(%arg0: i32, %arg1: i32) -> (i32, i32) {
    %c0_i32 = arith.constant 0 : i32
    %c0_i32_0 = arith.constant 0 : i32
    %c0_i32_1 = arith.constant 0 : i32
    return %c0_i32, %c0_i32_0 : i32, i32
  }
  func.func @transform_3(%arg0: i32, %arg1: i32) -> (i32, i32) {
    %c0_i32 = arith.constant 0 : i32
    %c0_i32_0 = arith.constant 0 : i32
    %c0_i32_1 = arith.constant 0 : i32
    return %c0_i32, %c0_i32_0 : i32, i32
  }
  func.func @transform_4(%arg0: i32, %arg1: i32) -> (i32, i32, i32, i32) {
    %c0_i32 = arith.constant 0 : i32
    %c0_i32_0 = arith.constant 0 : i32
    %c0_i32_1 = arith.constant 0 : i32
    return %arg0, %arg1, %c0_i32, %c0_i32_0 : i32, i32, i32, i32
  }
}

module attributes {stable_mosaic.version = 11 : i64} {
  func.func @fused_mlp_kernel(%arg0: i32, %arg1: i32, %arg2: memref<2x1024xbf16, #tpu.memory_space<vmem>>, %arg3: memref<1024x128xbf16, #tpu.memory_space<vmem>>, %arg4: memref<1x128xf32, #tpu.memory_space<vmem>>, %arg5: memref<128x10xf32, #tpu.memory_space<vmem>>, %arg6: memref<1x10xf32, #tpu.memory_space<vmem>>, %arg7: memref<2x10xf32, #tpu.memory_space<vmem>>, %arg8: memref<2x128xf32, #tpu.memory_space<vmem>>) attributes {dimension_semantics = [#tpu.dimension_semantics<parallel>, #tpu.dimension_semantics<arbitrary>], iteration_bounds = array<i64: 1, 8>, scalar_prefetch = 0 : i64, scratch_operands = 1 : i64, tpu.core_type = #tpu.core_type<tc>, window_params = [{transform_indices = @transform_0, window_bounds = array<i64: 2, 1024>}, {transform_indices = @transform_1, window_bounds = array<i64: 1024, 128>}, {pipeline_mode = #tpu.pipeline_mode<synchronous>, transform_indices = @transform_2, window_bounds = array<i64: 1, 128>}, {pipeline_mode = #tpu.pipeline_mode<synchronous>, transform_indices = @transform_3, window_bounds = array<i64: 128, 10>}, {pipeline_mode = #tpu.pipeline_mode<synchronous>, transform_indices = @transform_4, window_bounds = array<i64: 1, 10>}, {transform_indices = @transform_5, window_bounds = array<i64: 2, 10>}]} {
    %c0_i32 = arith.constant 0 : i32
    %0 = arith.cmpi eq, %arg1, %c0_i32 : i32
    %1 = arith.extui %0 : i1 to i32
    %c0_i32_0 = arith.constant 0 : i32
    %2 = arith.cmpi ne, %1, %c0_i32_0 : i32
    scf.if %2 {
      %cst_9 = arith.constant 0.000000e+00 : f32
      %12 = vector.broadcast %cst_9 : f32 to vector<2x128xf32>
      %c0_10 = arith.constant 0 : index
      %c0_11 = arith.constant 0 : index
      %13 = vector.load %arg8[%c0_10, %c0_11] : memref<2x128xf32, #tpu.memory_space<vmem>>, vector<2x128xf32>
      tpu.vector_store %arg8[%c0_10, %c0_11], %12 {strides = array<i32>} : memref<2x128xf32, #tpu.memory_space<vmem>>, vector<2x128xf32>,
    } else {
    }
    %c0 = arith.constant 0 : index
    %c0_1 = arith.constant 0 : index
    %3 = vector.load %arg8[%c0, %c0_1] : memref<2x128xf32, #tpu.memory_space<vmem>>, vector<2x128xf32>
    %c0_2 = arith.constant 0 : index
    %c0_3 = arith.constant 0 : index
    %4 = vector.load %arg2[%c0_2, %c0_3] : memref<2x1024xbf16, #tpu.memory_space<vmem>>, vector<2x1024xbf16>
    %c0_4 = arith.constant 0 : index
    %c0_5 = arith.constant 0 : index
    %5 = vector.load %arg3[%c0_4, %c0_5] : memref<1024x128xbf16, #tpu.memory_space<vmem>>, vector<1024x128xbf16>
    %cst = arith.constant dense<0.000000e+00> : vector<2x128xf32>
    %6 = tpu.matmul %4, %5, %cst {dimension_numbers = #tpu.dot_dimension_numbers<[1], [0], [0], [1], [0, 0, 1, 1], [], []>} : vector<2x1024xbf16>, vector<1024x128xbf16>, vector<2x128xf32> -> vector<2x128xf32>
    %7 = arith.addf %3, %6 : vector<2x128xf32>
    %c0_6 = arith.constant 0 : index
    %c0_7 = arith.constant 0 : index
    %8 = vector.load %arg8[%c0_6, %c0_7] : memref<2x128xf32, #tpu.memory_space<vmem>>, vector<2x128xf32>
    tpu.vector_store %arg8[%c0_6, %c0_7], %7 {strides = array<i32>} : memref<2x128xf32, #tpu.memory_space<vmem>>, vector<2x128xf32>,
    %c7_i32 = arith.constant 7 : i32
    %9 = arith.cmpi eq, %arg1, %c7_i32 : i32
    %10 = arith.extui %9 : i1 to i32
    %c0_i32_8 = arith.constant 0 : i32
    %11 = arith.cmpi ne, %10, %c0_i32_8 : i32
    scf.if %11 {
      %c0_9 = arith.constant 0 : index
      %c0_10 = arith.constant 0 : index
      %12 = vector.load %arg8[%c0_9, %c0_10] : memref<2x128xf32, #tpu.memory_space<vmem>>, vector<2x128xf32>
      %c0_11 = arith.constant 0 : index
      %c0_12 = arith.constant 0 : index
      %13 = vector.load %arg4[%c0_11, %c0_12] : memref<1x128xf32, #tpu.memory_space<vmem>>, vector<1x128xf32>
      %14 = vector.broadcast %13 : vector<1x128xf32> to vector<2x128xf32>
      %15 = arith.addf %12, %14 : vector<2x128xf32>
      %cst_13 = arith.constant 0.000000e+00 : f32
      %16 = vector.broadcast %cst_13 : f32 to vector<2x128xf32>
      %17 = arith.maximumf %15, %16 : vector<2x128xf32>
      %c0_14 = arith.constant 0 : index
      %c0_15 = arith.constant 0 : index
      %18 = vector.load %arg5[%c0_14, %c0_15] : memref<128x10xf32, #tpu.memory_space<vmem>>, vector<128x10xf32>
      %cst_16 = arith.constant dense<0.000000e+00> : vector<2x10xf32>
      %19 = tpu.matmul %17, %18, %cst_16 {dimension_numbers = #tpu.dot_dimension_numbers<[1], [0], [0], [1], [0, 0, 1, 1], [], []>} : vector<2x128xf32>, vector<128x10xf32>, vector<2x10xf32> -> vector<2x10xf32>
      %c0_17 = arith.constant 0 : index
      %c0_18 = arith.constant 0 : index
      %20 = vector.load %arg6[%c0_17, %c0_18] : memref<1x10xf32, #tpu.memory_space<vmem>>, vector<1x10xf32>
      %21 = vector.broadcast %20 : vector<1x10xf32> to vector<2x10xf32>
      %22 = arith.addf %19, %21 : vector<2x10xf32>
      %c0_19 = arith.constant 0 : index
      %c0_20 = arith.constant 0 : index
      %23 = vector.load %arg7[%c0_19, %c0_20] : memref<2x10xf32, #tpu.memory_space<vmem>>, vector<2x10xf32>
      tpu.vector_store %arg7[%c0_19, %c0_20], %22 {strides = array<i32>} : memref<2x10xf32, #tpu.memory_space<vmem>>, vector<2x10xf32>,
    } else {
    }
    return
  }
  func.func @transform_0(%arg0: i32, %arg1: i32) -> (i32, i32) {
    %c0_i32 = arith.constant 0 : i32
    return %arg0, %arg1 : i32, i32
  }
  func.func @transform_1(%arg0: i32, %arg1: i32) -> (i32, i32) {
    %c0_i32 = arith.constant 0 : i32
    %c0_i32_0 = arith.constant 0 : i32
    return %arg1, %c0_i32 : i32, i32
  }
  func.func @transform_2(%arg0: i32, %arg1: i32) -> (i32, i32) {
    %c0_i32 = arith.constant 0 : i32
    %c0_i32_0 = arith.constant 0 : i32
    %c0_i32_1 = arith.constant 0 : i32
    return %c0_i32, %c0_i32_0 : i32, i32
  }
  func.func @transform_3(%arg0: i32, %arg1: i32) -> (i32, i32) {
    %c0_i32 = arith.constant 0 : i32
    %c0_i32_0 = arith.constant 0 : i32
    %c0_i32_1 = arith.constant 0 : i32
    return %c0_i32, %c0_i32_0 : i32, i32
  }
  func.func @transform_4(%arg0: i32, %arg1: i32) -> (i32, i32) {
    %c0_i32 = arith.constant 0 : i32
    %c0_i32_0 = arith.constant 0 : i32
    %c0_i32_1 = arith.constant 0 : i32
    return %c0_i32, %c0_i32_0 : i32, i32
  }
  func.func @transform_5(%arg0: i32, %arg1: i32) -> (i32, i32) {
    %c0_i32 = arith.constant 0 : i32
    %c0_i32_0 = arith.constant 0 : i32
    return %arg0, %c0_i32 : i32, i32
  }
}

</mosaic_0001>

<llo_original>
// kernel: cifar10_forward.4
$region0: #{cifar10_forward.4}
  #allocation0 [shape = 'u32[]', space=smem, size = 0x4, offset = 0x4, fixed_abs, tag = 'smem constant byte address 0x4 - core index']
  #allocation1 [shape = 'u32[144,128]{1,0:T(1,128)}', space=vmem, size = 0x12000, scoped, tag = 'internal scratch']
  %s0 = inlined_call_operand.vmem [shape: bf16[2,1024,32], index: 0, kind: input, shape index: {}]
  %s1 = inlined_call_operand.vmem [shape: bf16[32,32], index: 1, kind: input, shape index: {}]
  %s2 = inlined_call_operand.vmem [shape: f32[1,32], index: 2, kind: input, shape index: {}]
  %s3 = inlined_call_operand.vmem [shape: bf16[2,1024,32], index: 3, kind: output, shape index: {}]
  %s4 = sld [smem:[#allocation0]]
  $region45: #{cifar10_forward.4} parent=0
    _
  %s6 = ssub.s32 1, %s4
  %s7 = scalar_select 0, %s6, %s4
  loop: start=0, step=1, limit=10
  $region2: #{cifar10_forward.4} parent=0 // loop_pre_header
    _
  $region3: #{cifar10_forward.4} parent=0 // loop_header
    %s9 = sphi 0, %s13
    %p10 = scmp.ge.s32.totalorder %s9, 10
    %s16 = sphi 0, %s28
    %s17 = sphi 0, %s24
    %s18 = sphi 0, %s16
    %s19 = sphi 0, %s17
    %s20 = sphi 0, %s18
    %s21 = sphi 0, %s19
    %s33 = sphi 0, %s35
    %s36 = sphi 0, %s33
    %s37 = sphi 0, %s36
    %s53 = sphi 0, %s37
    %s57 = sphi 0, %s57
    %s59 = sphi 0, %s57
    %s60 = sphi 0, %s59
    %s74 = sphi 0, %s60
    %s78 = sphi 0, %s78
    %s80 = sphi 0, %s78
    %s81 = sphi 0, %s80
    %s95 = sphi 0, %s81
    %s103 = sphi 0, %s105
    %s106 = sphi 0, %s103
    %s107 = sphi 0, %s106
    %s123 = sphi 0, %s107
  $region4: #{cifar10_forward.4} parent=0 // loop_header_branch
    %12 = sbr.rel (%p10) target = $region8
  $region5: #{cifar10_forward.4} parent=0 // loop_body
    %s14 = ssub.s32 %s9, 1
    %s15 = ssub.s32 %s9, 2
    %s22 = sadd.s32 1, %s17
    %p23 = scmp.ge.s32.totalorder %s22, 4
    %s24 = scalar_select %p23, 0, %s22
    %s25 = sadd.s32 1, %s16
    %s26 = scalar_select %p23, %s25, %s16
    %p27 = scmp.ge.s32.totalorder %s26, 2
    %s28 = scalar_select %p27, 0, %s26
    %s29 = ssub.s32 %s16, %s28
    %s30 = ssub.s32 %s17, %s24
    %s31 = sor.u32 %s29, %s30
    %p32 = scmp.eq.s32.totalorder %s31, 0
    %s34 = sadd.s32 %s33, 1
    %s35 = scalar_select %p32, %s33, %s34
    %p38 = pneg %p32
    %p39 = scmp.eq.s32.totalorder %s9, 7
    %p40 = por %p38, %p39
    %p41 = scmp.ne.s32.totalorder %s33, %s36
    %p42 = scmp.eq.s32.totalorder %s9, 0
    %p43 = por %p41, %p42
    %p44 = scmp.ne.s32.totalorder %s33, %s36
    %p45 = scmp.eq.s32.totalorder %s14, 7
    %p46 = por %p44, %p45
    %p47 = scmp.ne.s32.totalorder %s36, %s37
    %p48 = scmp.eq.s32.totalorder %s14, 0
    %p49 = por %p47, %p48
    %p50 = scmp.ne.s32.totalorder %s36, %s37
    %p51 = scmp.eq.s32.totalorder %s15, 7
    %p52 = por %p50, %p51
    %p54 = scmp.ne.s32.totalorder %s37, %s53
    %p55 = scmp.eq.s32.totalorder %s15, 0
    %p56 = por %p54, %p55
    %s58 = sadd.s32 %s57, 1
    %p61 = scmp.eq.s32.totalorder %s9, 7
    %p62 = scmp.ne.s32.totalorder %s57, %s59
    %p63 = scmp.eq.s32.totalorder %s9, 0
    %p64 = por %p62, %p63
    %p65 = scmp.ne.s32.totalorder %s57, %s59
    %p66 = scmp.eq.s32.totalorder %s14, 7
    %p67 = por %p65, %p66
    %p68 = scmp.ne.s32.totalorder %s59, %s60
    %p69 = scmp.eq.s32.totalorder %s14, 0
    %p70 = por %p68, %p69
    %p71 = scmp.ne.s32.totalorder %s59, %s60
    %p72 = scmp.eq.s32.totalorder %s15, 7
    %p73 = por %p71, %p72
    %p75 = scmp.ne.s32.totalorder %s60, %s74
    %p76 = scmp.eq.s32.totalorder %s15, 0
    %p77 = por %p75, %p76
    %s79 = sadd.s32 %s78, 1
    %p82 = scmp.eq.s32.totalorder %s9, 7
    %p83 = scmp.ne.s32.totalorder %s78, %s80
    %p84 = scmp.eq.s32.totalorder %s9, 0
    %p85 = por %p83, %p84
    %p86 = scmp.ne.s32.totalorder %s78, %s80
    %p87 = scmp.eq.s32.totalorder %s14, 7
    %p88 = por %p86, %p87
    %p89 = scmp.ne.s32.totalorder %s80, %s81
    %p90 = scmp.eq.s32.totalorder %s14, 0
    %p91 = por %p89, %p90
    %p92 = scmp.ne.s32.totalorder %s80, %s81
    %p93 = scmp.eq.s32.totalorder %s15, 7
    %p94 = por %p92, %p93
    %p96 = scmp.ne.s32.totalorder %s81, %s95
    %p97 = scmp.eq.s32.totalorder %s15, 0
    %p98 = por %p96, %p97
    %s99 = ssub.s32 %s16, %s28
    %s100 = ssub.s32 %s17, %s24
    %s101 = sor.u32 %s99, %s100
    %p102 = scmp.eq.s32.totalorder %s101, 0
    %s104 = sadd.s32 %s103, 1
    %s105 = scalar_select %p102, %s103, %s104
    %p108 = pneg %p102
    %p109 = scmp.eq.s32.totalorder %s9, 7
    %p110 = por %p108, %p109
    %p111 = scmp.ne.s32.totalorder %s103, %s106
    %p112 = scmp.eq.s32.totalorder %s9, 0
    %p113 = por %p111, %p112
    %p114 = scmp.ne.s32.totalorder %s103, %s106
    %p115 = scmp.eq.s32.totalorder %s14, 7
    %p116 = por %p114, %p115
    %p117 = scmp.ne.s32.totalorder %s106, %s107
    %p118 = scmp.eq.s32.totalorder %s14, 0
    %p119 = por %p117, %p118
    %p120 = scmp.ne.s32.totalorder %s106, %s107
    %p121 = scmp.eq.s32.totalorder %s15, 7
    %p122 = por %p120, %p121
    %p124 = scmp.ne.s32.totalorder %s107, %s123
    %p125 = scmp.eq.s32.totalorder %s15, 0
    %p126 = por %p124, %p125
    %p127 = scmp.le.s32.totalorder 1, %s9
    %p128 = scmp.lt.s32.totalorder %s9, 9
    %p129 = pnand %p127, %p128
    %p130 = pneg %p129
    // Predicated region
    $region9: #{cifar10_forward.4} parent=5 // pred_check
      _
    $region10: #{cifar10_forward.4} parent=5 // pred_check_branch
      %132 = sbr.rel (%p129) target = $region12
    $region11: #{cifar10_forward.4} parent=5 // pred_region
      %s133 = ssub.s32 %s9, 1
      // Predicated region
      $region13: #{cifar10_forward.4} parent=11 // pred_check
        %p134 = pneg %p70
      $region14: #{cifar10_forward.4} parent=11 // pred_check_branch
        %136 = sbr.rel (%p134) target = $region16
      $region15: #{cifar10_forward.4} parent=11 // pred_region
        _
      $region16: #{cifar10_forward.4} parent=11 // pred_fallthru
        _
      // Predicated region
      $region17: #{cifar10_forward.4} parent=11 // pred_check
        %p137 = pneg %p91
      $region18: #{cifar10_forward.4} parent=11 // pred_check_branch
        %139 = sbr.rel (%p137) target = $region20
      $region19: #{cifar10_forward.4} parent=11 // pred_region
        _
      $region20: #{cifar10_forward.4} parent=11 // pred_fallthru
        _
    $region12: #{cifar10_forward.4} parent=5 // pred_fallthru
      _
    %p140 = scmp.lt.s32.totalorder %s9, 8
    // Predicated region
    $region21: #{cifar10_forward.4} parent=5 // pred_check
      %p141 = pneg %p140
    $region22: #{cifar10_forward.4} parent=5 // pred_check_branch
      %143 = sbr.rel (%p141) target = $region24
    $region23: #{cifar10_forward.4} parent=5 // pred_region
      // Predicated region
      $region25: #{cifar10_forward.4} parent=23 // pred_check
        %p144 = pneg %p43
      $region26: #{cifar10_forward.4} parent=23 // pred_check_branch
        %146 = sbr.rel (%p144) target = $region28
      $region27: #{cifar10_forward.4} parent=23 // pred_region
        %s147 = smul.u32 32, %s17
        %p148 = scmp.lt.s32.totalorder %s16, 1
        %s149 = scalar_select %p148, %s16, 1
        %p150 = scmp.lt.s32.totalorder %s147, 127
        %s151 = scalar_select %p150, %s147, 127
        %s152 = smul.addr %s149, 128
        %s153 = sadd.s32 %s151, %s152
        %s154 = smul.addr %s153, 4
        %s155 = scalar_lea.vmem %s0, %s154
        %s156 = smul.u32 32, %s17
      $region28: #{cifar10_forward.4} parent=23 // pred_fallthru
        _
    $region24: #{cifar10_forward.4} parent=5 // pred_fallthru
      _
    %p157 = scmp.le.s32.totalorder 1, %s9
    %p158 = scmp.lt.s32.totalorder %s9, 9
    %p159 = pnand %p157, %p158
    %p160 = pneg %p159
    // Predicated region
    $region29: #{cifar10_forward.4} parent=5 // pred_check
      _
    $region30: #{cifar10_forward.4} parent=5 // pred_check_branch
      %162 = sbr.rel (%p159) target = $region32
    $region31: #{cifar10_forward.4} parent=5 // pred_region
      %s163 = ssub.s32 %s9, 1
      %s164 = smul.u32 32, %s19
      %p165 = scmp.lt.s32.totalorder %s18, 1
      %s166 = scalar_select %p165, %s18, 1
      %p167 = scmp.lt.s32.totalorder %s164, 127
      %s168 = scalar_select %p167, %s164, 127
      %s169 = smul.addr %s166, 128
      %s170 = sadd.s32 %s168, %s169
      %s171 = smul.addr %s170, 4
      %s172 = scalar_lea.vmem %s0, %s171
      %p173 = pneg %p49
      %p174 = pneg %p46
      %p175 = pneg %p70
      %p176 = pneg %p67
      %p177 = pneg %p91
      %p178 = pneg %p88
      %p179 = pneg %p119
      %p180 = pneg %p116
      %s181 = smul.u32 32, %s19
      %p182 = scmp.lt.s32.totalorder %s18, 1
      %s183 = scalar_select %p182, %s18, 1
      %p184 = scmp.lt.s32.totalorder %s181, 127
      %s185 = scalar_select %p184, %s181, 127
      %s186 = smul.addr %s183, 128
      %s187 = sadd.s32 %s185, %s186
      %s188 = smul.addr %s187, 4
      %s189 = scalar_lea.vmem %s3, %s188
      %s190 = smul.u32 32, %s19
      %p191 = scmp.lt.s32.totalorder %s18, 1
      %s192 = scalar_select %p191, %s18, 1
      %p193 = scmp.lt.s32.totalorder %s190, 127
      %s194 = scalar_select %p193, %s190, 127
      %s195 = smul.addr %s192, 128
      %s196 = sadd.s32 %s194, %s195
      %s197 = smul.addr %s196, 4
      %s198 = scalar_lea.vmem %s0, %s197
      %s199 = smul.u32 32, %s19
      %s200 = smul.u32 32, %s19
      %p201 = scmp.lt.s32.totalorder %s18, 1
      %s202 = scalar_select %p201, %s18, 1
      %p203 = scmp.lt.s32.totalorder %s200, 127
      %s204 = scalar_select %p203, %s200, 127
      %s205 = smul.addr %s202, 128
      %s206 = sadd.s32 %s204, %s205
      %s207 = smul.addr %s206, 4
      %s208 = scalar_lea.vmem %s3, %s207
      %s209 = smul.u32 32, %s19
      %v211 = vld [vmem:[%s198] sm:$0xf]
      %v212 = vld [vmem:[%s198 + $0x4] sm:$0xf]
      %v213 = vld [vmem:[%s198 + $0x8] sm:$0xf]
      %v214 = vld [vmem:[%s198 + $0xc] sm:$0xf]
      %v215 = vld [vmem:[%s198 + $0x10] sm:$0xf]
      %v216 = vld [vmem:[%s198 + $0x14] sm:$0xf]
      %v217 = vld [vmem:[%s198 + $0x18] sm:$0xf]
      %v218 = vld [vmem:[%s198 + $0x1c] sm:$0xf]
      %v219 = vld [vmem:[%s198 + $0x20] sm:$0xf]
      %v220 = vld [vmem:[%s198 + $0x24] sm:$0xf]
      %v221 = vld [vmem:[%s198 + $0x28] sm:$0xf]
      %v222 = vld [vmem:[%s198 + $0x2c] sm:$0xf]
      %v223 = vld [vmem:[%s198 + $0x30] sm:$0xf]
      %v224 = vld [vmem:[%s198 + $0x34] sm:$0xf]
      %v225 = vld [vmem:[%s198 + $0x38] sm:$0xf]
      %v226 = vld [vmem:[%s198 + $0x3c] sm:$0xf]
      %v227 = vld [vmem:[%s198 + $0x40] sm:$0xf]
      %v228 = vld [vmem:[%s198 + $0x44] sm:$0xf]
      %v229 = vld [vmem:[%s198 + $0x48] sm:$0xf]
      %v230 = vld [vmem:[%s198 + $0x4c] sm:$0xf]
      %v231 = vld [vmem:[%s198 + $0x50] sm:$0xf]
      %v232 = vld [vmem:[%s198 + $0x54] sm:$0xf]
      %v233 = vld [vmem:[%s198 + $0x58] sm:$0xf]
      %v234 = vld [vmem:[%s198 + $0x5c] sm:$0xf]
      %v235 = vld [vmem:[%s198 + $0x60] sm:$0xf]
      %v236 = vld [vmem:[%s198 + $0x64] sm:$0xf]
      %v237 = vld [vmem:[%s198 + $0x68] sm:$0xf]
      %v238 = vld [vmem:[%s198 + $0x6c] sm:$0xf]
      %v239 = vld [vmem:[%s198 + $0x70] sm:$0xf]
      %v240 = vld [vmem:[%s198 + $0x74] sm:$0xf]
      %v241 = vld [vmem:[%s198 + $0x78] sm:$0xf]
      %v242 = vld [vmem:[%s198 + $0x7c] sm:$0xf]
      %v243 = vld [vmem:[%s1] sm:$0xf]
      %v244 = vld [vmem:[%s1 + $0x4] sm:$0xf]
      %v245 = vld [vmem:[%s1 + $0x8] sm:$0xf]
      %v246 = vld [vmem:[%s1 + $0xc] sm:$0xf]
      %v247 = vld [vmem:[%s2] sm:$0x1]
      %v249 = vlaneseq
      %v250 = vshrl.u32 %v249, 7
      %v251 = vsub.s32 0, %v250
      %v252 = vrot.slane %v247, %v251
      %v286 = vunpack.c.l.b16 %v211
      %v287 = vunpack.c.l.b16 %v212
      %v288 = vunpack.c.l.b16 %v213
      %v289 = vunpack.c.l.b16 %v214
      %v290 = vunpack.c.l.b16 %v215
      %v291 = vunpack.c.l.b16 %v216
      %v292 = vunpack.c.l.b16 %v217
      %v293 = vunpack.c.l.b16 %v218
      %v294 = vunpack.c.l.b16 %v219
      %v295 = vunpack.c.l.b16 %v220
      %v296 = vunpack.c.l.b16 %v221
      %v297 = vunpack.c.l.b16 %v222
      %v298 = vunpack.c.l.b16 %v223
      %v299 = vunpack.c.l.b16 %v224
      %v300 = vunpack.c.l.b16 %v225
      %v301 = vunpack.c.l.b16 %v226
      %v302 = vunpack.c.l.b16 %v227
      %v303 = vunpack.c.l.b16 %v228
      %v304 = vunpack.c.l.b16 %v229
      %v305 = vunpack.c.l.b16 %v230
      %v306 = vunpack.c.l.b16 %v231
      %v307 = vunpack.c.l.b16 %v232
      %v308 = vunpack.c.l.b16 %v233
      %v309 = vunpack.c.l.b16 %v234
      %v310 = vunpack.c.l.b16 %v235
      %v311 = vunpack.c.l.b16 %v236
      %v312 = vunpack.c.l.b16 %v237
      %v313 = vunpack.c.l.b16 %v238
      %v314 = vunpack.c.l.b16 %v239
      %v315 = vunpack.c.l.b16 %v240
      %v316 = vunpack.c.l.b16 %v241
      %v317 = vunpack.c.l.b16 %v242
      %v318 = vpack.c.b16 %v287, %v286
      %v319 = vpack.c.b16 %v289, %v288
      %v320 = vpack.c.b16 %v291, %v290
      %v321 = vpack.c.b16 %v293, %v292
      %v322 = vpack.c.b16 %v295, %v294
      %v323 = vpack.c.b16 %v297, %v296
      %v324 = vpack.c.b16 %v299, %v298
      %v325 = vpack.c.b16 %v301, %v300
      %v326 = vpack.c.b16 %v303, %v302
      %v327 = vpack.c.b16 %v305, %v304
      %v328 = vpack.c.b16 %v307, %v306
      %v329 = vpack.c.b16 %v309, %v308
      %v330 = vpack.c.b16 %v311, %v310
      %v331 = vpack.c.b16 %v313, %v312
      %v332 = vpack.c.b16 %v315, %v314
      %v333 = vpack.c.b16 %v317, %v316
      %v338 = vunpack.c.l.b16 %v243
      %v339 = vunpack.c.l.b16 %v244
      %v340 = vunpack.c.l.b16 %v245
      %v341 = vunpack.c.l.b16 %v246
      %v342 = vpack.c.b16 %v339, %v338
      %v343 = vpack.c.b16 %v341, %v340
      %vm346 = vcmask 261120
      %v348 = vsel %vm346, %v318, 0
      %v351 = vsel %vm346, %v319, 0
      %v354 = vsel %vm346, %v320, 0
      %v357 = vsel %vm346, %v321, 0
      %v360 = vsel %vm346, %v322, 0
      %v363 = vsel %vm346, %v323, 0
      %v366 = vsel %vm346, %v324, 0
      %v369 = vsel %vm346, %v325, 0
      %v372 = vsel %vm346, %v326, 0
      %v375 = vsel %vm346, %v327, 0
      %v378 = vsel %vm346, %v328, 0
      %v381 = vsel %vm346, %v329, 0
      %v384 = vsel %vm346, %v330, 0
      %v387 = vsel %vm346, %v331, 0
      %v390 = vsel %vm346, %v332, 0
      %v393 = vsel %vm346, %v333, 0
      %395 = vmatprep.subr.bf16.mxu0 0
      %396 = vmatpush1.bf16.msra.mxu0 0
      %397 = vmatprep.subr.bf16.mxu0 0
      %398 = vmatpush1.bf16.msra.mxu0 0
      %399 = vmatprep.subr.bf16.mxu0 0
      %400 = vmatpush1.bf16.msra.mxu0 0
      %401 = vmatprep.subr.bf16.mxu0 0
      %402 = vmatpush1.bf16.msra.mxu0 0
      %403 = vmatprep.subr.bf16.mxu0 0
      %404 = vmatpush1.bf16.msra.mxu0 0
      %405 = vmatprep.subr.bf16.mxu0 0
      %406 = vmatpush1.bf16.msra.mxu0 0
      %407 = vmatprep.subr.bf16.mxu0 0
      %408 = vmatpush1.bf16.msra.mxu0 %v343
      %409 = vmatprep.subr.bf16.mxu0 0
      %410 = vmatpush1.bf16.msra.mxu0 %v342
      %411 = vmatprep.subr.bf16.mxu0 0
      %412 = vmatpush2.bf16.msra.mxu0 0
      %413 = vmatprep.subr.bf16.mxu0 0
      %414 = vmatpush2.bf16.msra.mxu0 0
      %415 = vmatprep.subr.bf16.mxu0 0
      %416 = vmatpush2.bf16.msra.mxu0 0
      %417 = vmatprep.subr.bf16.mxu0 0
      %418 = vmatpush2.bf16.msra.mxu0 0
      %419 = vmatprep.subr.bf16.mxu0 0
      %420 = vmatpush2.bf16.msra.mxu0 0
      %421 = vmatprep.subr.bf16.mxu0 0
      %422 = vmatpush2.bf16.msra.mxu0 0
      %423 = vmatprep.subr.bf16.mxu0 0
      %424 = vmatpush2.bf16.msra.mxu0 0
      %425 = vmatprep.subr.bf16.mxu0 0
      %426 = vmatpush2.bf16.msra.mxu0 0
      %427 = vmatprep.mubr.bf16.mxu0 0
      %428 = vmatmul.mubr.bf16.gmra.mxu0 %v348
      %v429 = vpop.f32.mrf.mxu0
      %v430 = vadd.f32 %v252, %v429
      %v431 = vpop.f32.mrf.mxu0
      %v432 = vpop.f32.mrf.mxu0
      %v433 = vadd.f32 %v252, %v432
      %v434 = vpop.f32.mrf.mxu0
      %435 = vmatprep.mubr.bf16.mxu0 0
      %436 = vmatmul.mubr.bf16.gmra.mxu0 %v351
      %v437 = vpop.f32.mrf.mxu0
      %v438 = vadd.f32 %v252, %v437
      %v439 = vpop.f32.mrf.mxu0
      %v440 = vpop.f32.mrf.mxu0
      %v441 = vadd.f32 %v252, %v440
      %v442 = vpop.f32.mrf.mxu0
      %443 = vmatprep.mubr.bf16.mxu0 0
      %444 = vmatmul.mubr.bf16.gmra.mxu0 %v354
      %v445 = vpop.f32.mrf.mxu0
      %v446 = vadd.f32 %v252, %v445
      %v447 = vpop.f32.mrf.mxu0
      %v448 = vpop.f32.mrf.mxu0
      %v449 = vadd.f32 %v252, %v448
      %v450 = vpop.f32.mrf.mxu0
      %451 = vmatprep.mubr.bf16.mxu0 0
      %452 = vmatmul.mubr.bf16.gmra.mxu0 %v357
      %v453 = vpop.f32.mrf.mxu0
      %v454 = vadd.f32 %v252, %v453
      %v455 = vpop.f32.mrf.mxu0
      %v456 = vpop.f32.mrf.mxu0
      %v457 = vadd.f32 %v252, %v456
      %v458 = vpop.f32.mrf.mxu0
      %459 = vmatprep.mubr.bf16.mxu0 0
      %460 = vmatmul.mubr.bf16.gmra.mxu0 %v360
      %v461 = vpop.f32.mrf.mxu0
      %v462 = vadd.f32 %v252, %v461
      %v463 = vpop.f32.mrf.mxu0
      %v464 = vpop.f32.mrf.mxu0
      %v465 = vadd.f32 %v252, %v464
      %v466 = vpop.f32.mrf.mxu0
      %467 = vmatprep.mubr.bf16.mxu0 0
      %468 = vmatmul.mubr.bf16.gmra.mxu0 %v363
      %v469 = vpop.f32.mrf.mxu0
      %v470 = vadd.f32 %v252, %v469
      %v471 = vpop.f32.mrf.mxu0
      %v472 = vpop.f32.mrf.mxu0
      %v473 = vadd.f32 %v252, %v472
      %v474 = vpop.f32.mrf.mxu0
      %475 = vmatprep.mubr.bf16.mxu0 0
      %476 = vmatmul.mubr.bf16.gmra.mxu0 %v366
      %v477 = vpop.f32.mrf.mxu0
      %v478 = vadd.f32 %v252, %v477
      %v479 = vpop.f32.mrf.mxu0
      %v480 = vpop.f32.mrf.mxu0
      %v481 = vadd.f32 %v252, %v480
      %v482 = vpop.f32.mrf.mxu0
      %483 = vmatprep.mubr.bf16.mxu0 0
      %484 = vmatmul.mubr.bf16.gmra.mxu0 %v369
      %v485 = vpop.f32.mrf.mxu0
      %v486 = vadd.f32 %v252, %v485
      %v487 = vpop.f32.mrf.mxu0
      %v488 = vpop.f32.mrf.mxu0
      %v489 = vadd.f32 %v252, %v488
      %v490 = vpop.f32.mrf.mxu0
      %491 = vmatprep.mubr.bf16.mxu0 0
      %492 = vmatmul.mubr.bf16.gmra.mxu0 %v372
      %v493 = vpop.f32.mrf.mxu0
      %v494 = vadd.f32 %v252, %v493
      %v495 = vpop.f32.mrf.mxu0
      %v496 = vpop.f32.mrf.mxu0
      %v497 = vadd.f32 %v252, %v496
      %v498 = vpop.f32.mrf.mxu0
      %499 = vmatprep.mubr.bf16.mxu0 0
      %500 = vmatmul.mubr.bf16.gmra.mxu0 %v375
      %v501 = vpop.f32.mrf.mxu0
      %v502 = vadd.f32 %v252, %v501
      %v503 = vpop.f32.mrf.mxu0
      %v504 = vpop.f32.mrf.mxu0
      %v505 = vadd.f32 %v252, %v504
      %v506 = vpop.f32.mrf.mxu0
      %507 = vmatprep.mubr.bf16.mxu0 0
      %508 = vmatmul.mubr.bf16.gmra.mxu0 %v378
      %v509 = vpop.f32.mrf.mxu0
      %v510 = vadd.f32 %v252, %v509
      %v511 = vpop.f32.mrf.mxu0
      %v512 = vpop.f32.mrf.mxu0
      %v513 = vadd.f32 %v252, %v512
      %v514 = vpop.f32.mrf.mxu0
      %515 = vmatprep.mubr.bf16.mxu0 0
      %516 = vmatmul.mubr.bf16.gmra.mxu0 %v381
      %v517 = vpop.f32.mrf.mxu0
      %v518 = vadd.f32 %v252, %v517
      %v519 = vpop.f32.mrf.mxu0
      %v520 = vpop.f32.mrf.mxu0
      %v521 = vadd.f32 %v252, %v520
      %v522 = vpop.f32.mrf.mxu0
      %523 = vmatprep.mubr.bf16.mxu0 0
      %524 = vmatmul.mubr.bf16.gmra.mxu0 %v384
      %v525 = vpop.f32.mrf.mxu0
      %v526 = vadd.f32 %v252, %v525
      %v527 = vpop.f32.mrf.mxu0
      %v528 = vpop.f32.mrf.mxu0
      %v529 = vadd.f32 %v252, %v528
      %v530 = vpop.f32.mrf.mxu0
      %531 = vmatprep.mubr.bf16.mxu0 0
      %532 = vmatmul.mubr.bf16.gmra.mxu0 %v387
      %v533 = vpop.f32.mrf.mxu0
      %v534 = vadd.f32 %v252, %v533
      %v535 = vpop.f32.mrf.mxu0
      %v536 = vpop.f32.mrf.mxu0
      %v537 = vadd.f32 %v252, %v536
      %v538 = vpop.f32.mrf.mxu0
      %539 = vmatprep.mubr.bf16.mxu0 0
      %540 = vmatmul.mubr.bf16.gmra.mxu0 %v390
      %v541 = vpop.f32.mrf.mxu0
      %v542 = vadd.f32 %v252, %v541
      %v543 = vpop.f32.mrf.mxu0
      %v544 = vpop.f32.mrf.mxu0
      %v545 = vadd.f32 %v252, %v544
      %v546 = vpop.f32.mrf.mxu0
      %547 = vmatprep.mubr.bf16.mxu0 0
      %548 = vmatmul.mubr.bf16.gmra.mxu0 %v393
      %v549 = vpop.f32.mrf.mxu0
      %v550 = vadd.f32 %v252, %v549
      %v551 = vpop.f32.mrf.mxu0
      %v552 = vpop.f32.mrf.mxu0
      %v553 = vadd.f32 %v252, %v552
      %v554 = vpop.f32.mrf.mxu0
      %555 = vdwg.mxu0
      %v556 = vmax.f32 %v430, 0.0
      %v557 = vmax.f32 %v433, 0.0
      %v558 = vmax.f32 %v438, 0.0
      %v559 = vmax.f32 %v441, 0.0
      %v560 = vmax.f32 %v446, 0.0
      %v561 = vmax.f32 %v449, 0.0
      %v562 = vmax.f32 %v454, 0.0
      %v563 = vmax.f32 %v457, 0.0
      %v564 = vmax.f32 %v462, 0.0
      %v565 = vmax.f32 %v465, 0.0
      %v566 = vmax.f32 %v470, 0.0
      %v567 = vmax.f32 %v473, 0.0
      %v568 = vmax.f32 %v478, 0.0
      %v569 = vmax.f32 %v481, 0.0
      %v570 = vmax.f32 %v486, 0.0
      %v571 = vmax.f32 %v489, 0.0
      %v572 = vmax.f32 %v494, 0.0
      %v573 = vmax.f32 %v497, 0.0
      %v574 = vmax.f32 %v502, 0.0
      %v575 = vmax.f32 %v505, 0.0
      %v576 = vmax.f32 %v510, 0.0
      %v577 = vmax.f32 %v513, 0.0
      %v578 = vmax.f32 %v518, 0.0
      %v579 = vmax.f32 %v521, 0.0
      %v580 = vmax.f32 %v526, 0.0
      %v581 = vmax.f32 %v529, 0.0
      %v582 = vmax.f32 %v534, 0.0
      %v583 = vmax.f32 %v537, 0.0
      %v584 = vmax.f32 %v542, 0.0
      %v585 = vmax.f32 %v545, 0.0
      %v586 = vmax.f32 %v550, 0.0
      %v587 = vmax.f32 %v553, 0.0
      %v588 = vpack.c.bf16 %v557, %v556
      %v589 = vpack.c.bf16 %v559, %v558
      %v590 = vpack.c.bf16 %v561, %v560
      %v591 = vpack.c.bf16 %v563, %v562
      %v592 = vpack.c.bf16 %v565, %v564
      %v593 = vpack.c.bf16 %v567, %v566
      %v594 = vpack.c.bf16 %v569, %v568
      %v595 = vpack.c.bf16 %v571, %v570
      %v596 = vpack.c.bf16 %v573, %v572
      %v597 = vpack.c.bf16 %v575, %v574
      %v598 = vpack.c.bf16 %v577, %v576
      %v599 = vpack.c.bf16 %v579, %v578
      %v600 = vpack.c.bf16 %v581, %v580
      %v601 = vpack.c.bf16 %v583, %v582
      %v602 = vpack.c.bf16 %v585, %v584
      %v603 = vpack.c.bf16 %v587, %v586
      %v620 = vunpack.c.l.b16 %v588
      %v621 = vunpack.c.h.b16 %v588
      %v622 = vunpack.c.l.b16 %v589
      %v623 = vunpack.c.h.b16 %v589
      %v624 = vunpack.c.l.b16 %v590
      %v625 = vunpack.c.h.b16 %v590
      %v626 = vunpack.c.l.b16 %v591
      %v627 = vunpack.c.h.b16 %v591
      %v628 = vunpack.c.l.b16 %v592
      %v629 = vunpack.c.h.b16 %v592
      %v630 = vunpack.c.l.b16 %v593
      %v631 = vunpack.c.h.b16 %v593
      %v632 = vunpack.c.l.b16 %v594
      %v633 = vunpack.c.h.b16 %v594
      %v634 = vunpack.c.l.b16 %v595
      %v635 = vunpack.c.h.b16 %v595
      %v636 = vunpack.c.l.b16 %v596
      %v637 = vunpack.c.h.b16 %v596
      %v638 = vunpack.c.l.b16 %v597
      %v639 = vunpack.c.h.b16 %v597
      %v640 = vunpack.c.l.b16 %v598
      %v641 = vunpack.c.h.b16 %v598
      %v642 = vunpack.c.l.b16 %v599
      %v643 = vunpack.c.h.b16 %v599
      %v644 = vunpack.c.l.b16 %v600
      %v645 = vunpack.c.h.b16 %v600
      %v646 = vunpack.c.l.b16 %v601
      %v647 = vunpack.c.h.b16 %v601
      %v648 = vunpack.c.l.b16 %v602
      %v649 = vunpack.c.h.b16 %v602
      %v650 = vunpack.c.l.b16 %v603
      %v651 = vunpack.c.h.b16 %v603
      %v652 = vpack.c.b16 %v620, %v620
      %v653 = vpack.c.b16 %v621, %v621
      %v654 = vpack.c.b16 %v622, %v622
      %v655 = vpack.c.b16 %v623, %v623
      %v656 = vpack.c.b16 %v624, %v624
      %v657 = vpack.c.b16 %v625, %v625
      %v658 = vpack.c.b16 %v626, %v626
      %v659 = vpack.c.b16 %v627, %v627
      %v660 = vpack.c.b16 %v628, %v628
      %v661 = vpack.c.b16 %v629, %v629
      %v662 = vpack.c.b16 %v630, %v630
      %v663 = vpack.c.b16 %v631, %v631
      %v664 = vpack.c.b16 %v632, %v632
      %v665 = vpack.c.b16 %v633, %v633
      %v666 = vpack.c.b16 %v634, %v634
      %v667 = vpack.c.b16 %v635, %v635
      %v668 = vpack.c.b16 %v636, %v636
      %v669 = vpack.c.b16 %v637, %v637
      %v670 = vpack.c.b16 %v638, %v638
      %v671 = vpack.c.b16 %v639, %v639
      %v672 = vpack.c.b16 %v640, %v640
      %v673 = vpack.c.b16 %v641, %v641
      %v674 = vpack.c.b16 %v642, %v642
      %v675 = vpack.c.b16 %v643, %v643
      %v676 = vpack.c.b16 %v644, %v644
      %v677 = vpack.c.b16 %v645, %v645
      %v678 = vpack.c.b16 %v646, %v646
      %v679 = vpack.c.b16 %v647, %v647
      %v680 = vpack.c.b16 %v648, %v648
      %v681 = vpack.c.b16 %v649, %v649
      %v682 = vpack.c.b16 %v650, %v650
      %v683 = vpack.c.b16 %v651, %v651
      %vm716 = vcmask 257024
      %717 = vst.msk [vmem:[%s208] sm:$0xf] %vm716, %v652
      %718 = vst.msk [vmem:[%s208 + $0x4] sm:$0xf] %vm716, %v653
      %719 = vst.msk [vmem:[%s208 + $0x8] sm:$0xf] %vm716, %v654
      %720 = vst.msk [vmem:[%s208 + $0xc] sm:$0xf] %vm716, %v655
      %721 = vst.msk [vmem:[%s208 + $0x10] sm:$0xf] %vm716, %v656
      %722 = vst.msk [vmem:[%s208 + $0x14] sm:$0xf] %vm716, %v657
      %723 = vst.msk [vmem:[%s208 + $0x18] sm:$0xf] %vm716, %v658
      %724 = vst.msk [vmem:[%s208 + $0x1c] sm:$0xf] %vm716, %v659
      %725 = vst.msk [vmem:[%s208 + $0x20] sm:$0xf] %vm716, %v660
      %726 = vst.msk [vmem:[%s208 + $0x24] sm:$0xf] %vm716, %v661
      %727 = vst.msk [vmem:[%s208 + $0x28] sm:$0xf] %vm716, %v662
      %728 = vst.msk [vmem:[%s208 + $0x2c] sm:$0xf] %vm716, %v663
      %729 = vst.msk [vmem:[%s208 + $0x30] sm:$0xf] %vm716, %v664
      %730 = vst.msk [vmem:[%s208 + $0x34] sm:$0xf] %vm716, %v665
      %731 = vst.msk [vmem:[%s208 + $0x38] sm:$0xf] %vm716, %v666
      %732 = vst.msk [vmem:[%s208 + $0x3c] sm:$0xf] %vm716, %v667
      %733 = vst.msk [vmem:[%s208 + $0x40] sm:$0xf] %vm716, %v668
      %734 = vst.msk [vmem:[%s208 + $0x44] sm:$0xf] %vm716, %v669
      %735 = vst.msk [vmem:[%s208 + $0x48] sm:$0xf] %vm716, %v670
      %736 = vst.msk [vmem:[%s208 + $0x4c] sm:$0xf] %vm716, %v671
      %737 = vst.msk [vmem:[%s208 + $0x50] sm:$0xf] %vm716, %v672
      %738 = vst.msk [vmem:[%s208 + $0x54] sm:$0xf] %vm716, %v673
      %739 = vst.msk [vmem:[%s208 + $0x58] sm:$0xf] %vm716, %v674
      %740 = vst.msk [vmem:[%s208 + $0x5c] sm:$0xf] %vm716, %v675
      %741 = vst.msk [vmem:[%s208 + $0x60] sm:$0xf] %vm716, %v676
      %742 = vst.msk [vmem:[%s208 + $0x64] sm:$0xf] %vm716, %v677
      %743 = vst.msk [vmem:[%s208 + $0x68] sm:$0xf] %vm716, %v678
      %744 = vst.msk [vmem:[%s208 + $0x6c] sm:$0xf] %vm716, %v679
      %745 = vst.msk [vmem:[%s208 + $0x70] sm:$0xf] %vm716, %v680
      %746 = vst.msk [vmem:[%s208 + $0x74] sm:$0xf] %vm716, %v681
      %747 = vst.msk [vmem:[%s208 + $0x78] sm:$0xf] %vm716, %v682
      %748 = vst.msk [vmem:[%s208 + $0x7c] sm:$0xf] %vm716, %v683
      %s749 = smul.u32 32, %s19
      %p750 = scmp.lt.s32.totalorder %s18, 1
      %s751 = scalar_select %p750, %s18, 1
      %p752 = scmp.lt.s32.totalorder %s749, 127
      %s753 = scalar_select %p752, %s749, 127
      %s754 = smul.addr %s751, 128
      %s755 = sadd.s32 %s753, %s754
      %s756 = smul.addr %s755, 4
      %s757 = scalar_lea.vmem %s3, %s756
      // Predicated region
      $region33: #{cifar10_forward.4} parent=31 // pred_check
        %p758 = pneg %p116
      $region34: #{cifar10_forward.4} parent=31 // pred_check_branch
        %760 = sbr.rel (%p758) target = $region36
      $region35: #{cifar10_forward.4} parent=31 // pred_region
        %s761 = smul.u32 32, %s19
      $region36: #{cifar10_forward.4} parent=31 // pred_fallthru
        _
    $region32: #{cifar10_forward.4} parent=5 // pred_fallthru
      _
    %p762 = scmp.le.s32.totalorder 2, %s9
    // Predicated region
    $region37: #{cifar10_forward.4} parent=5 // pred_check
      %p763 = pneg %p762
    $region38: #{cifar10_forward.4} parent=5 // pred_check_branch
      %765 = sbr.rel (%p763) target = $region40
    $region39: #{cifar10_forward.4} parent=5 // pred_region
      %s766 = ssub.s32 %s9, 2
      // Predicated region
      $region41: #{cifar10_forward.4} parent=39 // pred_check
        %p767 = pneg %p122
      $region42: #{cifar10_forward.4} parent=39 // pred_check_branch
        %769 = sbr.rel (%p767) target = $region44
      $region43: #{cifar10_forward.4} parent=39 // pred_region
        %s770 = smul.u32 32, %s21
        %p771 = scmp.lt.s32.totalorder %s20, 1
        %s772 = scalar_select %p771, %s20, 1
        %p773 = scmp.lt.s32.totalorder %s770, 127
        %s774 = scalar_select %p773, %s770, 127
        %s775 = smul.addr %s772, 128
        %s776 = sadd.s32 %s774, %s775
        %s777 = smul.addr %s776, 4
        %s778 = scalar_lea.vmem %s3, %s777
      $region44: #{cifar10_forward.4} parent=39 // pred_fallthru
        _
    $region40: #{cifar10_forward.4} parent=5 // pred_fallthru
      _
  $region6: #{cifar10_forward.4} parent=0 // loop_footer
    %s13 = sadd.s32 1, %s9
  $region7: #{cifar10_forward.4} parent=0 // loop_footer_branch
    %8 = sbr.rel target = $region3
  $region8: #{cifar10_forward.4} parent=0 // loop_exit
    _

// kernel: cifar10_forward.5
$region0: #{cifar10_forward.5}
  #allocation0 [shape = 'u32[]', space=smem, size = 0x4, offset = 0x4, fixed_abs, tag = 'smem constant byte address 0x4 - core index']
  #allocation1 [shape = 'u32[144,128]{1,0:T(1,128)}', space=vmem, size = 0x12000, scoped, tag = 'internal scratch']
  %s0 = inlined_call_operand.vmem [shape: bf16[2,512,288], index: 0, kind: input, shape index: {}]
  %s1 = inlined_call_operand.vmem [shape: bf16[2,512,288], index: 1, kind: input, shape index: {}]
  %s2 = inlined_call_operand.vmem [shape: bf16[288,64], index: 2, kind: input, shape index: {}]
  %s3 = inlined_call_operand.vmem [shape: f32[1,64], index: 3, kind: input, shape index: {}]
  %s4 = inlined_call_operand.vmem [shape: bf16[2,16,16,64], index: 4, kind: output, shape index: {}]
  %s5 = sld [smem:[#allocation0]]
  $region49: #{cifar10_forward.5} parent=0
    _
  %s7 = ssub.s32 1, %s5
  %s8 = scalar_select 0, %s7, %s5
  loop: start=0, step=1, limit=10
  $region2: #{cifar10_forward.5} parent=0 // loop_pre_header
    _
  $region3: #{cifar10_forward.5} parent=0 // loop_header
    %s10 = sphi 0, %s14
    %p11 = scmp.ge.s32.totalorder %s10, 10
    %s17 = sphi 0, %s29
    %s18 = sphi 0, %s25
    %s19 = sphi 0, %s17
    %s20 = sphi 0, %s18
    %s21 = sphi 0, %s19
    %s22 = sphi 0, %s20
    %s34 = sphi 0, %s36
    %s37 = sphi 0, %s34
    %s38 = sphi 0, %s37
    %s54 = sphi 0, %s38
    %s62 = sphi 0, %s64
    %s65 = sphi 0, %s62
    %s66 = sphi 0, %s65
    %s82 = sphi 0, %s66
    %s86 = sphi 0, %s86
    %s88 = sphi 0, %s86
    %s89 = sphi 0, %s88
    %s103 = sphi 0, %s89
    %s107 = sphi 0, %s107
    %s109 = sphi 0, %s107
    %s110 = sphi 0, %s109
    %s124 = sphi 0, %s110
    %s132 = sphi 0, %s134
    %s135 = sphi 0, %s132
    %s136 = sphi 0, %s135
    %s152 = sphi 0, %s136
  $region4: #{cifar10_forward.5} parent=0 // loop_header_branch
    %13 = sbr.rel (%p11) target = $region8
  $region5: #{cifar10_forward.5} parent=0 // loop_body
    %s15 = ssub.s32 %s10, 1
    %s16 = ssub.s32 %s10, 2
    %s23 = sadd.s32 1, %s18
    %p24 = scmp.ge.s32.totalorder %s23, 4
    %s25 = scalar_select %p24, 0, %s23
    %s26 = sadd.s32 1, %s17
    %s27 = scalar_select %p24, %s26, %s17
    %p28 = scmp.ge.s32.totalorder %s27, 2
    %s29 = scalar_select %p28, 0, %s27
    %s30 = ssub.s32 %s17, %s29
    %s31 = ssub.s32 %s18, %s25
    %s32 = sor.u32 %s30, %s31
    %p33 = scmp.eq.s32.totalorder %s32, 0
    %s35 = sadd.s32 %s34, 1
    %s36 = scalar_select %p33, %s34, %s35
    %p39 = pneg %p33
    %p40 = scmp.eq.s32.totalorder %s10, 7
    %p41 = por %p39, %p40
    %p42 = scmp.ne.s32.totalorder %s34, %s37
    %p43 = scmp.eq.s32.totalorder %s10, 0
    %p44 = por %p42, %p43
    %p45 = scmp.ne.s32.totalorder %s34, %s37
    %p46 = scmp.eq.s32.totalorder %s15, 7
    %p47 = por %p45, %p46
    %p48 = scmp.ne.s32.totalorder %s37, %s38
    %p49 = scmp.eq.s32.totalorder %s15, 0
    %p50 = por %p48, %p49
    %p51 = scmp.ne.s32.totalorder %s37, %s38
    %p52 = scmp.eq.s32.totalorder %s16, 7
    %p53 = por %p51, %p52
    %p55 = scmp.ne.s32.totalorder %s38, %s54
    %p56 = scmp.eq.s32.totalorder %s16, 0
    %p57 = por %p55, %p56
    %s58 = ssub.s32 %s17, %s29
    %s59 = ssub.s32 %s18, %s25
    %s60 = sor.u32 %s58, %s59
    %p61 = scmp.eq.s32.totalorder %s60, 0
    %s63 = sadd.s32 %s62, 1
    %s64 = scalar_select %p61, %s62, %s63
    %p67 = pneg %p61
    %p68 = scmp.eq.s32.totalorder %s10, 7
    %p69 = por %p67, %p68
    %p70 = scmp.ne.s32.totalorder %s62, %s65
    %p71 = scmp.eq.s32.totalorder %s10, 0
    %p72 = por %p70, %p71
    %p73 = scmp.ne.s32.totalorder %s62, %s65
    %p74 = scmp.eq.s32.totalorder %s15, 7
    %p75 = por %p73, %p74
    %p76 = scmp.ne.s32.totalorder %s65, %s66
    %p77 = scmp.eq.s32.totalorder %s15, 0
    %p78 = por %p76, %p77
    %p79 = scmp.ne.s32.totalorder %s65, %s66
    %p80 = scmp.eq.s32.totalorder %s16, 7
    %p81 = por %p79, %p80
    %p83 = scmp.ne.s32.totalorder %s66, %s82
    %p84 = scmp.eq.s32.totalorder %s16, 0
    %p85 = por %p83, %p84
    %s87 = sadd.s32 %s86, 1
    %p90 = scmp.eq.s32.totalorder %s10, 7
    %p91 = scmp.ne.s32.totalorder %s86, %s88
    %p92 = scmp.eq.s32.totalorder %s10, 0
    %p93 = por %p91, %p92
    %p94 = scmp.ne.s32.totalorder %s86, %s88
    %p95 = scmp.eq.s32.totalorder %s15, 7
    %p96 = por %p94, %p95
    %p97 = scmp.ne.s32.totalorder %s88, %s89
    %p98 = scmp.eq.s32.totalorder %s15, 0
    %p99 = por %p97, %p98
    %p100 = scmp.ne.s32.totalorder %s88, %s89
    %p101 = scmp.eq.s32.totalorder %s16, 7
    %p102 = por %p100, %p101
    %p104 = scmp.ne.s32.totalorder %s89, %s103
    %p105 = scmp.eq.s32.totalorder %s16, 0
    %p106 = por %p104, %p105
    %s108 = sadd.s32 %s107, 1
    %p111 = scmp.eq.s32.totalorder %s10, 7
    %p112 = scmp.ne.s32.totalorder %s107, %s109
    %p113 = scmp.eq.s32.totalorder %s10, 0
    %p114 = por %p112, %p113
    %p115 = scmp.ne.s32.totalorder %s107, %s109
    %p116 = scmp.eq.s32.totalorder %s15, 7
    %p117 = por %p115, %p116
    %p118 = scmp.ne.s32.totalorder %s109, %s110
    %p119 = scmp.eq.s32.totalorder %s15, 0
    %p120 = por %p118, %p119
    %p121 = scmp.ne.s32.totalorder %s109, %s110
    %p122 = scmp.eq.s32.totalorder %s16, 7
    %p123 = por %p121, %p122
    %p125 = scmp.ne.s32.totalorder %s110, %s124
    %p126 = scmp.eq.s32.totalorder %s16, 0
    %p127 = por %p125, %p126
    %s128 = ssub.s32 %s17, %s29
    %s129 = ssub.s32 %s18, %s25
    %s130 = sor.u32 %s128, %s129
    %p131 = scmp.eq.s32.totalorder %s130, 0
    %s133 = sadd.s32 %s132, 1
    %s134 = scalar_select %p131, %s132, %s133
    %p137 = pneg %p131
    %p138 = scmp.eq.s32.totalorder %s10, 7
    %p139 = por %p137, %p138
    %p140 = scmp.ne.s32.totalorder %s132, %s135
    %p141 = scmp.eq.s32.totalorder %s10, 0
    %p142 = por %p140, %p141
    %p143 = scmp.ne.s32.totalorder %s132, %s135
    %p144 = scmp.eq.s32.totalorder %s15, 7
    %p145 = por %p143, %p144
    %p146 = scmp.ne.s32.totalorder %s135, %s136
    %p147 = scmp.eq.s32.totalorder %s15, 0
    %p148 = por %p146, %p147
    %p149 = scmp.ne.s32.totalorder %s135, %s136
    %p150 = scmp.eq.s32.totalorder %s16, 7
    %p151 = por %p149, %p150
    %p153 = scmp.ne.s32.totalorder %s136, %s152
    %p154 = scmp.eq.s32.totalorder %s16, 0
    %p155 = por %p153, %p154
    %p156 = scmp.le.s32.totalorder 1, %s10
    %p157 = scmp.lt.s32.totalorder %s10, 9
    %p158 = pnand %p156, %p157
    %p159 = pneg %p158
    // Predicated region
    $region9: #{cifar10_forward.5} parent=5 // pred_check
      _
    $region10: #{cifar10_forward.5} parent=5 // pred_check_branch
      %161 = sbr.rel (%p158) target = $region12
    $region11: #{cifar10_forward.5} parent=5 // pred_region
      %s162 = ssub.s32 %s10, 1
      // Predicated region
      $region13: #{cifar10_forward.5} parent=11 // pred_check
        %p163 = pneg %p99
      $region14: #{cifar10_forward.5} parent=11 // pred_check_branch
        %165 = sbr.rel (%p163) target = $region16
      $region15: #{cifar10_forward.5} parent=11 // pred_region
        _
      $region16: #{cifar10_forward.5} parent=11 // pred_fallthru
        _
      // Predicated region
      $region17: #{cifar10_forward.5} parent=11 // pred_check
        %p166 = pneg %p120
      $region18: #{cifar10_forward.5} parent=11 // pred_check_branch
        %168 = sbr.rel (%p166) target = $region20
      $region19: #{cifar10_forward.5} parent=11 // pred_region
        _
      $region20: #{cifar10_forward.5} parent=11 // pred_fallthru
        _
    $region12: #{cifar10_forward.5} parent=5 // pred_fallthru
      _
    %p169 = scmp.lt.s32.totalorder %s10, 8
    // Predicated region
    $region21: #{cifar10_forward.5} parent=5 // pred_check
      %p170 = pneg %p169
    $region22: #{cifar10_forward.5} parent=5 // pred_check_branch
      %172 = sbr.rel (%p170) target = $region24
    $region23: #{cifar10_forward.5} parent=5 // pred_region
      // Predicated region
      $region25: #{cifar10_forward.5} parent=23 // pred_check
        %p173 = pneg %p44
      $region26: #{cifar10_forward.5} parent=23 // pred_check_branch
        %175 = sbr.rel (%p173) target = $region28
      $region27: #{cifar10_forward.5} parent=23 // pred_region
        %s176 = smul.u32 16, %s18
        %p177 = scmp.lt.s32.totalorder %s17, 1
        %s178 = scalar_select %p177, %s17, 1
        %p179 = scmp.lt.s32.totalorder %s176, 63
        %s180 = scalar_select %p179, %s176, 63
        %s181 = smul.addr %s180, 3
        %s182 = smul.addr %s178, 192
        %s183 = sadd.s32 %s181, %s182
        %s184 = smul.addr %s183, 4
        %s185 = scalar_lea.vmem %s0, %s184
        %s186 = smul.u32 16, %s18
      $region28: #{cifar10_forward.5} parent=23 // pred_fallthru
        _
      // Predicated region
      $region29: #{cifar10_forward.5} parent=23 // pred_check
        %p187 = pneg %p72
      $region30: #{cifar10_forward.5} parent=23 // pred_check_branch
        %189 = sbr.rel (%p187) target = $region32
      $region31: #{cifar10_forward.5} parent=23 // pred_region
        %s190 = smul.u32 16, %s18
        %p191 = scmp.lt.s32.totalorder %s17, 1
        %s192 = scalar_select %p191, %s17, 1
        %p193 = scmp.lt.s32.totalorder %s190, 63
        %s194 = scalar_select %p193, %s190, 63
        %s195 = smul.addr %s194, 3
        %s196 = smul.addr %s192, 192
        %s197 = sadd.s32 %s195, %s196
        %s198 = smul.addr %s197, 4
        %s199 = scalar_lea.vmem %s1, %s198
        %s200 = smul.u32 16, %s18
      $region32: #{cifar10_forward.5} parent=23 // pred_fallthru
        _
    $region24: #{cifar10_forward.5} parent=5 // pred_fallthru
      _
    %p201 = scmp.le.s32.totalorder 1, %s10
    %p202 = scmp.lt.s32.totalorder %s10, 9
    %p203 = pnand %p201, %p202
    %p204 = pneg %p203
    // Predicated region
    $region33: #{cifar10_forward.5} parent=5 // pred_check
      _
    $region34: #{cifar10_forward.5} parent=5 // pred_check_branch
      %206 = sbr.rel (%p203) target = $region36
    $region35: #{cifar10_forward.5} parent=5 // pred_region
      %s207 = ssub.s32 %s10, 1
      %s208 = smul.u32 16, %s20
      %p209 = scmp.lt.s32.totalorder %s19, 1
      %s210 = scalar_select %p209, %s19, 1
      %p211 = scmp.lt.s32.totalorder %s208, 63
      %s212 = scalar_select %p211, %s208, 63
      %s213 = smul.addr %s212, 3
      %s214 = smul.addr %s210, 192
      %s215 = sadd.s32 %s213, %s214
      %s216 = smul.addr %s215, 4
      %s217 = scalar_lea.vmem %s0, %s216
      %p218 = pneg %p50
      %p219 = pneg %p47
      %s220 = smul.u32 16, %s20
      %p221 = scmp.lt.s32.totalorder %s19, 1
      %s222 = scalar_select %p221, %s19, 1
      %p223 = scmp.lt.s32.totalorder %s220, 63
      %s224 = scalar_select %p223, %s220, 63
      %s225 = smul.addr %s224, 3
      %s226 = smul.addr %s222, 192
      %s227 = sadd.s32 %s225, %s226
      %s228 = smul.addr %s227, 4
      %s229 = scalar_lea.vmem %s1, %s228
      %p230 = pneg %p78
      %p231 = pneg %p75
      %p232 = pneg %p99
      %p233 = pneg %p96
      %p234 = pneg %p120
      %p235 = pneg %p117
      %p236 = pneg %p148
      %p237 = pneg %p145
      %s238 = smul.u32 4, %s20
      %p239 = scmp.lt.s32.totalorder %s19, 1
      %s240 = scalar_select %p239, %s19, 1
      %p241 = scmp.lt.s32.totalorder %s238, 15
      %s242 = scalar_select %p241, %s238, 15
      %s243 = smul.addr %s242, 2
      %s244 = smul.addr %s240, 32
      %s245 = sadd.s32 %s243, %s244
      %s246 = smul.addr %s245, 4
      %s247 = scalar_lea.vmem %s4, %s246
      %s248 = smul.u32 16, %s20
      %p249 = scmp.lt.s32.totalorder %s19, 1
      %s250 = scalar_select %p249, %s19, 1
      %p251 = scmp.lt.s32.totalorder %s248, 63
      %s252 = scalar_select %p251, %s248, 63
      %s253 = smul.addr %s252, 3
      %s254 = smul.addr %s250, 192
      %s255 = sadd.s32 %s253, %s254
      %s256 = smul.addr %s255, 4
      %s257 = scalar_lea.vmem %s0, %s256
      %s258 = smul.u32 16, %s20
      %s259 = smul.u32 16, %s20
      %p260 = scmp.lt.s32.totalorder %s19, 1
      %s261 = scalar_select %p260, %s19, 1
      %p262 = scmp.lt.s32.totalorder %s259, 63
      %s263 = scalar_select %p262, %s259, 63
      %s264 = smul.addr %s263, 3
      %s265 = smul.addr %s261, 192
      %s266 = sadd.s32 %s264, %s265
      %s267 = smul.addr %s266, 4
      %s268 = scalar_lea.vmem %s1, %s267
      %s269 = smul.u32 16, %s20
      %s270 = smul.u32 4, %s20
      %p271 = scmp.lt.s32.totalorder %s19, 1
      %s272 = scalar_select %p271, %s19, 1
      %p273 = scmp.lt.s32.totalorder %s270, 15
      %s274 = scalar_select %p273, %s270, 15
      %s275 = smul.addr %s274, 2
      %s276 = smul.addr %s272, 32
      %s277 = sadd.s32 %s275, %s276
      %s278 = smul.addr %s277, 4
      %s279 = scalar_lea.vmem %s4, %s278
      %s280 = smul.u32 4, %s20
      %v282 = vld [vmem:[%s2] sm:$0xf]
      %v283 = vld [vmem:[%s2 + $0x4] sm:$0xf]
      %v284 = vld [vmem:[%s2 + $0x8] sm:$0xf]
      %v285 = vld [vmem:[%s2 + $0xc] sm:$0xf]
      %v286 = vld [vmem:[%s2 + $0x10] sm:$0xf]
      %v287 = vld [vmem:[%s2 + $0x14] sm:$0xf]
      %v288 = vld [vmem:[%s2 + $0x18] sm:$0xf]
      %v289 = vld [vmem:[%s2 + $0x1c] sm:$0xf]
      %v290 = vld [vmem:[%s2 + $0x20] sm:$0xf]
      %v291 = vld [vmem:[%s2 + $0x24] sm:$0xf]
      %v292 = vld [vmem:[%s2 + $0x28] sm:$0xf]
      %v293 = vld [vmem:[%s2 + $0x2c] sm:$0xf]
      %v294 = vld [vmem:[%s2 + $0x30] sm:$0xf]
      %v295 = vld [vmem:[%s2 + $0x34] sm:$0xf]
      %v296 = vld [vmem:[%s2 + $0x38] sm:$0xf]
      %v297 = vld [vmem:[%s2 + $0x3c] sm:$0xf]
      %v298 = vld [vmem:[%s2 + $0x40] sm:$0xf]
      %v299 = vld [vmem:[%s2 + $0x44] sm:$0xf]
      %v300 = vld [vmem:[%s2 + $0x48] sm:$0xf]
      %v301 = vld [vmem:[%s2 + $0x4c] sm:$0xf]
      %v302 = vld [vmem:[%s2 + $0x50] sm:$0xf]
      %v303 = vld [vmem:[%s2 + $0x54] sm:$0xf]
      %v304 = vld [vmem:[%s2 + $0x58] sm:$0xf]
      %v305 = vld [vmem:[%s2 + $0x5c] sm:$0xf]
      %v306 = vld [vmem:[%s2 + $0x60] sm:$0xf]
      %v307 = vld [vmem:[%s2 + $0x64] sm:$0xf]
      %v308 = vld [vmem:[%s2 + $0x68] sm:$0xf]
      %v309 = vld [vmem:[%s2 + $0x6c] sm:$0xf]
      %v310 = vld [vmem:[%s2 + $0x70] sm:$0xf]
      %v311 = vld [vmem:[%s2 + $0x74] sm:$0xf]
      %v312 = vld [vmem:[%s2 + $0x78] sm:$0xf]
      %v313 = vld [vmem:[%s2 + $0x7c] sm:$0xf]
      %v314 = vld [vmem:[%s2 + $0x80] sm:$0xf]
      %v315 = vld [vmem:[%s2 + $0x84] sm:$0xf]
      %v316 = vld [vmem:[%s2 + $0x88] sm:$0xf]
      %v317 = vld [vmem:[%s2 + $0x8c] sm:$0xf]
      %v318 = vld [vmem:[%s257] sm:$0xff]
      %v319 = vld [vmem:[%s257 + $0x8] sm:$0xf]
      %v320 = vld [vmem:[%s257 + $0xc] sm:$0xff]
      %v321 = vld [vmem:[%s257 + $0x14] sm:$0xf]
      %v322 = vld [vmem:[%s257 + $0x18] sm:$0xff]
      %v323 = vld [vmem:[%s257 + $0x20] sm:$0xf]
      %v324 = vld [vmem:[%s257 + $0x24] sm:$0xff]
      %v325 = vld [vmem:[%s257 + $0x2c] sm:$0xf]
      %v326 = vld [vmem:[%s257 + $0x30] sm:$0xff]
      %v327 = vld [vmem:[%s257 + $0x38] sm:$0xf]
      %v328 = vld [vmem:[%s257 + $0x3c] sm:$0xff]
      %v329 = vld [vmem:[%s257 + $0x44] sm:$0xf]
      %v330 = vld [vmem:[%s257 + $0x48] sm:$0xff]
      %v331 = vld [vmem:[%s257 + $0x50] sm:$0xf]
      %v332 = vld [vmem:[%s257 + $0x54] sm:$0xff]
      %v333 = vld [vmem:[%s257 + $0x5c] sm:$0xf]
      %v334 = vld [vmem:[%s257 + $0x60] sm:$0xff]
      %v335 = vld [vmem:[%s257 + $0x68] sm:$0xf]
      %v336 = vld [vmem:[%s257 + $0x6c] sm:$0xff]
      %v337 = vld [vmem:[%s257 + $0x74] sm:$0xf]
      %v338 = vld [vmem:[%s257 + $0x78] sm:$0xff]
      %v339 = vld [vmem:[%s257 + $0x80] sm:$0xf]
      %v340 = vld [vmem:[%s257 + $0x84] sm:$0xff]
      %v341 = vld [vmem:[%s257 + $0x8c] sm:$0xf]
      %v342 = vld [vmem:[%s257 + $0x90] sm:$0xff]
      %v343 = vld [vmem:[%s257 + $0x98] sm:$0xf]
      %v344 = vld [vmem:[%s257 + $0x9c] sm:$0xff]
      %v345 = vld [vmem:[%s257 + $0xa4] sm:$0xf]
      %v346 = vld [vmem:[%s257 + $0xa8] sm:$0xff]
      %v347 = vld [vmem:[%s257 + $0xb0] sm:$0xf]
      %v348 = vld [vmem:[%s257 + $0xb4] sm:$0xff]
      %v349 = vld [vmem:[%s257 + $0xbc] sm:$0xf]
      %v382 = vunpack.c.l.b16 %v318
      %v383 = vunpack.c.h.b16 %v318
      %v384 = vunpack.c.l.b16 %v319
      %v385 = vunpack.c.l.b16 %v320
      %v386 = vunpack.c.h.b16 %v320
      %v387 = vunpack.c.l.b16 %v321
      %v388 = vunpack.c.l.b16 %v322
      %v389 = vunpack.c.h.b16 %v322
      %v390 = vunpack.c.l.b16 %v323
      %v391 = vunpack.c.l.b16 %v324
      %v392 = vunpack.c.h.b16 %v324
      %v393 = vunpack.c.l.b16 %v325
      %v394 = vunpack.c.l.b16 %v326
      %v395 = vunpack.c.h.b16 %v326
      %v396 = vunpack.c.l.b16 %v327
      %v397 = vunpack.c.l.b16 %v328
      %v398 = vunpack.c.h.b16 %v328
      %v399 = vunpack.c.l.b16 %v329
      %v400 = vunpack.c.l.b16 %v330
      %v401 = vunpack.c.h.b16 %v330
      %v402 = vunpack.c.l.b16 %v331
      %v403 = vunpack.c.l.b16 %v332
      %v404 = vunpack.c.h.b16 %v332
      %v405 = vunpack.c.l.b16 %v333
      %v406 = vunpack.c.l.b16 %v334
      %v407 = vunpack.c.h.b16 %v334
      %v408 = vunpack.c.l.b16 %v335
      %v409 = vunpack.c.l.b16 %v336
      %v410 = vunpack.c.h.b16 %v336
      %v411 = vunpack.c.l.b16 %v337
      %v412 = vunpack.c.l.b16 %v338
      %v413 = vunpack.c.h.b16 %v338
      %v414 = vunpack.c.l.b16 %v339
      %v415 = vunpack.c.l.b16 %v340
      %v416 = vunpack.c.h.b16 %v340
      %v417 = vunpack.c.l.b16 %v341
      %v418 = vunpack.c.l.b16 %v342
      %v419 = vunpack.c.h.b16 %v342
      %v420 = vunpack.c.l.b16 %v343
      %v421 = vunpack.c.l.b16 %v344
      %v422 = vunpack.c.h.b16 %v344
      %v423 = vunpack.c.l.b16 %v345
      %v424 = vunpack.c.l.b16 %v346
      %v425 = vunpack.c.h.b16 %v346
      %v426 = vunpack.c.l.b16 %v347
      %v427 = vunpack.c.l.b16 %v348
      %v428 = vunpack.c.h.b16 %v348
      %v429 = vunpack.c.l.b16 %v349
      %v430 = vpack.c.b16 %v385, %v382
      %v431 = vpack.c.b16 %v386, %v383
      %v432 = vpack.c.b16 %v387, %v384
      %v433 = vpack.c.b16 %v391, %v388
      %v434 = vpack.c.b16 %v392, %v389
      %v435 = vpack.c.b16 %v393, %v390
      %v436 = vpack.c.b16 %v397, %v394
      %v437 = vpack.c.b16 %v398, %v395
      %v438 = vpack.c.b16 %v399, %v396
      %v439 = vpack.c.b16 %v403, %v400
      %v440 = vpack.c.b16 %v404, %v401
      %v441 = vpack.c.b16 %v405, %v402
      %v442 = vpack.c.b16 %v409, %v406
      %v443 = vpack.c.b16 %v410, %v407
      %v444 = vpack.c.b16 %v411, %v408
      %v445 = vpack.c.b16 %v415, %v412
      %v446 = vpack.c.b16 %v416, %v413
      %v447 = vpack.c.b16 %v417, %v414
      %v448 = vpack.c.b16 %v421, %v418
      %v449 = vpack.c.b16 %v422, %v419
      %v450 = vpack.c.b16 %v423, %v420
      %v451 = vpack.c.b16 %v427, %v424
      %v452 = vpack.c.b16 %v428, %v425
      %v453 = vpack.c.b16 %v429, %v426
      %v506 = vunpack.c.l.b16 %v282
      %v507 = vunpack.c.l.b16 %v283
      %v508 = vunpack.c.l.b16 %v284
      %v509 = vunpack.c.l.b16 %v285
      %v510 = vunpack.c.l.b16 %v286
      %v511 = vunpack.c.l.b16 %v287
      %v512 = vunpack.c.l.b16 %v288
      %v513 = vunpack.c.l.b16 %v289
      %v514 = vunpack.c.l.b16 %v290
      %v515 = vunpack.c.l.b16 %v291
      %v516 = vunpack.c.l.b16 %v292
      %v517 = vunpack.c.l.b16 %v293
      %v518 = vunpack.c.l.b16 %v294
      %v519 = vunpack.c.l.b16 %v295
      %v520 = vunpack.c.l.b16 %v296
      %v521 = vunpack.c.l.b16 %v297
      %v522 = vunpack.c.l.b16 %v298
      %v523 = vunpack.c.l.b16 %v299
      %v524 = vunpack.c.l.b16 %v300
      %v525 = vunpack.c.l.b16 %v301
      %v526 = vunpack.c.l.b16 %v302
      %v527 = vunpack.c.l.b16 %v303
      %v528 = vunpack.c.l.b16 %v304
      %v529 = vunpack.c.l.b16 %v305
      %v530 = vunpack.c.l.b16 %v306
      %v531 = vunpack.c.l.b16 %v307
      %v532 = vunpack.c.l.b16 %v308
      %v533 = vunpack.c.l.b16 %v309
      %v534 = vunpack.c.l.b16 %v310
      %v535 = vunpack.c.l.b16 %v311
      %v536 = vunpack.c.l.b16 %v312
      %v537 = vunpack.c.l.b16 %v313
      %v538 = vunpack.c.l.b16 %v314
      %v539 = vunpack.c.l.b16 %v315
      %v540 = vunpack.c.l.b16 %v316
      %v541 = vunpack.c.l.b16 %v317
      %v542 = vpack.c.b16 %v507, %v506
      %v543 = vpack.c.b16 %v509, %v508
      %v544 = vpack.c.b16 %v511, %v510
      %v545 = vpack.c.b16 %v513, %v512
      %v546 = vpack.c.b16 %v515, %v514
      %v547 = vpack.c.b16 %v517, %v516
      %v548 = vpack.c.b16 %v519, %v518
      %v549 = vpack.c.b16 %v521, %v520
      %v550 = vpack.c.b16 %v523, %v522
      %v551 = vpack.c.b16 %v525, %v524
      %v552 = vpack.c.b16 %v527, %v526
      %v553 = vpack.c.b16 %v529, %v528
      %v554 = vpack.c.b16 %v531, %v530
      %v555 = vpack.c.b16 %v533, %v532
      %v556 = vpack.c.b16 %v535, %v534
      %v557 = vpack.c.b16 %v537, %v536
      %v558 = vpack.c.b16 %v539, %v538
      %v559 = vpack.c.b16 %v541, %v540
      %vm578 = vcmask 261120
      %v580 = vsel %vm578, %v432, 0
      %v583 = vsel %vm578, %v435, 0
      %v586 = vsel %vm578, %v438, 0
      %v589 = vsel %vm578, %v441, 0
      %v592 = vsel %vm578, %v444, 0
      %v595 = vsel %vm578, %v447, 0
      %v598 = vsel %vm578, %v450, 0
      %v601 = vsel %vm578, %v453, 0
      %603 = vmatprep.subr.bf16.mxu0 0
      %604 = vmatpush1.bf16.msra.mxu0 %v549
      %605 = vmatprep.subr.bf16.mxu0 0
      %606 = vmatpush1.bf16.msra.mxu0 %v548
      %607 = vmatprep.subr.bf16.mxu0 0
      %608 = vmatpush1.bf16.msra.mxu0 %v547
      %609 = vmatprep.subr.bf16.mxu0 0
      %610 = vmatpush1.bf16.msra.mxu0 %v546
      %611 = vmatprep.subr.bf16.mxu0 0
      %612 = vmatpush1.bf16.msra.mxu0 %v545
      %613 = vmatprep.subr.bf16.mxu0 0
      %614 = vmatpush1.bf16.msra.mxu0 %v544
      %615 = vmatprep.subr.bf16.mxu0 0
      %616 = vmatpush1.bf16.msra.mxu0 %v543
      %617 = vmatprep.subr.bf16.mxu0 0
      %618 = vmatpush1.bf16.msra.mxu0 %v542
      %619 = vmatprep.subr.bf16.mxu0 0
      %620 = vmatpush2.bf16.msra.mxu0 %v557
      %621 = vmatprep.subr.bf16.mxu0 0
      %622 = vmatpush2.bf16.msra.mxu0 %v556
      %623 = vmatprep.subr.bf16.mxu0 0
      %624 = vmatpush2.bf16.msra.mxu0 %v555
      %625 = vmatprep.subr.bf16.mxu0 0
      %626 = vmatpush2.bf16.msra.mxu0 %v554
      %627 = vmatprep.subr.bf16.mxu0 0
      %628 = vmatpush2.bf16.msra.mxu0 %v553
      %629 = vmatprep.subr.bf16.mxu0 0
      %630 = vmatpush2.bf16.msra.mxu0 %v552
      %631 = vmatprep.subr.bf16.mxu0 0
      %632 = vmatpush2.bf16.msra.mxu0 %v551
      %633 = vmatprep.subr.bf16.mxu0 0
      %634 = vmatpush2.bf16.msra.mxu0 %v550
      %635 = vmatprep.mubr.bf16.mxu0 %v431
      %636 = vmatmul.mubr.bf16.gmra.mxu0 %v430
      %v637 = vpop.f32.mrf.mxu0
      %v638 = vadd.f32 0.0, %v637
      %v639 = vpop.f32.mrf.mxu0
      %v640 = vpop.f32.mrf.mxu0
      %v641 = vadd.f32 0.0, %v640
      %v642 = vpop.f32.mrf.mxu0
      %643 = vmatprep.mubr.bf16.mxu0 %v434
      %644 = vmatmul.mubr.bf16.gmra.mxu0 %v433
      %v645 = vpop.f32.mrf.mxu0
      %v646 = vadd.f32 0.0, %v645
      %v647 = vpop.f32.mrf.mxu0
      %v648 = vpop.f32.mrf.mxu0
      %v649 = vadd.f32 0.0, %v648
      %v650 = vpop.f32.mrf.mxu0
      %651 = vmatprep.mubr.bf16.mxu0 %v437
      %652 = vmatmul.mubr.bf16.gmra.mxu0 %v436
      %v653 = vpop.f32.mrf.mxu0
      %v654 = vadd.f32 0.0, %v653
      %v655 = vpop.f32.mrf.mxu0
      %v656 = vpop.f32.mrf.mxu0
      %v657 = vadd.f32 0.0, %v656
      %v658 = vpop.f32.mrf.mxu0
      %659 = vmatprep.mubr.bf16.mxu0 %v440
      %660 = vmatmul.mubr.bf16.gmra.mxu0 %v439
      %v661 = vpop.f32.mrf.mxu0
      %v662 = vadd.f32 0.0, %v661
      %v663 = vpop.f32.mrf.mxu0
      %v664 = vpop.f32.mrf.mxu0
      %v665 = vadd.f32 0.0, %v664
      %v666 = vpop.f32.mrf.mxu0
      %667 = vmatprep.mubr.bf16.mxu0 %v443
      %668 = vmatmul.mubr.bf16.gmra.mxu0 %v442
      %v669 = vpop.f32.mrf.mxu0
      %v670 = vadd.f32 0.0, %v669
      %v671 = vpop.f32.mrf.mxu0
      %v672 = vpop.f32.mrf.mxu0
      %v673 = vadd.f32 0.0, %v672
      %v674 = vpop.f32.mrf.mxu0
      %675 = vmatprep.mubr.bf16.mxu0 %v446
      %676 = vmatmul.mubr.bf16.gmra.mxu0 %v445
      %v677 = vpop.f32.mrf.mxu0
      %v678 = vadd.f32 0.0, %v677
      %v679 = vpop.f32.mrf.mxu0
      %v680 = vpop.f32.mrf.mxu0
      %v681 = vadd.f32 0.0, %v680
      %v682 = vpop.f32.mrf.mxu0
      %683 = vmatprep.mubr.bf16.mxu0 %v449
      %684 = vmatmul.mubr.bf16.gmra.mxu0 %v448
      %v685 = vpop.f32.mrf.mxu0
      %v686 = vadd.f32 0.0, %v685
      %v687 = vpop.f32.mrf.mxu0
      %v688 = vpop.f32.mrf.mxu0
      %v689 = vadd.f32 0.0, %v688
      %v690 = vpop.f32.mrf.mxu0
      %691 = vmatprep.mubr.bf16.mxu0 %v452
      %692 = vmatmul.mubr.bf16.gmra.mxu0 %v451
      %v693 = vpop.f32.mrf.mxu0
      %v694 = vadd.f32 0.0, %v693
      %v695 = vpop.f32.mrf.mxu0
      %v696 = vpop.f32.mrf.mxu0
      %v697 = vadd.f32 0.0, %v696
      %v698 = vpop.f32.mrf.mxu0
      %699 = vdwg.mxu0
      %700 = vmatprep.subr.bf16.mxu0 0
      %701 = vmatpush1.bf16.msra.mxu0 0
      %702 = vmatprep.subr.bf16.mxu0 0
      %703 = vmatpush1.bf16.msra.mxu0 0
      %704 = vmatprep.subr.bf16.mxu0 0
      %705 = vmatpush1.bf16.msra.mxu0 0
      %706 = vmatprep.subr.bf16.mxu0 0
      %707 = vmatpush1.bf16.msra.mxu0 0
      %708 = vmatprep.subr.bf16.mxu0 0
      %709 = vmatpush1.bf16.msra.mxu0 0
      %710 = vmatprep.subr.bf16.mxu0 0
      %711 = vmatpush1.bf16.msra.mxu0 0
      %712 = vmatprep.subr.bf16.mxu0 0
      %713 = vmatpush1.bf16.msra.mxu0 %v559
      %714 = vmatprep.subr.bf16.mxu0 0
      %715 = vmatpush1.bf16.msra.mxu0 %v558
      %716 = vmatprep.subr.bf16.mxu0 0
      %717 = vmatpush2.bf16.msra.mxu0 0
      %718 = vmatprep.subr.bf16.mxu0 0
      %719 = vmatpush2.bf16.msra.mxu0 0
      %720 = vmatprep.subr.bf16.mxu0 0
      %721 = vmatpush2.bf16.msra.mxu0 0
      %722 = vmatprep.subr.bf16.mxu0 0
      %723 = vmatpush2.bf16.msra.mxu0 0
      %724 = vmatprep.subr.bf16.mxu0 0
      %725 = vmatpush2.bf16.msra.mxu0 0
      %726 = vmatprep.subr.bf16.mxu0 0
      %727 = vmatpush2.bf16.msra.mxu0 0
      %728 = vmatprep.subr.bf16.mxu0 0
      %729 = vmatpush2.bf16.msra.mxu0 0
      %730 = vmatprep.subr.bf16.mxu0 0
      %731 = vmatpush2.bf16.msra.mxu0 0
      %732 = vmatprep.mubr.bf16.mxu0 0
      %733 = vmatmul.mubr.bf16.gmra.mxu0 %v580
      %v734 = vpop.f32.mrf.mxu0
      %v735 = vadd.f32 %v638, %v734
      %v736 = vpop.f32.mrf.mxu0
      %v737 = vpop.f32.mrf.mxu0
      %v738 = vadd.f32 %v641, %v737
      %v739 = vpop.f32.mrf.mxu0
      %740 = vmatprep.mubr.bf16.mxu0 0
      %741 = vmatmul.mubr.bf16.gmra.mxu0 %v583
      %v742 = vpop.f32.mrf.mxu0
      %v743 = vadd.f32 %v646, %v742
      %v744 = vpop.f32.mrf.mxu0
      %v745 = vpop.f32.mrf.mxu0
      %v746 = vadd.f32 %v649, %v745
      %v747 = vpop.f32.mrf.mxu0
      %748 = vmatprep.mubr.bf16.mxu0 0
      %749 = vmatmul.mubr.bf16.gmra.mxu0 %v586
      %v750 = vpop.f32.mrf.mxu0
      %v751 = vadd.f32 %v654, %v750
      %v752 = vpop.f32.mrf.mxu0
      %v753 = vpop.f32.mrf.mxu0
      %v754 = vadd.f32 %v657, %v753
      %v755 = vpop.f32.mrf.mxu0
      %756 = vmatprep.mubr.bf16.mxu0 0
      %757 = vmatmul.mubr.bf16.gmra.mxu0 %v589
      %v758 = vpop.f32.mrf.mxu0
      %v759 = vadd.f32 %v662, %v758
      %v760 = vpop.f32.mrf.mxu0
      %v761 = vpop.f32.mrf.mxu0
      %v762 = vadd.f32 %v665, %v761
      %v763 = vpop.f32.mrf.mxu0
      %764 = vmatprep.mubr.bf16.mxu0 0
      %765 = vmatmul.mubr.bf16.gmra.mxu0 %v592
      %v766 = vpop.f32.mrf.mxu0
      %v767 = vadd.f32 %v670, %v766
      %v768 = vpop.f32.mrf.mxu0
      %v769 = vpop.f32.mrf.mxu0
      %v770 = vadd.f32 %v673, %v769
      %v771 = vpop.f32.mrf.mxu0
      %772 = vmatprep.mubr.bf16.mxu0 0
      %773 = vmatmul.mubr.bf16.gmra.mxu0 %v595
      %v774 = vpop.f32.mrf.mxu0
      %v775 = vadd.f32 %v678, %v774
      %v776 = vpop.f32.mrf.mxu0
      %v777 = vpop.f32.mrf.mxu0
      %v778 = vadd.f32 %v681, %v777
      %v779 = vpop.f32.mrf.mxu0
      %780 = vmatprep.mubr.bf16.mxu0 0
      %781 = vmatmul.mubr.bf16.gmra.mxu0 %v598
      %v782 = vpop.f32.mrf.mxu0
      %v783 = vadd.f32 %v686, %v782
      %v784 = vpop.f32.mrf.mxu0
      %v785 = vpop.f32.mrf.mxu0
      %v786 = vadd.f32 %v689, %v785
      %v787 = vpop.f32.mrf.mxu0
      %788 = vmatprep.mubr.bf16.mxu0 0
      %789 = vmatmul.mubr.bf16.gmra.mxu0 %v601
      %v790 = vpop.f32.mrf.mxu0
      %v791 = vadd.f32 %v694, %v790
      %v792 = vpop.f32.mrf.mxu0
      %v793 = vpop.f32.mrf.mxu0
      %v794 = vadd.f32 %v697, %v793
      %v795 = vpop.f32.mrf.mxu0
      %796 = vdwg.mxu0
      %v797 = vld [vmem:[%s268] sm:$0xff]
      %v798 = vld [vmem:[%s268 + $0x8] sm:$0xf]
      %v799 = vld [vmem:[%s268 + $0xc] sm:$0xff]
      %v800 = vld [vmem:[%s268 + $0x14] sm:$0xf]
      %v801 = vld [vmem:[%s268 + $0x18] sm:$0xff]
      %v802 = vld [vmem:[%s268 + $0x20] sm:$0xf]
      %v803 = vld [vmem:[%s268 + $0x24] sm:$0xff]
      %v804 = vld [vmem:[%s268 + $0x2c] sm:$0xf]
      %v805 = vld [vmem:[%s268 + $0x30] sm:$0xff]
      %v806 = vld [vmem:[%s268 + $0x38] sm:$0xf]
      %v807 = vld [vmem:[%s268 + $0x3c] sm:$0xff]
      %v808 = vld [vmem:[%s268 + $0x44] sm:$0xf]
      %v809 = vld [vmem:[%s268 + $0x48] sm:$0xff]
      %v810 = vld [vmem:[%s268 + $0x50] sm:$0xf]
      %v811 = vld [vmem:[%s268 + $0x54] sm:$0xff]
      %v812 = vld [vmem:[%s268 + $0x5c] sm:$0xf]
      %v813 = vld [vmem:[%s268 + $0x60] sm:$0xff]
      %v814 = vld [vmem:[%s268 + $0x68] sm:$0xf]
      %v815 = vld [vmem:[%s268 + $0x6c] sm:$0xff]
      %v816 = vld [vmem:[%s268 + $0x74] sm:$0xf]
      %v817 = vld [vmem:[%s268 + $0x78] sm:$0xff]
      %v818 = vld [vmem:[%s268 + $0x80] sm:$0xf]
      %v819 = vld [vmem:[%s268 + $0x84] sm:$0xff]
      %v820 = vld [vmem:[%s268 + $0x8c] sm:$0xf]
      %v821 = vld [vmem:[%s268 + $0x90] sm:$0xff]
      %v822 = vld [vmem:[%s268 + $0x98] sm:$0xf]
      %v823 = vld [vmem:[%s268 + $0x9c] sm:$0xff]
      %v824 = vld [vmem:[%s268 + $0xa4] sm:$0xf]
      %v825 = vld [vmem:[%s268 + $0xa8] sm:$0xff]
      %v826 = vld [vmem:[%s268 + $0xb0] sm:$0xf]
      %v827 = vld [vmem:[%s268 + $0xb4] sm:$0xff]
      %v828 = vld [vmem:[%s268 + $0xbc] sm:$0xf]
      %v861 = vunpack.c.l.b16 %v797
      %v862 = vunpack.c.h.b16 %v797
      %v863 = vunpack.c.l.b16 %v798
      %v864 = vunpack.c.l.b16 %v799
      %v865 = vunpack.c.h.b16 %v799
      %v866 = vunpack.c.l.b16 %v800
      %v867 = vunpack.c.l.b16 %v801
      %v868 = vunpack.c.h.b16 %v801
      %v869 = vunpack.c.l.b16 %v802
      %v870 = vunpack.c.l.b16 %v803
      %v871 = vunpack.c.h.b16 %v803
      %v872 = vunpack.c.l.b16 %v804
      %v873 = vunpack.c.l.b16 %v805
      %v874 = vunpack.c.h.b16 %v805
      %v875 = vunpack.c.l.b16 %v806
      %v876 = vunpack.c.l.b16 %v807
      %v877 = vunpack.c.h.b16 %v807
      %v878 = vunpack.c.l.b16 %v808
      %v879 = vunpack.c.l.b16 %v809
      %v880 = vunpack.c.h.b16 %v809
      %v881 = vunpack.c.l.b16 %v810
      %v882 = vunpack.c.l.b16 %v811
      %v883 = vunpack.c.h.b16 %v811
      %v884 = vunpack.c.l.b16 %v812
      %v885 = vunpack.c.l.b16 %v813
      %v886 = vunpack.c.h.b16 %v813
      %v887 = vunpack.c.l.b16 %v814
      %v888 = vunpack.c.l.b16 %v815
      %v889 = vunpack.c.h.b16 %v815
      %v890 = vunpack.c.l.b16 %v816
      %v891 = vunpack.c.l.b16 %v817
      %v892 = vunpack.c.h.b16 %v817
      %v893 = vunpack.c.l.b16 %v818
      %v894 = vunpack.c.l.b16 %v819
      %v895 = vunpack.c.h.b16 %v819
      %v896 = vunpack.c.l.b16 %v820
      %v897 = vunpack.c.l.b16 %v821
      %v898 = vunpack.c.h.b16 %v821
      %v899 = vunpack.c.l.b16 %v822
      %v900 = vunpack.c.l.b16 %v823
      %v901 = vunpack.c.h.b16 %v823
      %v902 = vunpack.c.l.b16 %v824
      %v903 = vunpack.c.l.b16 %v825
      %v904 = vunpack.c.h.b16 %v825
      %v905 = vunpack.c.l.b16 %v826
      %v906 = vunpack.c.l.b16 %v827
      %v907 = vunpack.c.h.b16 %v827
      %v908 = vunpack.c.l.b16 %v828
      %v909 = vpack.c.b16 %v864, %v861
      %v910 = vpack.c.b16 %v865, %v862
      %v911 = vpack.c.b16 %v866, %v863
      %v912 = vpack.c.b16 %v870, %v867
      %v913 = vpack.c.b16 %v871, %v868
      %v914 = vpack.c.b16 %v872, %v869
      %v915 = vpack.c.b16 %v876, %v873
      %v916 = vpack.c.b16 %v877, %v874
      %v917 = vpack.c.b16 %v878, %v875
      %v918 = vpack.c.b16 %v882, %v879
      %v919 = vpack.c.b16 %v883, %v880
      %v920 = vpack.c.b16 %v884, %v881
      %v921 = vpack.c.b16 %v888, %v885
      %v922 = vpack.c.b16 %v889, %v886
      %v923 = vpack.c.b16 %v890, %v887
      %v924 = vpack.c.b16 %v894, %v891
      %v925 = vpack.c.b16 %v895, %v892
      %v926 = vpack.c.b16 %v896, %v893
      %v927 = vpack.c.b16 %v900, %v897
      %v928 = vpack.c.b16 %v901, %v898
      %v929 = vpack.c.b16 %v902, %v899
      %v930 = vpack.c.b16 %v906, %v903
      %v931 = vpack.c.b16 %v907, %v904
      %v932 = vpack.c.b16 %v908, %v905
      %v950 = vsel %vm578, %v911, 0
      %v953 = vsel %vm578, %v914, 0
      %v956 = vsel %vm578, %v917, 0
      %v959 = vsel %vm578, %v920, 0
      %v962 = vsel %vm578, %v923, 0
      %v965 = vsel %vm578, %v926, 0
      %v968 = vsel %vm578, %v929, 0
      %v971 = vsel %vm578, %v932, 0
      %973 = vmatprep.subr.bf16.mxu0 0
      %974 = vmatpush1.bf16.msra.mxu0 %v549
      %975 = vmatprep.subr.bf16.mxu0 0
      %976 = vmatpush1.bf16.msra.mxu0 %v548
      %977 = vmatprep.subr.bf16.mxu0 0
      %978 = vmatpush1.bf16.msra.mxu0 %v547
      %979 = vmatprep.subr.bf16.mxu0 0
      %980 = vmatpush1.bf16.msra.mxu0 %v546
      %981 = vmatprep.subr.bf16.mxu0 0
      %982 = vmatpush1.bf16.msra.mxu0 %v545
      %983 = vmatprep.subr.bf16.mxu0 0
      %984 = vmatpush1.bf16.msra.mxu0 %v544
      %985 = vmatprep.subr.bf16.mxu0 0
      %986 = vmatpush1.bf16.msra.mxu0 %v543
      %987 = vmatprep.subr.bf16.mxu0 0
      %988 = vmatpush1.bf16.msra.mxu0 %v542
      %989 = vmatprep.subr.bf16.mxu0 0
      %990 = vmatpush2.bf16.msra.mxu0 %v557
      %991 = vmatprep.subr.bf16.mxu0 0
      %992 = vmatpush2.bf16.msra.mxu0 %v556
      %993 = vmatprep.subr.bf16.mxu0 0
      %994 = vmatpush2.bf16.msra.mxu0 %v555
      %995 = vmatprep.subr.bf16.mxu0 0
      %996 = vmatpush2.bf16.msra.mxu0 %v554
      %997 = vmatprep.subr.bf16.mxu0 0
      %998 = vmatpush2.bf16.msra.mxu0 %v553
      %999 = vmatprep.subr.bf16.mxu0 0
      %1000 = vmatpush2.bf16.msra.mxu0 %v552
      %1001 = vmatprep.subr.bf16.mxu0 0
      %1002 = vmatpush2.bf16.msra.mxu0 %v551
      %1003 = vmatprep.subr.bf16.mxu0 0
      %1004 = vmatpush2.bf16.msra.mxu0 %v550
      %1005 = vmatprep.mubr.bf16.mxu0 %v910
      %1006 = vmatmul.mubr.bf16.gmra.mxu0 %v909
      %v1007 = vpop.f32.mrf.mxu0
      %v1008 = vadd.f32 0.0, %v1007
      %v1009 = vpop.f32.mrf.mxu0
      %v1010 = vpop.f32.mrf.mxu0
      %v1011 = vadd.f32 0.0, %v1010
      %v1012 = vpop.f32.mrf.mxu0
      %1013 = vmatprep.mubr.bf16.mxu0 %v913
      %1014 = vmatmul.mubr.bf16.gmra.mxu0 %v912
      %v1015 = vpop.f32.mrf.mxu0
      %v1016 = vadd.f32 0.0, %v1015
      %v1017 = vpop.f32.mrf.mxu0
      %v1018 = vpop.f32.mrf.mxu0
      %v1019 = vadd.f32 0.0, %v1018
      %v1020 = vpop.f32.mrf.mxu0
      %1021 = vmatprep.mubr.bf16.mxu0 %v916
      %1022 = vmatmul.mubr.bf16.gmra.mxu0 %v915
      %v1023 = vpop.f32.mrf.mxu0
      %v1024 = vadd.f32 0.0, %v1023
      %v1025 = vpop.f32.mrf.mxu0
      %v1026 = vpop.f32.mrf.mxu0
      %v1027 = vadd.f32 0.0, %v1026
      %v1028 = vpop.f32.mrf.mxu0
      %1029 = vmatprep.mubr.bf16.mxu0 %v919
      %1030 = vmatmul.mubr.bf16.gmra.mxu0 %v918
      %v1031 = vpop.f32.mrf.mxu0
      %v1032 = vadd.f32 0.0, %v1031
      %v1033 = vpop.f32.mrf.mxu0
      %v1034 = vpop.f32.mrf.mxu0
      %v1035 = vadd.f32 0.0, %v1034
      %v1036 = vpop.f32.mrf.mxu0
      %1037 = vmatprep.mubr.bf16.mxu0 %v922
      %1038 = vmatmul.mubr.bf16.gmra.mxu0 %v921
      %v1039 = vpop.f32.mrf.mxu0
      %v1040 = vadd.f32 0.0, %v1039
      %v1041 = vpop.f32.mrf.mxu0
      %v1042 = vpop.f32.mrf.mxu0
      %v1043 = vadd.f32 0.0, %v1042
      %v1044 = vpop.f32.mrf.mxu0
      %1045 = vmatprep.mubr.bf16.mxu0 %v925
      %1046 = vmatmul.mubr.bf16.gmra.mxu0 %v924
      %v1047 = vpop.f32.mrf.mxu0
      %v1048 = vadd.f32 0.0, %v1047
      %v1049 = vpop.f32.mrf.mxu0
      %v1050 = vpop.f32.mrf.mxu0
      %v1051 = vadd.f32 0.0, %v1050
      %v1052 = vpop.f32.mrf.mxu0
      %1053 = vmatprep.mubr.bf16.mxu0 %v928
      %1054 = vmatmul.mubr.bf16.gmra.mxu0 %v927
      %v1055 = vpop.f32.mrf.mxu0
      %v1056 = vadd.f32 0.0, %v1055
      %v1057 = vpop.f32.mrf.mxu0
      %v1058 = vpop.f32.mrf.mxu0
      %v1059 = vadd.f32 0.0, %v1058
      %v1060 = vpop.f32.mrf.mxu0
      %1061 = vmatprep.mubr.bf16.mxu0 %v931
      %1062 = vmatmul.mubr.bf16.gmra.mxu0 %v930
      %v1063 = vpop.f32.mrf.mxu0
      %v1064 = vadd.f32 0.0, %v1063
      %v1065 = vpop.f32.mrf.mxu0
      %v1066 = vpop.f32.mrf.mxu0
      %v1067 = vadd.f32 0.0, %v1066
      %v1068 = vpop.f32.mrf.mxu0
      %1069 = vdwg.mxu0
      %1070 = vmatprep.subr.bf16.mxu0 0
      %1071 = vmatpush1.bf16.msra.mxu0 0
      %1072 = vmatprep.subr.bf16.mxu0 0
      %1073 = vmatpush1.bf16.msra.mxu0 0
      %1074 = vmatprep.subr.bf16.mxu0 0
      %1075 = vmatpush1.bf16.msra.mxu0 0
      %1076 = vmatprep.subr.bf16.mxu0 0
      %1077 = vmatpush1.bf16.msra.mxu0 0
      %1078 = vmatprep.subr.bf16.mxu0 0
      %1079 = vmatpush1.bf16.msra.mxu0 0
      %1080 = vmatprep.subr.bf16.mxu0 0
      %1081 = vmatpush1.bf16.msra.mxu0 0
      %1082 = vmatprep.subr.bf16.mxu0 0
      %1083 = vmatpush1.bf16.msra.mxu0 %v559
      %1084 = vmatprep.subr.bf16.mxu0 0
      %1085 = vmatpush1.bf16.msra.mxu0 %v558
      %1086 = vmatprep.subr.bf16.mxu0 0
      %1087 = vmatpush2.bf16.msra.mxu0 0
      %1088 = vmatprep.subr.bf16.mxu0 0
      %1089 = vmatpush2.bf16.msra.mxu0 0
      %1090 = vmatprep.subr.bf16.mxu0 0
      %1091 = vmatpush2.bf16.msra.mxu0 0
      %1092 = vmatprep.subr.bf16.mxu0 0
      %1093 = vmatpush2.bf16.msra.mxu0 0
      %1094 = vmatprep.subr.bf16.mxu0 0
      %1095 = vmatpush2.bf16.msra.mxu0 0
      %1096 = vmatprep.subr.bf16.mxu0 0
      %1097 = vmatpush2.bf16.msra.mxu0 0
      %1098 = vmatprep.subr.bf16.mxu0 0
      %1099 = vmatpush2.bf16.msra.mxu0 0
      %1100 = vmatprep.subr.bf16.mxu0 0
      %1101 = vmatpush2.bf16.msra.mxu0 0
      %1102 = vmatprep.mubr.bf16.mxu0 0
      %1103 = vmatmul.mubr.bf16.gmra.mxu0 %v950
      %v1104 = vpop.f32.mrf.mxu0
      %v1105 = vadd.f32 %v1008, %v1104
      %v1106 = vpop.f32.mrf.mxu0
      %v1107 = vpop.f32.mrf.mxu0
      %v1108 = vadd.f32 %v1011, %v1107
      %v1109 = vpop.f32.mrf.mxu0
      %1110 = vmatprep.mubr.bf16.mxu0 0
      %1111 = vmatmul.mubr.bf16.gmra.mxu0 %v953
      %v1112 = vpop.f32.mrf.mxu0
      %v1113 = vadd.f32 %v1016, %v1112
      %v1114 = vpop.f32.mrf.mxu0
      %v1115 = vpop.f32.mrf.mxu0
      %v1116 = vadd.f32 %v1019, %v1115
      %v1117 = vpop.f32.mrf.mxu0
      %1118 = vmatprep.mubr.bf16.mxu0 0
      %1119 = vmatmul.mubr.bf16.gmra.mxu0 %v956
      %v1120 = vpop.f32.mrf.mxu0
      %v1121 = vadd.f32 %v1024, %v1120
      %v1122 = vpop.f32.mrf.mxu0
      %v1123 = vpop.f32.mrf.mxu0
      %v1124 = vadd.f32 %v1027, %v1123
      %v1125 = vpop.f32.mrf.mxu0
      %1126 = vmatprep.mubr.bf16.mxu0 0
      %1127 = vmatmul.mubr.bf16.gmra.mxu0 %v959
      %v1128 = vpop.f32.mrf.mxu0
      %v1129 = vadd.f32 %v1032, %v1128
      %v1130 = vpop.f32.mrf.mxu0
      %v1131 = vpop.f32.mrf.mxu0
      %v1132 = vadd.f32 %v1035, %v1131
      %v1133 = vpop.f32.mrf.mxu0
      %1134 = vmatprep.mubr.bf16.mxu0 0
      %1135 = vmatmul.mubr.bf16.gmra.mxu0 %v962
      %v1136 = vpop.f32.mrf.mxu0
      %v1137 = vadd.f32 %v1040, %v1136
      %v1138 = vpop.f32.mrf.mxu0
      %v1139 = vpop.f32.mrf.mxu0
      %v1140 = vadd.f32 %v1043, %v1139
      %v1141 = vpop.f32.mrf.mxu0
      %1142 = vmatprep.mubr.bf16.mxu0 0
      %1143 = vmatmul.mubr.bf16.gmra.mxu0 %v965
      %v1144 = vpop.f32.mrf.mxu0
      %v1145 = vadd.f32 %v1048, %v1144
      %v1146 = vpop.f32.mrf.mxu0
      %v1147 = vpop.f32.mrf.mxu0
      %v1148 = vadd.f32 %v1051, %v1147
      %v1149 = vpop.f32.mrf.mxu0
      %1150 = vmatprep.mubr.bf16.mxu0 0
      %1151 = vmatmul.mubr.bf16.gmra.mxu0 %v968
      %v1152 = vpop.f32.mrf.mxu0
      %v1153 = vadd.f32 %v1056, %v1152
      %v1154 = vpop.f32.mrf.mxu0
      %v1155 = vpop.f32.mrf.mxu0
      %v1156 = vadd.f32 %v1059, %v1155
      %v1157 = vpop.f32.mrf.mxu0
      %1158 = vmatprep.mubr.bf16.mxu0 0
      %1159 = vmatmul.mubr.bf16.gmra.mxu0 %v971
      %v1160 = vpop.f32.mrf.mxu0
      %v1161 = vadd.f32 %v1064, %v1160
      %v1162 = vpop.f32.mrf.mxu0
      %v1163 = vpop.f32.mrf.mxu0
      %v1164 = vadd.f32 %v1067, %v1163
      %v1165 = vpop.f32.mrf.mxu0
      %1166 = vdwg.mxu0
      %v1167 = vmax.f32 %v735, %v1105
      %v1168 = vmax.f32 %v738, %v1108
      %v1169 = vmax.f32 %v743, %v1113
      %v1170 = vmax.f32 %v746, %v1116
      %v1171 = vmax.f32 %v751, %v1121
      %v1172 = vmax.f32 %v754, %v1124
      %v1173 = vmax.f32 %v759, %v1129
      %v1174 = vmax.f32 %v762, %v1132
      %v1175 = vmax.f32 %v767, %v1137
      %v1176 = vmax.f32 %v770, %v1140
      %v1177 = vmax.f32 %v775, %v1145
      %v1178 = vmax.f32 %v778, %v1148
      %v1179 = vmax.f32 %v783, %v1153
      %v1180 = vmax.f32 %v786, %v1156
      %v1181 = vmax.f32 %v791, %v1161
      %v1182 = vmax.f32 %v794, %v1164
      %v1183 = vmax.f32 %v1167, %v1169
      %v1184 = vmax.f32 %v1168, %v1170
      %v1185 = vmax.f32 %v1171, %v1173
      %v1186 = vmax.f32 %v1172, %v1174
      %v1187 = vmax.f32 %v1175, %v1177
      %v1188 = vmax.f32 %v1176, %v1178
      %v1189 = vmax.f32 %v1179, %v1181
      %v1190 = vmax.f32 %v1180, %v1182
      %v1191 = vld [vmem:[%s3] sm:$0x1]
      %v1193 = vlaneseq
      %v1194 = vshrl.u32 %v1193, 7
      %v1195 = vsub.s32 0, %v1194
      %v1196 = vrot.slane %v1191, %v1195
      %v1198 = vadd.f32 %v1183, %v1196
      %v1199 = vadd.f32 %v1184, %v1196
      %v1200 = vadd.f32 %v1185, %v1196
      %v1201 = vadd.f32 %v1186, %v1196
      %v1202 = vadd.f32 %v1187, %v1196
      %v1203 = vadd.f32 %v1188, %v1196
      %v1204 = vadd.f32 %v1189, %v1196
      %v1205 = vadd.f32 %v1190, %v1196
      %v1206 = vmax.f32 %v1198, 0.0
      %v1207 = vmax.f32 %v1199, 0.0
      %v1208 = vmax.f32 %v1200, 0.0
      %v1209 = vmax.f32 %v1201, 0.0
      %v1210 = vmax.f32 %v1202, 0.0
      %v1211 = vmax.f32 %v1203, 0.0
      %v1212 = vmax.f32 %v1204, 0.0
      %v1213 = vmax.f32 %v1205, 0.0
      %v1214 = vpack.c.bf16 %v1207, %v1206
      %v1215 = vpack.c.bf16 %v1209, %v1208
      %v1216 = vpack.c.bf16 %v1211, %v1210
      %v1217 = vpack.c.bf16 %v1213, %v1212
      %v1222 = vunpack.c.l.b16 %v1214
      %v1223 = vunpack.c.h.b16 %v1214
      %v1224 = vunpack.c.l.b16 %v1215
      %v1225 = vunpack.c.h.b16 %v1215
      %v1226 = vunpack.c.l.b16 %v1216
      %v1227 = vunpack.c.h.b16 %v1216
      %v1228 = vunpack.c.l.b16 %v1217
      %v1229 = vunpack.c.h.b16 %v1217
      %v1230 = vpack.c.b16 %v1222, %v1222
      %v1231 = vpack.c.b16 %v1223, %v1223
      %v1232 = vpack.c.b16 %v1224, %v1224
      %v1233 = vpack.c.b16 %v1225, %v1225
      %v1234 = vpack.c.b16 %v1226, %v1226
      %v1235 = vpack.c.b16 %v1227, %v1227
      %v1236 = vpack.c.b16 %v1228, %v1228
      %v1237 = vpack.c.b16 %v1229, %v1229
      %vm1246 = vcmask 519168
      %1247 = vst.msk [vmem:[%s279] sm:$0xf] %vm1246, %v1230
      %1248 = vst.msk [vmem:[%s279 + $0x4] sm:$0xf] %vm1246, %v1231
      %1249 = vst.msk [vmem:[%s279 + $0x8] sm:$0xf] %vm1246, %v1232
      %1250 = vst.msk [vmem:[%s279 + $0xc] sm:$0xf] %vm1246, %v1233
      %1251 = vst.msk [vmem:[%s279 + $0x10] sm:$0xf] %vm1246, %v1234
      %1252 = vst.msk [vmem:[%s279 + $0x14] sm:$0xf] %vm1246, %v1235
      %1253 = vst.msk [vmem:[%s279 + $0x18] sm:$0xf] %vm1246, %v1236
      %1254 = vst.msk [vmem:[%s279 + $0x1c] sm:$0xf] %vm1246, %v1237
      %s1255 = smul.u32 4, %s20
      %p1256 = scmp.lt.s32.totalorder %s19, 1
      %s1257 = scalar_select %p1256, %s19, 1
      %p1258 = scmp.lt.s32.totalorder %s1255, 15
      %s1259 = scalar_select %p1258, %s1255, 15
      %s1260 = smul.addr %s1259, 2
      %s1261 = smul.addr %s1257, 32
      %s1262 = sadd.s32 %s1260, %s1261
      %s1263 = smul.addr %s1262, 4
      %s1264 = scalar_lea.vmem %s4, %s1263
      // Predicated region
      $region37: #{cifar10_forward.5} parent=35 // pred_check
        %p1265 = pneg %p145
      $region38: #{cifar10_forward.5} parent=35 // pred_check_branch
        %1267 = sbr.rel (%p1265) target = $region40
      $region39: #{cifar10_forward.5} parent=35 // pred_region
        %s1268 = smul.u32 4, %s20
      $region40: #{cifar10_forward.5} parent=35 // pred_fallthru
        _
    $region36: #{cifar10_forward.5} parent=5 // pred_fallthru
      _
    %p1269 = scmp.le.s32.totalorder 2, %s10
    // Predicated region
    $region41: #{cifar10_forward.5} parent=5 // pred_check
      %p1270 = pneg %p1269
    $region42: #{cifar10_forward.5} parent=5 // pred_check_branch
      %1272 = sbr.rel (%p1270) target = $region44
    $region43: #{cifar10_forward.5} parent=5 // pred_region
      %s1273 = ssub.s32 %s10, 2
      // Predicated region
      $region45: #{cifar10_forward.5} parent=43 // pred_check
        %p1274 = pneg %p151
      $region46: #{cifar10_forward.5} parent=43 // pred_check_branch
        %1276 = sbr.rel (%p1274) target = $region48
      $region47: #{cifar10_forward.5} parent=43 // pred_region
        %s1277 = smul.u32 4, %s22
        %p1278 = scmp.lt.s32.totalorder %s21, 1
        %s1279 = scalar_select %p1278, %s21, 1
        %p1280 = scmp.lt.s32.totalorder %s1277, 15
        %s1281 = scalar_select %p1280, %s1277, 15
        %s1282 = smul.addr %s1281, 2
        %s1283 = smul.addr %s1279, 32
        %s1284 = sadd.s32 %s1282, %s1283
        %s1285 = smul.addr %s1284, 4
        %s1286 = scalar_lea.vmem %s4, %s1285
      $region48: #{cifar10_forward.5} parent=43 // pred_fallthru
        _
    $region44: #{cifar10_forward.5} parent=5 // pred_fallthru
      _
  $region6: #{cifar10_forward.5} parent=0 // loop_footer
    %s14 = sadd.s32 1, %s10
  $region7: #{cifar10_forward.5} parent=0 // loop_footer_branch
    %9 = sbr.rel target = $region3
  $region8: #{cifar10_forward.5} parent=0 // loop_exit
    _

// kernel: cifar10_forward.6
$region0: #{cifar10_forward.6}
  #allocation0 [shape = 'u32[]', space=smem, size = 0x4, offset = 0x4, fixed_abs, tag = 'smem constant byte address 0x4 - core index']
  #allocation1 [shape = 'u32[144,128]{1,0:T(1,128)}', space=vmem, size = 0x12000, scoped, tag = 'internal scratch']
  %s0 = inlined_call_operand.vmem [shape: bf16[2,128,576], index: 0, kind: input, shape index: {}]
  %s1 = inlined_call_operand.vmem [shape: bf16[2,128,576], index: 1, kind: input, shape index: {}]
  %s2 = inlined_call_operand.vmem [shape: bf16[576,128], index: 2, kind: input, shape index: {}]
  %s3 = inlined_call_operand.vmem [shape: f32[1,128], index: 3, kind: input, shape index: {}]
  %s4 = inlined_call_operand.vmem [shape: bf16[2,8,8,128], index: 4, kind: output, shape index: {}]
  %s5 = sld [smem:[#allocation0]]
  $region49: #{cifar10_forward.6} parent=0
    _
  %s7 = ssub.s32 1, %s5
  %s8 = scalar_select 0, %s7, %s5
  loop: start=0, step=1, limit=4
  $region2: #{cifar10_forward.6} parent=0 // loop_pre_header
    _
  $region3: #{cifar10_forward.6} parent=0 // loop_header
    %s10 = sphi 0, %s14
    %p11 = scmp.ge.s32.totalorder %s10, 4
    %s17 = sphi 0, %s29
    %s18 = sphi 0, %s25
    %s19 = sphi 0, %s17
    %s20 = sphi 0, %s18
    %s21 = sphi 0, %s19
    %s22 = sphi 0, %s20
    %s34 = sphi 0, %s36
    %s37 = sphi 0, %s34
    %s38 = sphi 0, %s37
    %s54 = sphi 0, %s38
    %s62 = sphi 0, %s64
    %s65 = sphi 0, %s62
    %s66 = sphi 0, %s65
    %s82 = sphi 0, %s66
    %s86 = sphi 0, %s86
    %s88 = sphi 0, %s86
    %s89 = sphi 0, %s88
    %s103 = sphi 0, %s89
    %s107 = sphi 0, %s107
    %s109 = sphi 0, %s107
    %s110 = sphi 0, %s109
    %s124 = sphi 0, %s110
    %s132 = sphi 0, %s134
    %s135 = sphi 0, %s132
    %s136 = sphi 0, %s135
    %s152 = sphi 0, %s136
  $region4: #{cifar10_forward.6} parent=0 // loop_header_branch
    %13 = sbr.rel (%p11) target = $region8
  $region5: #{cifar10_forward.6} parent=0 // loop_body
    %s15 = ssub.s32 %s10, 1
    %s16 = ssub.s32 %s10, 2
    %s23 = sadd.s32 1, %s18
    %p24 = scmp.ge.s32.totalorder %s23, 1
    %s25 = scalar_select %p24, 0, %s23
    %s26 = sadd.s32 1, %s17
    %s27 = scalar_select %p24, %s26, %s17
    %p28 = scmp.ge.s32.totalorder %s27, 2
    %s29 = scalar_select %p28, 0, %s27
    %s30 = ssub.s32 %s17, %s29
    %s31 = ssub.s32 %s18, %s25
    %s32 = sor.u32 %s30, %s31
    %p33 = scmp.eq.s32.totalorder %s32, 0
    %s35 = sadd.s32 %s34, 1
    %s36 = scalar_select %p33, %s34, %s35
    %p39 = pneg %p33
    %p40 = scmp.eq.s32.totalorder %s10, 1
    %p41 = por %p39, %p40
    %p42 = scmp.ne.s32.totalorder %s34, %s37
    %p43 = scmp.eq.s32.totalorder %s10, 0
    %p44 = por %p42, %p43
    %p45 = scmp.ne.s32.totalorder %s34, %s37
    %p46 = scmp.eq.s32.totalorder %s15, 1
    %p47 = por %p45, %p46
    %p48 = scmp.ne.s32.totalorder %s37, %s38
    %p49 = scmp.eq.s32.totalorder %s15, 0
    %p50 = por %p48, %p49
    %p51 = scmp.ne.s32.totalorder %s37, %s38
    %p52 = scmp.eq.s32.totalorder %s16, 1
    %p53 = por %p51, %p52
    %p55 = scmp.ne.s32.totalorder %s38, %s54
    %p56 = scmp.eq.s32.totalorder %s16, 0
    %p57 = por %p55, %p56
    %s58 = ssub.s32 %s17, %s29
    %s59 = ssub.s32 %s18, %s25
    %s60 = sor.u32 %s58, %s59
    %p61 = scmp.eq.s32.totalorder %s60, 0
    %s63 = sadd.s32 %s62, 1
    %s64 = scalar_select %p61, %s62, %s63
    %p67 = pneg %p61
    %p68 = scmp.eq.s32.totalorder %s10, 1
    %p69 = por %p67, %p68
    %p70 = scmp.ne.s32.totalorder %s62, %s65
    %p71 = scmp.eq.s32.totalorder %s10, 0
    %p72 = por %p70, %p71
    %p73 = scmp.ne.s32.totalorder %s62, %s65
    %p74 = scmp.eq.s32.totalorder %s15, 1
    %p75 = por %p73, %p74
    %p76 = scmp.ne.s32.totalorder %s65, %s66
    %p77 = scmp.eq.s32.totalorder %s15, 0
    %p78 = por %p76, %p77
    %p79 = scmp.ne.s32.totalorder %s65, %s66
    %p80 = scmp.eq.s32.totalorder %s16, 1
    %p81 = por %p79, %p80
    %p83 = scmp.ne.s32.totalorder %s66, %s82
    %p84 = scmp.eq.s32.totalorder %s16, 0
    %p85 = por %p83, %p84
    %s87 = sadd.s32 %s86, 1
    %p90 = scmp.eq.s32.totalorder %s10, 1
    %p91 = scmp.ne.s32.totalorder %s86, %s88
    %p92 = scmp.eq.s32.totalorder %s10, 0
    %p93 = por %p91, %p92
    %p94 = scmp.ne.s32.totalorder %s86, %s88
    %p95 = scmp.eq.s32.totalorder %s15, 1
    %p96 = por %p94, %p95
    %p97 = scmp.ne.s32.totalorder %s88, %s89
    %p98 = scmp.eq.s32.totalorder %s15, 0
    %p99 = por %p97, %p98
    %p100 = scmp.ne.s32.totalorder %s88, %s89
    %p101 = scmp.eq.s32.totalorder %s16, 1
    %p102 = por %p100, %p101
    %p104 = scmp.ne.s32.totalorder %s89, %s103
    %p105 = scmp.eq.s32.totalorder %s16, 0
    %p106 = por %p104, %p105
    %s108 = sadd.s32 %s107, 1
    %p111 = scmp.eq.s32.totalorder %s10, 1
    %p112 = scmp.ne.s32.totalorder %s107, %s109
    %p113 = scmp.eq.s32.totalorder %s10, 0
    %p114 = por %p112, %p113
    %p115 = scmp.ne.s32.totalorder %s107, %s109
    %p116 = scmp.eq.s32.totalorder %s15, 1
    %p117 = por %p115, %p116
    %p118 = scmp.ne.s32.totalorder %s109, %s110
    %p119 = scmp.eq.s32.totalorder %s15, 0
    %p120 = por %p118, %p119
    %p121 = scmp.ne.s32.totalorder %s109, %s110
    %p122 = scmp.eq.s32.totalorder %s16, 1
    %p123 = por %p121, %p122
    %p125 = scmp.ne.s32.totalorder %s110, %s124
    %p126 = scmp.eq.s32.totalorder %s16, 0
    %p127 = por %p125, %p126
    %s128 = ssub.s32 %s17, %s29
    %s129 = ssub.s32 %s18, %s25
    %s130 = sor.u32 %s128, %s129
    %p131 = scmp.eq.s32.totalorder %s130, 0
    %s133 = sadd.s32 %s132, 1
    %s134 = scalar_select %p131, %s132, %s133
    %p137 = pneg %p131
    %p138 = scmp.eq.s32.totalorder %s10, 1
    %p139 = por %p137, %p138
    %p140 = scmp.ne.s32.totalorder %s132, %s135
    %p141 = scmp.eq.s32.totalorder %s10, 0
    %p142 = por %p140, %p141
    %p143 = scmp.ne.s32.totalorder %s132, %s135
    %p144 = scmp.eq.s32.totalorder %s15, 1
    %p145 = por %p143, %p144
    %p146 = scmp.ne.s32.totalorder %s135, %s136
    %p147 = scmp.eq.s32.totalorder %s15, 0
    %p148 = por %p146, %p147
    %p149 = scmp.ne.s32.totalorder %s135, %s136
    %p150 = scmp.eq.s32.totalorder %s16, 1
    %p151 = por %p149, %p150
    %p153 = scmp.ne.s32.totalorder %s136, %s152
    %p154 = scmp.eq.s32.totalorder %s16, 0
    %p155 = por %p153, %p154
    %p156 = scmp.le.s32.totalorder 1, %s10
    %p157 = scmp.lt.s32.totalorder %s10, 3
    %p158 = pnand %p156, %p157
    %p159 = pneg %p158
    // Predicated region
    $region9: #{cifar10_forward.6} parent=5 // pred_check
      _
    $region10: #{cifar10_forward.6} parent=5 // pred_check_branch
      %161 = sbr.rel (%p158) target = $region12
    $region11: #{cifar10_forward.6} parent=5 // pred_region
      %s162 = ssub.s32 %s10, 1
      // Predicated region
      $region13: #{cifar10_forward.6} parent=11 // pred_check
        %p163 = pneg %p99
      $region14: #{cifar10_forward.6} parent=11 // pred_check_branch
        %165 = sbr.rel (%p163) target = $region16
      $region15: #{cifar10_forward.6} parent=11 // pred_region
        _
      $region16: #{cifar10_forward.6} parent=11 // pred_fallthru
        _
      // Predicated region
      $region17: #{cifar10_forward.6} parent=11 // pred_check
        %p166 = pneg %p120
      $region18: #{cifar10_forward.6} parent=11 // pred_check_branch
        %168 = sbr.rel (%p166) target = $region20
      $region19: #{cifar10_forward.6} parent=11 // pred_region
        _
      $region20: #{cifar10_forward.6} parent=11 // pred_fallthru
        _
    $region12: #{cifar10_forward.6} parent=5 // pred_fallthru
      _
    %p169 = scmp.lt.s32.totalorder %s10, 2
    // Predicated region
    $region21: #{cifar10_forward.6} parent=5 // pred_check
      %p170 = pneg %p169
    $region22: #{cifar10_forward.6} parent=5 // pred_check_branch
      %172 = sbr.rel (%p170) target = $region24
    $region23: #{cifar10_forward.6} parent=5 // pred_region
      // Predicated region
      $region25: #{cifar10_forward.6} parent=23 // pred_check
        %p173 = pneg %p44
      $region26: #{cifar10_forward.6} parent=23 // pred_check_branch
        %175 = sbr.rel (%p173) target = $region28
      $region27: #{cifar10_forward.6} parent=23 // pred_region
        %s176 = smul.u32 16, %s18
        %p177 = scmp.lt.s32.totalorder %s17, 1
        %s178 = scalar_select %p177, %s17, 1
        %p179 = scmp.lt.s32.totalorder %s176, 15
        %s180 = scalar_select %p179, %s176, 15
        %s181 = smul.addr %s180, 5
        %s182 = smul.addr %s178, 80
        %s183 = sadd.s32 %s181, %s182
        %s184 = smul.addr %s183, 4
        %s185 = scalar_lea.vmem %s0, %s184
        %s186 = smul.u32 16, %s18
      $region28: #{cifar10_forward.6} parent=23 // pred_fallthru
        _
      // Predicated region
      $region29: #{cifar10_forward.6} parent=23 // pred_check
        %p187 = pneg %p72
      $region30: #{cifar10_forward.6} parent=23 // pred_check_branch
        %189 = sbr.rel (%p187) target = $region32
      $region31: #{cifar10_forward.6} parent=23 // pred_region
        %s190 = smul.u32 16, %s18
        %p191 = scmp.lt.s32.totalorder %s17, 1
        %s192 = scalar_select %p191, %s17, 1
        %p193 = scmp.lt.s32.totalorder %s190, 15
        %s194 = scalar_select %p193, %s190, 15
        %s195 = smul.addr %s194, 5
        %s196 = smul.addr %s192, 80
        %s197 = sadd.s32 %s195, %s196
        %s198 = smul.addr %s197, 4
        %s199 = scalar_lea.vmem %s1, %s198
        %s200 = smul.u32 16, %s18
      $region32: #{cifar10_forward.6} parent=23 // pred_fallthru
        _
    $region24: #{cifar10_forward.6} parent=5 // pred_fallthru
      _
    %p201 = scmp.le.s32.totalorder 1, %s10
    %p202 = scmp.lt.s32.totalorder %s10, 3
    %p203 = pnand %p201, %p202
    %p204 = pneg %p203
    // Predicated region
    $region33: #{cifar10_forward.6} parent=5 // pred_check
      _
    $region34: #{cifar10_forward.6} parent=5 // pred_check_branch
      %206 = sbr.rel (%p203) target = $region36
    $region35: #{cifar10_forward.6} parent=5 // pred_region
      %s207 = ssub.s32 %s10, 1
      %s208 = smul.u32 16, %s20
      %p209 = scmp.lt.s32.totalorder %s19, 1
      %s210 = scalar_select %p209, %s19, 1
      %p211 = scmp.lt.s32.totalorder %s208, 15
      %s212 = scalar_select %p211, %s208, 15
      %s213 = smul.addr %s212, 5
      %s214 = smul.addr %s210, 80
      %s215 = sadd.s32 %s213, %s214
      %s216 = smul.addr %s215, 4
      %s217 = scalar_lea.vmem %s0, %s216
      %p218 = pneg %p50
      %p219 = pneg %p47
      %s220 = smul.u32 16, %s20
      %p221 = scmp.lt.s32.totalorder %s19, 1
      %s222 = scalar_select %p221, %s19, 1
      %p223 = scmp.lt.s32.totalorder %s220, 15
      %s224 = scalar_select %p223, %s220, 15
      %s225 = smul.addr %s224, 5
      %s226 = smul.addr %s222, 80
      %s227 = sadd.s32 %s225, %s226
      %s228 = smul.addr %s227, 4
      %s229 = scalar_lea.vmem %s1, %s228
      %p230 = pneg %p78
      %p231 = pneg %p75
      %p232 = pneg %p99
      %p233 = pneg %p96
      %p234 = pneg %p120
      %p235 = pneg %p117
      %p236 = pneg %p148
      %p237 = pneg %p145
      %s238 = smul.u32 8, %s20
      %p239 = scmp.lt.s32.totalorder %s19, 1
      %s240 = scalar_select %p239, %s19, 1
      %p241 = scmp.lt.s32.totalorder %s238, 7
      %s242 = scalar_select %p241, %s238, 7
      %s243 = smul.addr %s240, 8
      %s244 = sadd.s32 %s242, %s243
      %s245 = smul.addr %s244, 4
      %s246 = scalar_lea.vmem %s4, %s245
      %s247 = smul.u32 16, %s20
      %p248 = scmp.lt.s32.totalorder %s19, 1
      %s249 = scalar_select %p248, %s19, 1
      %p250 = scmp.lt.s32.totalorder %s247, 15
      %s251 = scalar_select %p250, %s247, 15
      %s252 = smul.addr %s251, 5
      %s253 = smul.addr %s249, 80
      %s254 = sadd.s32 %s252, %s253
      %s255 = smul.addr %s254, 4
      %s256 = scalar_lea.vmem %s0, %s255
      %s257 = smul.u32 16, %s20
      %s258 = smul.u32 16, %s20
      %p259 = scmp.lt.s32.totalorder %s19, 1
      %s260 = scalar_select %p259, %s19, 1
      %p261 = scmp.lt.s32.totalorder %s258, 15
      %s262 = scalar_select %p261, %s258, 15
      %s263 = smul.addr %s262, 5
      %s264 = smul.addr %s260, 80
      %s265 = sadd.s32 %s263, %s264
      %s266 = smul.addr %s265, 4
      %s267 = scalar_lea.vmem %s1, %s266
      %s268 = smul.u32 16, %s20
      %s269 = smul.u32 8, %s20
      %p270 = scmp.lt.s32.totalorder %s19, 1
      %s271 = scalar_select %p270, %s19, 1
      %p272 = scmp.lt.s32.totalorder %s269, 7
      %s273 = scalar_select %p272, %s269, 7
      %s274 = smul.addr %s271, 8
      %s275 = sadd.s32 %s273, %s274
      %s276 = smul.addr %s275, 4
      %s277 = scalar_lea.vmem %s4, %s276
      %s278 = smul.u32 8, %s20
      %v280 = vld [vmem:[%s2] sm:$0xf]
      %v281 = vld [vmem:[%s2 + $0x4] sm:$0xf]
      %v282 = vld [vmem:[%s2 + $0x8] sm:$0xf]
      %v283 = vld [vmem:[%s2 + $0xc] sm:$0xf]
      %v284 = vld [vmem:[%s2 + $0x10] sm:$0xf]
      %v285 = vld [vmem:[%s2 + $0x14] sm:$0xf]
      %v286 = vld [vmem:[%s2 + $0x18] sm:$0xf]
      %v287 = vld [vmem:[%s2 + $0x1c] sm:$0xf]
      %v288 = vld [vmem:[%s2 + $0x20] sm:$0xf]
      %v289 = vld [vmem:[%s2 + $0x24] sm:$0xf]
      %v290 = vld [vmem:[%s2 + $0x28] sm:$0xf]
      %v291 = vld [vmem:[%s2 + $0x2c] sm:$0xf]
      %v292 = vld [vmem:[%s2 + $0x30] sm:$0xf]
      %v293 = vld [vmem:[%s2 + $0x34] sm:$0xf]
      %v294 = vld [vmem:[%s2 + $0x38] sm:$0xf]
      %v295 = vld [vmem:[%s2 + $0x3c] sm:$0xf]
      %v296 = vld [vmem:[%s2 + $0x40] sm:$0xf]
      %v297 = vld [vmem:[%s2 + $0x44] sm:$0xf]
      %v298 = vld [vmem:[%s2 + $0x48] sm:$0xf]
      %v299 = vld [vmem:[%s2 + $0x4c] sm:$0xf]
      %v300 = vld [vmem:[%s2 + $0x50] sm:$0xf]
      %v301 = vld [vmem:[%s2 + $0x54] sm:$0xf]
      %v302 = vld [vmem:[%s2 + $0x58] sm:$0xf]
      %v303 = vld [vmem:[%s2 + $0x5c] sm:$0xf]
      %v304 = vld [vmem:[%s2 + $0x60] sm:$0xf]
      %v305 = vld [vmem:[%s2 + $0x64] sm:$0xf]
      %v306 = vld [vmem:[%s2 + $0x68] sm:$0xf]
      %v307 = vld [vmem:[%s2 + $0x6c] sm:$0xf]
      %v308 = vld [vmem:[%s2 + $0x70] sm:$0xf]
      %v309 = vld [vmem:[%s2 + $0x74] sm:$0xf]
      %v310 = vld [vmem:[%s2 + $0x78] sm:$0xf]
      %v311 = vld [vmem:[%s2 + $0x7c] sm:$0xf]
      %v312 = vld [vmem:[%s2 + $0x80] sm:$0xf]
      %v313 = vld [vmem:[%s2 + $0x84] sm:$0xf]
      %v314 = vld [vmem:[%s2 + $0x88] sm:$0xf]
      %v315 = vld [vmem:[%s2 + $0x8c] sm:$0xf]
      %v316 = vld [vmem:[%s2 + $0x90] sm:$0xf]
      %v317 = vld [vmem:[%s2 + $0x94] sm:$0xf]
      %v318 = vld [vmem:[%s2 + $0x98] sm:$0xf]
      %v319 = vld [vmem:[%s2 + $0x9c] sm:$0xf]
      %v320 = vld [vmem:[%s2 + $0xa0] sm:$0xf]
      %v321 = vld [vmem:[%s2 + $0xa4] sm:$0xf]
      %v322 = vld [vmem:[%s2 + $0xa8] sm:$0xf]
      %v323 = vld [vmem:[%s2 + $0xac] sm:$0xf]
      %v324 = vld [vmem:[%s2 + $0xb0] sm:$0xf]
      %v325 = vld [vmem:[%s2 + $0xb4] sm:$0xf]
      %v326 = vld [vmem:[%s2 + $0xb8] sm:$0xf]
      %v327 = vld [vmem:[%s2 + $0xbc] sm:$0xf]
      %v328 = vld [vmem:[%s2 + $0xc0] sm:$0xf]
      %v329 = vld [vmem:[%s2 + $0xc4] sm:$0xf]
      %v330 = vld [vmem:[%s2 + $0xc8] sm:$0xf]
      %v331 = vld [vmem:[%s2 + $0xcc] sm:$0xf]
      %v332 = vld [vmem:[%s2 + $0xd0] sm:$0xf]
      %v333 = vld [vmem:[%s2 + $0xd4] sm:$0xf]
      %v334 = vld [vmem:[%s2 + $0xd8] sm:$0xf]
      %v335 = vld [vmem:[%s2 + $0xdc] sm:$0xf]
      %v336 = vld [vmem:[%s2 + $0xe0] sm:$0xf]
      %v337 = vld [vmem:[%s2 + $0xe4] sm:$0xf]
      %v338 = vld [vmem:[%s2 + $0xe8] sm:$0xf]
      %v339 = vld [vmem:[%s2 + $0xec] sm:$0xf]
      %v340 = vld [vmem:[%s2 + $0xf0] sm:$0xf]
      %v341 = vld [vmem:[%s2 + $0xf4] sm:$0xf]
      %v342 = vld [vmem:[%s2 + $0xf8] sm:$0xf]
      %v343 = vld [vmem:[%s2 + $0xfc] sm:$0xf]
      %v344 = vld [vmem:[%s2 + $0x100] sm:$0xf]
      %v345 = vld [vmem:[%s2 + $0x104] sm:$0xf]
      %v346 = vld [vmem:[%s2 + $0x108] sm:$0xf]
      %v347 = vld [vmem:[%s2 + $0x10c] sm:$0xf]
      %v348 = vld [vmem:[%s2 + $0x110] sm:$0xf]
      %v349 = vld [vmem:[%s2 + $0x114] sm:$0xf]
      %v350 = vld [vmem:[%s2 + $0x118] sm:$0xf]
      %v351 = vld [vmem:[%s2 + $0x11c] sm:$0xf]
      %v352 = vld [vmem:[%s256] sm:$0xff]
      %v353 = vld [vmem:[%s256 + $0x8] sm:$0xff]
      %v354 = vld [vmem:[%s256 + $0x10] sm:$0xf]
      %v355 = vld [vmem:[%s256 + $0x14] sm:$0xff]
      %v356 = vld [vmem:[%s256 + $0x1c] sm:$0xff]
      %v357 = vld [vmem:[%s256 + $0x24] sm:$0xf]
      %v358 = vld [vmem:[%s256 + $0x28] sm:$0xff]
      %v359 = vld [vmem:[%s256 + $0x30] sm:$0xff]
      %v360 = vld [vmem:[%s256 + $0x38] sm:$0xf]
      %v361 = vld [vmem:[%s256 + $0x3c] sm:$0xff]
      %v362 = vld [vmem:[%s256 + $0x44] sm:$0xff]
      %v363 = vld [vmem:[%s256 + $0x4c] sm:$0xf]
      %v364 = vld [vmem:[%s256 + $0x50] sm:$0xff]
      %v365 = vld [vmem:[%s256 + $0x58] sm:$0xff]
      %v366 = vld [vmem:[%s256 + $0x60] sm:$0xf]
      %v367 = vld [vmem:[%s256 + $0x64] sm:$0xff]
      %v368 = vld [vmem:[%s256 + $0x6c] sm:$0xff]
      %v369 = vld [vmem:[%s256 + $0x74] sm:$0xf]
      %v370 = vld [vmem:[%s256 + $0x78] sm:$0xff]
      %v371 = vld [vmem:[%s256 + $0x80] sm:$0xff]
      %v372 = vld [vmem:[%s256 + $0x88] sm:$0xf]
      %v373 = vld [vmem:[%s256 + $0x8c] sm:$0xff]
      %v374 = vld [vmem:[%s256 + $0x94] sm:$0xff]
      %v375 = vld [vmem:[%s256 + $0x9c] sm:$0xf]
      %v376 = vld [vmem:[%s256 + $0xa0] sm:$0xff]
      %v377 = vld [vmem:[%s256 + $0xa8] sm:$0xff]
      %v378 = vld [vmem:[%s256 + $0xb0] sm:$0xf]
      %v379 = vld [vmem:[%s256 + $0xb4] sm:$0xff]
      %v380 = vld [vmem:[%s256 + $0xbc] sm:$0xff]
      %v381 = vld [vmem:[%s256 + $0xc4] sm:$0xf]
      %v382 = vld [vmem:[%s256 + $0xc8] sm:$0xff]
      %v383 = vld [vmem:[%s256 + $0xd0] sm:$0xff]
      %v384 = vld [vmem:[%s256 + $0xd8] sm:$0xf]
      %v385 = vld [vmem:[%s256 + $0xdc] sm:$0xff]
      %v386 = vld [vmem:[%s256 + $0xe4] sm:$0xff]
      %v387 = vld [vmem:[%s256 + $0xec] sm:$0xf]
      %v388 = vld [vmem:[%s256 + $0xf0] sm:$0xff]
      %v389 = vld [vmem:[%s256 + $0xf8] sm:$0xff]
      %v390 = vld [vmem:[%s256 + $0x100] sm:$0xf]
      %v391 = vld [vmem:[%s256 + $0x104] sm:$0xff]
      %v392 = vld [vmem:[%s256 + $0x10c] sm:$0xff]
      %v393 = vld [vmem:[%s256 + $0x114] sm:$0xf]
      %v394 = vld [vmem:[%s256 + $0x118] sm:$0xff]
      %v395 = vld [vmem:[%s256 + $0x120] sm:$0xff]
      %v396 = vld [vmem:[%s256 + $0x128] sm:$0xf]
      %v397 = vld [vmem:[%s256 + $0x12c] sm:$0xff]
      %v398 = vld [vmem:[%s256 + $0x134] sm:$0xff]
      %v399 = vld [vmem:[%s256 + $0x13c] sm:$0xf]
      %v448 = vunpack.c.l.b16 %v352
      %v449 = vunpack.c.h.b16 %v352
      %v450 = vunpack.c.l.b16 %v353
      %v451 = vunpack.c.h.b16 %v353
      %v452 = vunpack.c.l.b16 %v354
      %v453 = vunpack.c.l.b16 %v355
      %v454 = vunpack.c.h.b16 %v355
      %v455 = vunpack.c.l.b16 %v356
      %v456 = vunpack.c.h.b16 %v356
      %v457 = vunpack.c.l.b16 %v357
      %v458 = vunpack.c.l.b16 %v358
      %v459 = vunpack.c.h.b16 %v358
      %v460 = vunpack.c.l.b16 %v359
      %v461 = vunpack.c.h.b16 %v359
      %v462 = vunpack.c.l.b16 %v360
      %v463 = vunpack.c.l.b16 %v361
      %v464 = vunpack.c.h.b16 %v361
      %v465 = vunpack.c.l.b16 %v362
      %v466 = vunpack.c.h.b16 %v362
      %v467 = vunpack.c.l.b16 %v363
      %v468 = vunpack.c.l.b16 %v364
      %v469 = vunpack.c.h.b16 %v364
      %v470 = vunpack.c.l.b16 %v365
      %v471 = vunpack.c.h.b16 %v365
      %v472 = vunpack.c.l.b16 %v366
      %v473 = vunpack.c.l.b16 %v367
      %v474 = vunpack.c.h.b16 %v367
      %v475 = vunpack.c.l.b16 %v368
      %v476 = vunpack.c.h.b16 %v368
      %v477 = vunpack.c.l.b16 %v369
      %v478 = vunpack.c.l.b16 %v370
      %v479 = vunpack.c.h.b16 %v370
      %v480 = vunpack.c.l.b16 %v371
      %v481 = vunpack.c.h.b16 %v371
      %v482 = vunpack.c.l.b16 %v372
      %v483 = vunpack.c.l.b16 %v373
      %v484 = vunpack.c.h.b16 %v373
      %v485 = vunpack.c.l.b16 %v374
      %v486 = vunpack.c.h.b16 %v374
      %v487 = vunpack.c.l.b16 %v375
      %v488 = vunpack.c.l.b16 %v376
      %v489 = vunpack.c.h.b16 %v376
      %v490 = vunpack.c.l.b16 %v377
      %v491 = vunpack.c.h.b16 %v377
      %v492 = vunpack.c.l.b16 %v378
      %v493 = vunpack.c.l.b16 %v379
      %v494 = vunpack.c.h.b16 %v379
      %v495 = vunpack.c.l.b16 %v380
      %v496 = vunpack.c.h.b16 %v380
      %v497 = vunpack.c.l.b16 %v381
      %v498 = vunpack.c.l.b16 %v382
      %v499 = vunpack.c.h.b16 %v382
      %v500 = vunpack.c.l.b16 %v383
      %v501 = vunpack.c.h.b16 %v383
      %v502 = vunpack.c.l.b16 %v384
      %v503 = vunpack.c.l.b16 %v385
      %v504 = vunpack.c.h.b16 %v385
      %v505 = vunpack.c.l.b16 %v386
      %v506 = vunpack.c.h.b16 %v386
      %v507 = vunpack.c.l.b16 %v387
      %v508 = vunpack.c.l.b16 %v388
      %v509 = vunpack.c.h.b16 %v388
      %v510 = vunpack.c.l.b16 %v389
      %v511 = vunpack.c.h.b16 %v389
      %v512 = vunpack.c.l.b16 %v390
      %v513 = vunpack.c.l.b16 %v391
      %v514 = vunpack.c.h.b16 %v391
      %v515 = vunpack.c.l.b16 %v392
      %v516 = vunpack.c.h.b16 %v392
      %v517 = vunpack.c.l.b16 %v393
      %v518 = vunpack.c.l.b16 %v394
      %v519 = vunpack.c.h.b16 %v394
      %v520 = vunpack.c.l.b16 %v395
      %v521 = vunpack.c.h.b16 %v395
      %v522 = vunpack.c.l.b16 %v396
      %v523 = vunpack.c.l.b16 %v397
      %v524 = vunpack.c.h.b16 %v397
      %v525 = vunpack.c.l.b16 %v398
      %v526 = vunpack.c.h.b16 %v398
      %v527 = vunpack.c.l.b16 %v399
      %v528 = vpack.c.b16 %v453, %v448
      %v529 = vpack.c.b16 %v454, %v449
      %v530 = vpack.c.b16 %v455, %v450
      %v531 = vpack.c.b16 %v456, %v451
      %v532 = vpack.c.b16 %v457, %v452
      %v533 = vpack.c.b16 %v463, %v458
      %v534 = vpack.c.b16 %v464, %v459
      %v535 = vpack.c.b16 %v465, %v460
      %v536 = vpack.c.b16 %v466, %v461
      %v537 = vpack.c.b16 %v467, %v462
      %v538 = vpack.c.b16 %v473, %v468
      %v539 = vpack.c.b16 %v474, %v469
      %v540 = vpack.c.b16 %v475, %v470
      %v541 = vpack.c.b16 %v476, %v471
      %v542 = vpack.c.b16 %v477, %v472
      %v543 = vpack.c.b16 %v483, %v478
      %v544 = vpack.c.b16 %v484, %v479
      %v545 = vpack.c.b16 %v485, %v480
      %v546 = vpack.c.b16 %v486, %v481
      %v547 = vpack.c.b16 %v487, %v482
      %v548 = vpack.c.b16 %v493, %v488
      %v549 = vpack.c.b16 %v494, %v489
      %v550 = vpack.c.b16 %v495, %v490
      %v551 = vpack.c.b16 %v496, %v491
      %v552 = vpack.c.b16 %v497, %v492
      %v553 = vpack.c.b16 %v503, %v498
      %v554 = vpack.c.b16 %v504, %v499
      %v555 = vpack.c.b16 %v505, %v500
      %v556 = vpack.c.b16 %v506, %v501
      %v557 = vpack.c.b16 %v507, %v502
      %v558 = vpack.c.b16 %v513, %v508
      %v559 = vpack.c.b16 %v514, %v509
      %v560 = vpack.c.b16 %v515, %v510
      %v561 = vpack.c.b16 %v516, %v511
      %v562 = vpack.c.b16 %v517, %v512
      %v563 = vpack.c.b16 %v523, %v518
      %v564 = vpack.c.b16 %v524, %v519
      %v565 = vpack.c.b16 %v525, %v520
      %v566 = vpack.c.b16 %v526, %v521
      %v567 = vpack.c.b16 %v527, %v522
      %v672 = vunpack.c.l.b16 %v280
      %v673 = vunpack.c.l.b16 %v281
      %v674 = vunpack.c.l.b16 %v282
      %v675 = vunpack.c.l.b16 %v283
      %v676 = vunpack.c.l.b16 %v284
      %v677 = vunpack.c.l.b16 %v285
      %v678 = vunpack.c.l.b16 %v286
      %v679 = vunpack.c.l.b16 %v287
      %v680 = vunpack.c.l.b16 %v288
      %v681 = vunpack.c.l.b16 %v289
      %v682 = vunpack.c.l.b16 %v290
      %v683 = vunpack.c.l.b16 %v291
      %v684 = vunpack.c.l.b16 %v292
      %v685 = vunpack.c.l.b16 %v293
      %v686 = vunpack.c.l.b16 %v294
      %v687 = vunpack.c.l.b16 %v295
      %v688 = vunpack.c.l.b16 %v296
      %v689 = vunpack.c.l.b16 %v297
      %v690 = vunpack.c.l.b16 %v298
      %v691 = vunpack.c.l.b16 %v299
      %v692 = vunpack.c.l.b16 %v300
      %v693 = vunpack.c.l.b16 %v301
      %v694 = vunpack.c.l.b16 %v302
      %v695 = vunpack.c.l.b16 %v303
      %v696 = vunpack.c.l.b16 %v304
      %v697 = vunpack.c.l.b16 %v305
      %v698 = vunpack.c.l.b16 %v306
      %v699 = vunpack.c.l.b16 %v307
      %v700 = vunpack.c.l.b16 %v308
      %v701 = vunpack.c.l.b16 %v309
      %v702 = vunpack.c.l.b16 %v310
      %v703 = vunpack.c.l.b16 %v311
      %v704 = vunpack.c.l.b16 %v312
      %v705 = vunpack.c.l.b16 %v313
      %v706 = vunpack.c.l.b16 %v314
      %v707 = vunpack.c.l.b16 %v315
      %v708 = vunpack.c.l.b16 %v316
      %v709 = vunpack.c.l.b16 %v317
      %v710 = vunpack.c.l.b16 %v318
      %v711 = vunpack.c.l.b16 %v319
      %v712 = vunpack.c.l.b16 %v320
      %v713 = vunpack.c.l.b16 %v321
      %v714 = vunpack.c.l.b16 %v322
      %v715 = vunpack.c.l.b16 %v323
      %v716 = vunpack.c.l.b16 %v324
      %v717 = vunpack.c.l.b16 %v325
      %v718 = vunpack.c.l.b16 %v326
      %v719 = vunpack.c.l.b16 %v327
      %v720 = vunpack.c.l.b16 %v328
      %v721 = vunpack.c.l.b16 %v329
      %v722 = vunpack.c.l.b16 %v330
      %v723 = vunpack.c.l.b16 %v331
      %v724 = vunpack.c.l.b16 %v332
      %v725 = vunpack.c.l.b16 %v333
      %v726 = vunpack.c.l.b16 %v334
      %v727 = vunpack.c.l.b16 %v335
      %v728 = vunpack.c.l.b16 %v336
      %v729 = vunpack.c.l.b16 %v337
      %v730 = vunpack.c.l.b16 %v338
      %v731 = vunpack.c.l.b16 %v339
      %v732 = vunpack.c.l.b16 %v340
      %v733 = vunpack.c.l.b16 %v341
      %v734 = vunpack.c.l.b16 %v342
      %v735 = vunpack.c.l.b16 %v343
      %v736 = vunpack.c.l.b16 %v344
      %v737 = vunpack.c.l.b16 %v345
      %v738 = vunpack.c.l.b16 %v346
      %v739 = vunpack.c.l.b16 %v347
      %v740 = vunpack.c.l.b16 %v348
      %v741 = vunpack.c.l.b16 %v349
      %v742 = vunpack.c.l.b16 %v350
      %v743 = vunpack.c.l.b16 %v351
      %v744 = vpack.c.b16 %v673, %v672
      %v745 = vpack.c.b16 %v675, %v674
      %v746 = vpack.c.b16 %v677, %v676
      %v747 = vpack.c.b16 %v679, %v678
      %v748 = vpack.c.b16 %v681, %v680
      %v749 = vpack.c.b16 %v683, %v682
      %v750 = vpack.c.b16 %v685, %v684
      %v751 = vpack.c.b16 %v687, %v686
      %v752 = vpack.c.b16 %v689, %v688
      %v753 = vpack.c.b16 %v691, %v690
      %v754 = vpack.c.b16 %v693, %v692
      %v755 = vpack.c.b16 %v695, %v694
      %v756 = vpack.c.b16 %v697, %v696
      %v757 = vpack.c.b16 %v699, %v698
      %v758 = vpack.c.b16 %v701, %v700
      %v759 = vpack.c.b16 %v703, %v702
      %v760 = vpack.c.b16 %v705, %v704
      %v761 = vpack.c.b16 %v707, %v706
      %v762 = vpack.c.b16 %v709, %v708
      %v763 = vpack.c.b16 %v711, %v710
      %v764 = vpack.c.b16 %v713, %v712
      %v765 = vpack.c.b16 %v715, %v714
      %v766 = vpack.c.b16 %v717, %v716
      %v767 = vpack.c.b16 %v719, %v718
      %v768 = vpack.c.b16 %v721, %v720
      %v769 = vpack.c.b16 %v723, %v722
      %v770 = vpack.c.b16 %v725, %v724
      %v771 = vpack.c.b16 %v727, %v726
      %v772 = vpack.c.b16 %v729, %v728
      %v773 = vpack.c.b16 %v731, %v730
      %v774 = vpack.c.b16 %v733, %v732
      %v775 = vpack.c.b16 %v735, %v734
      %v776 = vpack.c.b16 %v737, %v736
      %v777 = vpack.c.b16 %v739, %v738
      %v778 = vpack.c.b16 %v741, %v740
      %v779 = vpack.c.b16 %v743, %v742
      %vm816 = vcmask 523264
      %v818 = vsel %vm816, %v532, 0
      %v821 = vsel %vm816, %v537, 0
      %v824 = vsel %vm816, %v542, 0
      %v827 = vsel %vm816, %v547, 0
      %v830 = vsel %vm816, %v552, 0
      %v833 = vsel %vm816, %v557, 0
      %v836 = vsel %vm816, %v562, 0
      %v839 = vsel %vm816, %v567, 0
      %841 = vmatprep.subr.bf16.mxu0 0
      %842 = vmatpush1.bf16.msra.mxu0 %v751
      %843 = vmatprep.subr.bf16.mxu0 0
      %844 = vmatpush1.bf16.msra.mxu0 %v750
      %845 = vmatprep.subr.bf16.mxu0 0
      %846 = vmatpush1.bf16.msra.mxu0 %v749
      %847 = vmatprep.subr.bf16.mxu0 0
      %848 = vmatpush1.bf16.msra.mxu0 %v748
      %849 = vmatprep.subr.bf16.mxu0 0
      %850 = vmatpush1.bf16.msra.mxu0 %v747
      %851 = vmatprep.subr.bf16.mxu0 0
      %852 = vmatpush1.bf16.msra.mxu0 %v746
      %853 = vmatprep.subr.bf16.mxu0 0
      %854 = vmatpush1.bf16.msra.mxu0 %v745
      %855 = vmatprep.subr.bf16.mxu0 0
      %856 = vmatpush1.bf16.msra.mxu0 %v744
      %857 = vmatprep.subr.bf16.mxu0 0
      %858 = vmatpush2.bf16.msra.mxu0 %v759
      %859 = vmatprep.subr.bf16.mxu0 0
      %860 = vmatpush2.bf16.msra.mxu0 %v758
      %861 = vmatprep.subr.bf16.mxu0 0
      %862 = vmatpush2.bf16.msra.mxu0 %v757
      %863 = vmatprep.subr.bf16.mxu0 0
      %864 = vmatpush2.bf16.msra.mxu0 %v756
      %865 = vmatprep.subr.bf16.mxu0 0
      %866 = vmatpush2.bf16.msra.mxu0 %v755
      %867 = vmatprep.subr.bf16.mxu0 0
      %868 = vmatpush2.bf16.msra.mxu0 %v754
      %869 = vmatprep.subr.bf16.mxu0 0
      %870 = vmatpush2.bf16.msra.mxu0 %v753
      %871 = vmatprep.subr.bf16.mxu0 0
      %872 = vmatpush2.bf16.msra.mxu0 %v752
      %873 = vmatprep.mubr.bf16.mxu0 %v529
      %874 = vmatmul.mubr.bf16.gmra.mxu0 %v528
      %v875 = vpop.f32.mrf.mxu0
      %v876 = vadd.f32 0.0, %v875
      %v877 = vpop.f32.mrf.mxu0
      %v878 = vpop.f32.mrf.mxu0
      %v879 = vadd.f32 0.0, %v878
      %v880 = vpop.f32.mrf.mxu0
      %881 = vmatprep.mubr.bf16.mxu0 %v534
      %882 = vmatmul.mubr.bf16.gmra.mxu0 %v533
      %v883 = vpop.f32.mrf.mxu0
      %v884 = vadd.f32 0.0, %v883
      %v885 = vpop.f32.mrf.mxu0
      %v886 = vpop.f32.mrf.mxu0
      %v887 = vadd.f32 0.0, %v886
      %v888 = vpop.f32.mrf.mxu0
      %889 = vmatprep.mubr.bf16.mxu0 %v539
      %890 = vmatmul.mubr.bf16.gmra.mxu0 %v538
      %v891 = vpop.f32.mrf.mxu0
      %v892 = vadd.f32 0.0, %v891
      %v893 = vpop.f32.mrf.mxu0
      %v894 = vpop.f32.mrf.mxu0
      %v895 = vadd.f32 0.0, %v894
      %v896 = vpop.f32.mrf.mxu0
      %897 = vmatprep.mubr.bf16.mxu0 %v544
      %898 = vmatmul.mubr.bf16.gmra.mxu0 %v543
      %v899 = vpop.f32.mrf.mxu0
      %v900 = vadd.f32 0.0, %v899
      %v901 = vpop.f32.mrf.mxu0
      %v902 = vpop.f32.mrf.mxu0
      %v903 = vadd.f32 0.0, %v902
      %v904 = vpop.f32.mrf.mxu0
      %905 = vmatprep.mubr.bf16.mxu0 %v549
      %906 = vmatmul.mubr.bf16.gmra.mxu0 %v548
      %v907 = vpop.f32.mrf.mxu0
      %v908 = vadd.f32 0.0, %v907
      %v909 = vpop.f32.mrf.mxu0
      %v910 = vpop.f32.mrf.mxu0
      %v911 = vadd.f32 0.0, %v910
      %v912 = vpop.f32.mrf.mxu0
      %913 = vmatprep.mubr.bf16.mxu0 %v554
      %914 = vmatmul.mubr.bf16.gmra.mxu0 %v553
      %v915 = vpop.f32.mrf.mxu0
      %v916 = vadd.f32 0.0, %v915
      %v917 = vpop.f32.mrf.mxu0
      %v918 = vpop.f32.mrf.mxu0
      %v919 = vadd.f32 0.0, %v918
      %v920 = vpop.f32.mrf.mxu0
      %921 = vmatprep.mubr.bf16.mxu0 %v559
      %922 = vmatmul.mubr.bf16.gmra.mxu0 %v558
      %v923 = vpop.f32.mrf.mxu0
      %v924 = vadd.f32 0.0, %v923
      %v925 = vpop.f32.mrf.mxu0
      %v926 = vpop.f32.mrf.mxu0
      %v927 = vadd.f32 0.0, %v926
      %v928 = vpop.f32.mrf.mxu0
      %929 = vmatprep.mubr.bf16.mxu0 %v564
      %930 = vmatmul.mubr.bf16.gmra.mxu0 %v563
      %v931 = vpop.f32.mrf.mxu0
      %v932 = vadd.f32 0.0, %v931
      %v933 = vpop.f32.mrf.mxu0
      %v934 = vpop.f32.mrf.mxu0
      %v935 = vadd.f32 0.0, %v934
      %v936 = vpop.f32.mrf.mxu0
      %937 = vdwg.mxu0
      %938 = vmatprep.subr.bf16.mxu0 0
      %939 = vmatpush1.bf16.msra.mxu0 %v767
      %940 = vmatprep.subr.bf16.mxu0 0
      %941 = vmatpush1.bf16.msra.mxu0 %v766
      %942 = vmatprep.subr.bf16.mxu0 0
      %943 = vmatpush1.bf16.msra.mxu0 %v765
      %944 = vmatprep.subr.bf16.mxu0 0
      %945 = vmatpush1.bf16.msra.mxu0 %v764
      %946 = vmatprep.subr.bf16.mxu0 0
      %947 = vmatpush1.bf16.msra.mxu0 %v763
      %948 = vmatprep.subr.bf16.mxu0 0
      %949 = vmatpush1.bf16.msra.mxu0 %v762
      %950 = vmatprep.subr.bf16.mxu0 0
      %951 = vmatpush1.bf16.msra.mxu0 %v761
      %952 = vmatprep.subr.bf16.mxu0 0
      %953 = vmatpush1.bf16.msra.mxu0 %v760
      %954 = vmatprep.subr.bf16.mxu0 0
      %955 = vmatpush2.bf16.msra.mxu0 %v775
      %956 = vmatprep.subr.bf16.mxu0 0
      %957 = vmatpush2.bf16.msra.mxu0 %v774
      %958 = vmatprep.subr.bf16.mxu0 0
      %959 = vmatpush2.bf16.msra.mxu0 %v773
      %960 = vmatprep.subr.bf16.mxu0 0
      %961 = vmatpush2.bf16.msra.mxu0 %v772
      %962 = vmatprep.subr.bf16.mxu0 0
      %963 = vmatpush2.bf16.msra.mxu0 %v771
      %964 = vmatprep.subr.bf16.mxu0 0
      %965 = vmatpush2.bf16.msra.mxu0 %v770
      %966 = vmatprep.subr.bf16.mxu0 0
      %967 = vmatpush2.bf16.msra.mxu0 %v769
      %968 = vmatprep.subr.bf16.mxu0 0
      %969 = vmatpush2.bf16.msra.mxu0 %v768
      %970 = vmatprep.mubr.bf16.mxu0 %v531
      %971 = vmatmul.mubr.bf16.gmra.mxu0 %v530
      %v972 = vpop.f32.mrf.mxu0
      %v973 = vadd.f32 %v876, %v972
      %v974 = vpop.f32.mrf.mxu0
      %v975 = vpop.f32.mrf.mxu0
      %v976 = vadd.f32 %v879, %v975
      %v977 = vpop.f32.mrf.mxu0
      %978 = vmatprep.mubr.bf16.mxu0 %v536
      %979 = vmatmul.mubr.bf16.gmra.mxu0 %v535
      %v980 = vpop.f32.mrf.mxu0
      %v981 = vadd.f32 %v884, %v980
      %v982 = vpop.f32.mrf.mxu0
      %v983 = vpop.f32.mrf.mxu0
      %v984 = vadd.f32 %v887, %v983
      %v985 = vpop.f32.mrf.mxu0
      %986 = vmatprep.mubr.bf16.mxu0 %v541
      %987 = vmatmul.mubr.bf16.gmra.mxu0 %v540
      %v988 = vpop.f32.mrf.mxu0
      %v989 = vadd.f32 %v892, %v988
      %v990 = vpop.f32.mrf.mxu0
      %v991 = vpop.f32.mrf.mxu0
      %v992 = vadd.f32 %v895, %v991
      %v993 = vpop.f32.mrf.mxu0
      %994 = vmatprep.mubr.bf16.mxu0 %v546
      %995 = vmatmul.mubr.bf16.gmra.mxu0 %v545
      %v996 = vpop.f32.mrf.mxu0
      %v997 = vadd.f32 %v900, %v996
      %v998 = vpop.f32.mrf.mxu0
      %v999 = vpop.f32.mrf.mxu0
      %v1000 = vadd.f32 %v903, %v999
      %v1001 = vpop.f32.mrf.mxu0
      %1002 = vmatprep.mubr.bf16.mxu0 %v551
      %1003 = vmatmul.mubr.bf16.gmra.mxu0 %v550
      %v1004 = vpop.f32.mrf.mxu0
      %v1005 = vadd.f32 %v908, %v1004
      %v1006 = vpop.f32.mrf.mxu0
      %v1007 = vpop.f32.mrf.mxu0
      %v1008 = vadd.f32 %v911, %v1007
      %v1009 = vpop.f32.mrf.mxu0
      %1010 = vmatprep.mubr.bf16.mxu0 %v556
      %1011 = vmatmul.mubr.bf16.gmra.mxu0 %v555
      %v1012 = vpop.f32.mrf.mxu0
      %v1013 = vadd.f32 %v916, %v1012
      %v1014 = vpop.f32.mrf.mxu0
      %v1015 = vpop.f32.mrf.mxu0
      %v1016 = vadd.f32 %v919, %v1015
      %v1017 = vpop.f32.mrf.mxu0
      %1018 = vmatprep.mubr.bf16.mxu0 %v561
      %1019 = vmatmul.mubr.bf16.gmra.mxu0 %v560
      %v1020 = vpop.f32.mrf.mxu0
      %v1021 = vadd.f32 %v924, %v1020
      %v1022 = vpop.f32.mrf.mxu0
      %v1023 = vpop.f32.mrf.mxu0
      %v1024 = vadd.f32 %v927, %v1023
      %v1025 = vpop.f32.mrf.mxu0
      %1026 = vmatprep.mubr.bf16.mxu0 %v566
      %1027 = vmatmul.mubr.bf16.gmra.mxu0 %v565
      %v1028 = vpop.f32.mrf.mxu0
      %v1029 = vadd.f32 %v932, %v1028
      %v1030 = vpop.f32.mrf.mxu0
      %v1031 = vpop.f32.mrf.mxu0
      %v1032 = vadd.f32 %v935, %v1031
      %v1033 = vpop.f32.mrf.mxu0
      %1034 = vdwg.mxu0
      %1035 = vmatprep.subr.bf16.mxu0 0
      %1036 = vmatpush1.bf16.msra.mxu0 0
      %1037 = vmatprep.subr.bf16.mxu0 0
      %1038 = vmatpush1.bf16.msra.mxu0 0
      %1039 = vmatprep.subr.bf16.mxu0 0
      %1040 = vmatpush1.bf16.msra.mxu0 0
      %1041 = vmatprep.subr.bf16.mxu0 0
      %1042 = vmatpush1.bf16.msra.mxu0 0
      %1043 = vmatprep.subr.bf16.mxu0 0
      %1044 = vmatpush1.bf16.msra.mxu0 %v779
      %1045 = vmatprep.subr.bf16.mxu0 0
      %1046 = vmatpush1.bf16.msra.mxu0 %v778
      %1047 = vmatprep.subr.bf16.mxu0 0
      %1048 = vmatpush1.bf16.msra.mxu0 %v777
      %1049 = vmatprep.subr.bf16.mxu0 0
      %1050 = vmatpush1.bf16.msra.mxu0 %v776
      %1051 = vmatprep.subr.bf16.mxu0 0
      %1052 = vmatpush2.bf16.msra.mxu0 0
      %1053 = vmatprep.subr.bf16.mxu0 0
      %1054 = vmatpush2.bf16.msra.mxu0 0
      %1055 = vmatprep.subr.bf16.mxu0 0
      %1056 = vmatpush2.bf16.msra.mxu0 0
      %1057 = vmatprep.subr.bf16.mxu0 0
      %1058 = vmatpush2.bf16.msra.mxu0 0
      %1059 = vmatprep.subr.bf16.mxu0 0
      %1060 = vmatpush2.bf16.msra.mxu0 0
      %1061 = vmatprep.subr.bf16.mxu0 0
      %1062 = vmatpush2.bf16.msra.mxu0 0
      %1063 = vmatprep.subr.bf16.mxu0 0
      %1064 = vmatpush2.bf16.msra.mxu0 0
      %1065 = vmatprep.subr.bf16.mxu0 0
      %1066 = vmatpush2.bf16.msra.mxu0 0
      %1067 = vmatprep.mubr.bf16.mxu0 0
      %1068 = vmatmul.mubr.bf16.gmra.mxu0 %v818
      %v1069 = vpop.f32.mrf.mxu0
      %v1070 = vadd.f32 %v973, %v1069
      %v1071 = vpop.f32.mrf.mxu0
      %v1072 = vpop.f32.mrf.mxu0
      %v1073 = vadd.f32 %v976, %v1072
      %v1074 = vpop.f32.mrf.mxu0
      %1075 = vmatprep.mubr.bf16.mxu0 0
      %1076 = vmatmul.mubr.bf16.gmra.mxu0 %v821
      %v1077 = vpop.f32.mrf.mxu0
      %v1078 = vadd.f32 %v981, %v1077
      %v1079 = vpop.f32.mrf.mxu0
      %v1080 = vpop.f32.mrf.mxu0
      %v1081 = vadd.f32 %v984, %v1080
      %v1082 = vpop.f32.mrf.mxu0
      %1083 = vmatprep.mubr.bf16.mxu0 0
      %1084 = vmatmul.mubr.bf16.gmra.mxu0 %v824
      %v1085 = vpop.f32.mrf.mxu0
      %v1086 = vadd.f32 %v989, %v1085
      %v1087 = vpop.f32.mrf.mxu0
      %v1088 = vpop.f32.mrf.mxu0
      %v1089 = vadd.f32 %v992, %v1088
      %v1090 = vpop.f32.mrf.mxu0
      %1091 = vmatprep.mubr.bf16.mxu0 0
      %1092 = vmatmul.mubr.bf16.gmra.mxu0 %v827
      %v1093 = vpop.f32.mrf.mxu0
      %v1094 = vadd.f32 %v997, %v1093
      %v1095 = vpop.f32.mrf.mxu0
      %v1096 = vpop.f32.mrf.mxu0
      %v1097 = vadd.f32 %v1000, %v1096
      %v1098 = vpop.f32.mrf.mxu0
      %1099 = vmatprep.mubr.bf16.mxu0 0
      %1100 = vmatmul.mubr.bf16.gmra.mxu0 %v830
      %v1101 = vpop.f32.mrf.mxu0
      %v1102 = vadd.f32 %v1005, %v1101
      %v1103 = vpop.f32.mrf.mxu0
      %v1104 = vpop.f32.mrf.mxu0
      %v1105 = vadd.f32 %v1008, %v1104
      %v1106 = vpop.f32.mrf.mxu0
      %1107 = vmatprep.mubr.bf16.mxu0 0
      %1108 = vmatmul.mubr.bf16.gmra.mxu0 %v833
      %v1109 = vpop.f32.mrf.mxu0
      %v1110 = vadd.f32 %v1013, %v1109
      %v1111 = vpop.f32.mrf.mxu0
      %v1112 = vpop.f32.mrf.mxu0
      %v1113 = vadd.f32 %v1016, %v1112
      %v1114 = vpop.f32.mrf.mxu0
      %1115 = vmatprep.mubr.bf16.mxu0 0
      %1116 = vmatmul.mubr.bf16.gmra.mxu0 %v836
      %v1117 = vpop.f32.mrf.mxu0
      %v1118 = vadd.f32 %v1021, %v1117
      %v1119 = vpop.f32.mrf.mxu0
      %v1120 = vpop.f32.mrf.mxu0
      %v1121 = vadd.f32 %v1024, %v1120
      %v1122 = vpop.f32.mrf.mxu0
      %1123 = vmatprep.mubr.bf16.mxu0 0
      %1124 = vmatmul.mubr.bf16.gmra.mxu0 %v839
      %v1125 = vpop.f32.mrf.mxu0
      %v1126 = vadd.f32 %v1029, %v1125
      %v1127 = vpop.f32.mrf.mxu0
      %v1128 = vpop.f32.mrf.mxu0
      %v1129 = vadd.f32 %v1032, %v1128
      %v1130 = vpop.f32.mrf.mxu0
      %1131 = vdwg.mxu0
      %v1132 = vld [vmem:[%s267] sm:$0xff]
      %v1133 = vld [vmem:[%s267 + $0x8] sm:$0xff]
      %v1134 = vld [vmem:[%s267 + $0x10] sm:$0xf]
      %v1135 = vld [vmem:[%s267 + $0x14] sm:$0xff]
      %v1136 = vld [vmem:[%s267 + $0x1c] sm:$0xff]
      %v1137 = vld [vmem:[%s267 + $0x24] sm:$0xf]
      %v1138 = vld [vmem:[%s267 + $0x28] sm:$0xff]
      %v1139 = vld [vmem:[%s267 + $0x30] sm:$0xff]
      %v1140 = vld [vmem:[%s267 + $0x38] sm:$0xf]
      %v1141 = vld [vmem:[%s267 + $0x3c] sm:$0xff]
      %v1142 = vld [vmem:[%s267 + $0x44] sm:$0xff]
      %v1143 = vld [vmem:[%s267 + $0x4c] sm:$0xf]
      %v1144 = vld [vmem:[%s267 + $0x50] sm:$0xff]
      %v1145 = vld [vmem:[%s267 + $0x58] sm:$0xff]
      %v1146 = vld [vmem:[%s267 + $0x60] sm:$0xf]
      %v1147 = vld [vmem:[%s267 + $0x64] sm:$0xff]
      %v1148 = vld [vmem:[%s267 + $0x6c] sm:$0xff]
      %v1149 = vld [vmem:[%s267 + $0x74] sm:$0xf]
      %v1150 = vld [vmem:[%s267 + $0x78] sm:$0xff]
      %v1151 = vld [vmem:[%s267 + $0x80] sm:$0xff]
      %v1152 = vld [vmem:[%s267 + $0x88] sm:$0xf]
      %v1153 = vld [vmem:[%s267 + $0x8c] sm:$0xff]
      %v1154 = vld [vmem:[%s267 + $0x94] sm:$0xff]
      %v1155 = vld [vmem:[%s267 + $0x9c] sm:$0xf]
      %v1156 = vld [vmem:[%s267 + $0xa0] sm:$0xff]
      %v1157 = vld [vmem:[%s267 + $0xa8] sm:$0xff]
      %v1158 = vld [vmem:[%s267 + $0xb0] sm:$0xf]
      %v1159 = vld [vmem:[%s267 + $0xb4] sm:$0xff]
      %v1160 = vld [vmem:[%s267 + $0xbc] sm:$0xff]
      %v1161 = vld [vmem:[%s267 + $0xc4] sm:$0xf]
      %v1162 = vld [vmem:[%s267 + $0xc8] sm:$0xff]
      %v1163 = vld [vmem:[%s267 + $0xd0] sm:$0xff]
      %v1164 = vld [vmem:[%s267 + $0xd8] sm:$0xf]
      %v1165 = vld [vmem:[%s267 + $0xdc] sm:$0xff]
      %v1166 = vld [vmem:[%s267 + $0xe4] sm:$0xff]
      %v1167 = vld [vmem:[%s267 + $0xec] sm:$0xf]
      %v1168 = vld [vmem:[%s267 + $0xf0] sm:$0xff]
      %v1169 = vld [vmem:[%s267 + $0xf8] sm:$0xff]
      %v1170 = vld [vmem:[%s267 + $0x100] sm:$0xf]
      %v1171 = vld [vmem:[%s267 + $0x104] sm:$0xff]
      %v1172 = vld [vmem:[%s267 + $0x10c] sm:$0xff]
      %v1173 = vld [vmem:[%s267 + $0x114] sm:$0xf]
      %v1174 = vld [vmem:[%s267 + $0x118] sm:$0xff]
      %v1175 = vld [vmem:[%s267 + $0x120] sm:$0xff]
      %v1176 = vld [vmem:[%s267 + $0x128] sm:$0xf]
      %v1177 = vld [vmem:[%s267 + $0x12c] sm:$0xff]
      %v1178 = vld [vmem:[%s267 + $0x134] sm:$0xff]
      %v1179 = vld [vmem:[%s267 + $0x13c] sm:$0xf]
      %v1228 = vunpack.c.l.b16 %v1132
      %v1229 = vunpack.c.h.b16 %v1132
      %v1230 = vunpack.c.l.b16 %v1133
      %v1231 = vunpack.c.h.b16 %v1133
      %v1232 = vunpack.c.l.b16 %v1134
      %v1233 = vunpack.c.l.b16 %v1135
      %v1234 = vunpack.c.h.b16 %v1135
      %v1235 = vunpack.c.l.b16 %v1136
      %v1236 = vunpack.c.h.b16 %v1136
      %v1237 = vunpack.c.l.b16 %v1137
      %v1238 = vunpack.c.l.b16 %v1138
      %v1239 = vunpack.c.h.b16 %v1138
      %v1240 = vunpack.c.l.b16 %v1139
      %v1241 = vunpack.c.h.b16 %v1139
      %v1242 = vunpack.c.l.b16 %v1140
      %v1243 = vunpack.c.l.b16 %v1141
      %v1244 = vunpack.c.h.b16 %v1141
      %v1245 = vunpack.c.l.b16 %v1142
      %v1246 = vunpack.c.h.b16 %v1142
      %v1247 = vunpack.c.l.b16 %v1143
      %v1248 = vunpack.c.l.b16 %v1144
      %v1249 = vunpack.c.h.b16 %v1144
      %v1250 = vunpack.c.l.b16 %v1145
      %v1251 = vunpack.c.h.b16 %v1145
      %v1252 = vunpack.c.l.b16 %v1146
      %v1253 = vunpack.c.l.b16 %v1147
      %v1254 = vunpack.c.h.b16 %v1147
      %v1255 = vunpack.c.l.b16 %v1148
      %v1256 = vunpack.c.h.b16 %v1148
      %v1257 = vunpack.c.l.b16 %v1149
      %v1258 = vunpack.c.l.b16 %v1150
      %v1259 = vunpack.c.h.b16 %v1150
      %v1260 = vunpack.c.l.b16 %v1151
      %v1261 = vunpack.c.h.b16 %v1151
      %v1262 = vunpack.c.l.b16 %v1152
      %v1263 = vunpack.c.l.b16 %v1153
      %v1264 = vunpack.c.h.b16 %v1153
      %v1265 = vunpack.c.l.b16 %v1154
      %v1266 = vunpack.c.h.b16 %v1154
      %v1267 = vunpack.c.l.b16 %v1155
      %v1268 = vunpack.c.l.b16 %v1156
      %v1269 = vunpack.c.h.b16 %v1156
      %v1270 = vunpack.c.l.b16 %v1157
      %v1271 = vunpack.c.h.b16 %v1157
      %v1272 = vunpack.c.l.b16 %v1158
      %v1273 = vunpack.c.l.b16 %v1159
      %v1274 = vunpack.c.h.b16 %v1159
      %v1275 = vunpack.c.l.b16 %v1160
      %v1276 = vunpack.c.h.b16 %v1160
      %v1277 = vunpack.c.l.b16 %v1161
      %v1278 = vunpack.c.l.b16 %v1162
      %v1279 = vunpack.c.h.b16 %v1162
      %v1280 = vunpack.c.l.b16 %v1163
      %v1281 = vunpack.c.h.b16 %v1163
      %v1282 = vunpack.c.l.b16 %v1164
      %v1283 = vunpack.c.l.b16 %v1165
      %v1284 = vunpack.c.h.b16 %v1165
      %v1285 = vunpack.c.l.b16 %v1166
      %v1286 = vunpack.c.h.b16 %v1166
      %v1287 = vunpack.c.l.b16 %v1167
      %v1288 = vunpack.c.l.b16 %v1168
      %v1289 = vunpack.c.h.b16 %v1168
      %v1290 = vunpack.c.l.b16 %v1169
      %v1291 = vunpack.c.h.b16 %v1169
      %v1292 = vunpack.c.l.b16 %v1170
      %v1293 = vunpack.c.l.b16 %v1171
      %v1294 = vunpack.c.h.b16 %v1171
      %v1295 = vunpack.c.l.b16 %v1172
      %v1296 = vunpack.c.h.b16 %v1172
      %v1297 = vunpack.c.l.b16 %v1173
      %v1298 = vunpack.c.l.b16 %v1174
      %v1299 = vunpack.c.h.b16 %v1174
      %v1300 = vunpack.c.l.b16 %v1175
      %v1301 = vunpack.c.h.b16 %v1175
      %v1302 = vunpack.c.l.b16 %v1176
      %v1303 = vunpack.c.l.b16 %v1177
      %v1304 = vunpack.c.h.b16 %v1177
      %v1305 = vunpack.c.l.b16 %v1178
      %v1306 = vunpack.c.h.b16 %v1178
      %v1307 = vunpack.c.l.b16 %v1179
      %v1308 = vpack.c.b16 %v1233, %v1228
      %v1309 = vpack.c.b16 %v1234, %v1229
      %v1310 = vpack.c.b16 %v1235, %v1230
      %v1311 = vpack.c.b16 %v1236, %v1231
      %v1312 = vpack.c.b16 %v1237, %v1232
      %v1313 = vpack.c.b16 %v1243, %v1238
      %v1314 = vpack.c.b16 %v1244, %v1239
      %v1315 = vpack.c.b16 %v1245, %v1240
      %v1316 = vpack.c.b16 %v1246, %v1241
      %v1317 = vpack.c.b16 %v1247, %v1242
      %v1318 = vpack.c.b16 %v1253, %v1248
      %v1319 = vpack.c.b16 %v1254, %v1249
      %v1320 = vpack.c.b16 %v1255, %v1250
      %v1321 = vpack.c.b16 %v1256, %v1251
      %v1322 = vpack.c.b16 %v1257, %v1252
      %v1323 = vpack.c.b16 %v1263, %v1258
      %v1324 = vpack.c.b16 %v1264, %v1259
      %v1325 = vpack.c.b16 %v1265, %v1260
      %v1326 = vpack.c.b16 %v1266, %v1261
      %v1327 = vpack.c.b16 %v1267, %v1262
      %v1328 = vpack.c.b16 %v1273, %v1268
      %v1329 = vpack.c.b16 %v1274, %v1269
      %v1330 = vpack.c.b16 %v1275, %v1270
      %v1331 = vpack.c.b16 %v1276, %v1271
      %v1332 = vpack.c.b16 %v1277, %v1272
      %v1333 = vpack.c.b16 %v1283, %v1278
      %v1334 = vpack.c.b16 %v1284, %v1279
      %v1335 = vpack.c.b16 %v1285, %v1280
      %v1336 = vpack.c.b16 %v1286, %v1281
      %v1337 = vpack.c.b16 %v1287, %v1282
      %v1338 = vpack.c.b16 %v1293, %v1288
      %v1339 = vpack.c.b16 %v1294, %v1289
      %v1340 = vpack.c.b16 %v1295, %v1290
      %v1341 = vpack.c.b16 %v1296, %v1291
      %v1342 = vpack.c.b16 %v1297, %v1292
      %v1343 = vpack.c.b16 %v1303, %v1298
      %v1344 = vpack.c.b16 %v1304, %v1299
      %v1345 = vpack.c.b16 %v1305, %v1300
      %v1346 = vpack.c.b16 %v1306, %v1301
      %v1347 = vpack.c.b16 %v1307, %v1302
      %v1381 = vsel %vm816, %v1312, 0
      %v1384 = vsel %vm816, %v1317, 0
      %v1387 = vsel %vm816, %v1322, 0
      %v1390 = vsel %vm816, %v1327, 0
      %v1393 = vsel %vm816, %v1332, 0
      %v1396 = vsel %vm816, %v1337, 0
      %v1399 = vsel %vm816, %v1342, 0
      %v1402 = vsel %vm816, %v1347, 0
      %1404 = vmatprep.subr.bf16.mxu0 0
      %1405 = vmatpush1.bf16.msra.mxu0 %v751
      %1406 = vmatprep.subr.bf16.mxu0 0
      %1407 = vmatpush1.bf16.msra.mxu0 %v750
      %1408 = vmatprep.subr.bf16.mxu0 0
      %1409 = vmatpush1.bf16.msra.mxu0 %v749
      %1410 = vmatprep.subr.bf16.mxu0 0
      %1411 = vmatpush1.bf16.msra.mxu0 %v748
      %1412 = vmatprep.subr.bf16.mxu0 0
      %1413 = vmatpush1.bf16.msra.mxu0 %v747
      %1414 = vmatprep.subr.bf16.mxu0 0
      %1415 = vmatpush1.bf16.msra.mxu0 %v746
      %1416 = vmatprep.subr.bf16.mxu0 0
      %1417 = vmatpush1.bf16.msra.mxu0 %v745
      %1418 = vmatprep.subr.bf16.mxu0 0
      %1419 = vmatpush1.bf16.msra.mxu0 %v744
      %1420 = vmatprep.subr.bf16.mxu0 0
      %1421 = vmatpush2.bf16.msra.mxu0 %v759
      %1422 = vmatprep.subr.bf16.mxu0 0
      %1423 = vmatpush2.bf16.msra.mxu0 %v758
      %1424 = vmatprep.subr.bf16.mxu0 0
      %1425 = vmatpush2.bf16.msra.mxu0 %v757
      %1426 = vmatprep.subr.bf16.mxu0 0
      %1427 = vmatpush2.bf16.msra.mxu0 %v756
      %1428 = vmatprep.subr.bf16.mxu0 0
      %1429 = vmatpush2.bf16.msra.mxu0 %v755
      %1430 = vmatprep.subr.bf16.mxu0 0
      %1431 = vmatpush2.bf16.msra.mxu0 %v754
      %1432 = vmatprep.subr.bf16.mxu0 0
      %1433 = vmatpush2.bf16.msra.mxu0 %v753
      %1434 = vmatprep.subr.bf16.mxu0 0
      %1435 = vmatpush2.bf16.msra.mxu0 %v752
      %1436 = vmatprep.mubr.bf16.mxu0 %v1309
      %1437 = vmatmul.mubr.bf16.gmra.mxu0 %v1308
      %v1438 = vpop.f32.mrf.mxu0
      %v1439 = vadd.f32 0.0, %v1438
      %v1440 = vpop.f32.mrf.mxu0
      %v1441 = vpop.f32.mrf.mxu0
      %v1442 = vadd.f32 0.0, %v1441
      %v1443 = vpop.f32.mrf.mxu0
      %1444 = vmatprep.mubr.bf16.mxu0 %v1314
      %1445 = vmatmul.mubr.bf16.gmra.mxu0 %v1313
      %v1446 = vpop.f32.mrf.mxu0
      %v1447 = vadd.f32 0.0, %v1446
      %v1448 = vpop.f32.mrf.mxu0
      %v1449 = vpop.f32.mrf.mxu0
      %v1450 = vadd.f32 0.0, %v1449
      %v1451 = vpop.f32.mrf.mxu0
      %1452 = vmatprep.mubr.bf16.mxu0 %v1319
      %1453 = vmatmul.mubr.bf16.gmra.mxu0 %v1318
      %v1454 = vpop.f32.mrf.mxu0
      %v1455 = vadd.f32 0.0, %v1454
      %v1456 = vpop.f32.mrf.mxu0
      %v1457 = vpop.f32.mrf.mxu0
      %v1458 = vadd.f32 0.0, %v1457
      %v1459 = vpop.f32.mrf.mxu0
      %1460 = vmatprep.mubr.bf16.mxu0 %v1324
      %1461 = vmatmul.mubr.bf16.gmra.mxu0 %v1323
      %v1462 = vpop.f32.mrf.mxu0
      %v1463 = vadd.f32 0.0, %v1462
      %v1464 = vpop.f32.mrf.mxu0
      %v1465 = vpop.f32.mrf.mxu0
      %v1466 = vadd.f32 0.0, %v1465
      %v1467 = vpop.f32.mrf.mxu0
      %1468 = vmatprep.mubr.bf16.mxu0 %v1329
      %1469 = vmatmul.mubr.bf16.gmra.mxu0 %v1328
      %v1470 = vpop.f32.mrf.mxu0
      %v1471 = vadd.f32 0.0, %v1470
      %v1472 = vpop.f32.mrf.mxu0
      %v1473 = vpop.f32.mrf.mxu0
      %v1474 = vadd.f32 0.0, %v1473
      %v1475 = vpop.f32.mrf.mxu0
      %1476 = vmatprep.mubr.bf16.mxu0 %v1334
      %1477 = vmatmul.mubr.bf16.gmra.mxu0 %v1333
      %v1478 = vpop.f32.mrf.mxu0
      %v1479 = vadd.f32 0.0, %v1478
      %v1480 = vpop.f32.mrf.mxu0
      %v1481 = vpop.f32.mrf.mxu0
      %v1482 = vadd.f32 0.0, %v1481
      %v1483 = vpop.f32.mrf.mxu0
      %1484 = vmatprep.mubr.bf16.mxu0 %v1339
      %1485 = vmatmul.mubr.bf16.gmra.mxu0 %v1338
      %v1486 = vpop.f32.mrf.mxu0
      %v1487 = vadd.f32 0.0, %v1486
      %v1488 = vpop.f32.mrf.mxu0
      %v1489 = vpop.f32.mrf.mxu0
      %v1490 = vadd.f32 0.0, %v1489
      %v1491 = vpop.f32.mrf.mxu0
      %1492 = vmatprep.mubr.bf16.mxu0 %v1344
      %1493 = vmatmul.mubr.bf16.gmra.mxu0 %v1343
      %v1494 = vpop.f32.mrf.mxu0
      %v1495 = vadd.f32 0.0, %v1494
      %v1496 = vpop.f32.mrf.mxu0
      %v1497 = vpop.f32.mrf.mxu0
      %v1498 = vadd.f32 0.0, %v1497
      %v1499 = vpop.f32.mrf.mxu0
      %1500 = vdwg.mxu0
      %1501 = vmatprep.subr.bf16.mxu0 0
      %1502 = vmatpush1.bf16.msra.mxu0 %v767
      %1503 = vmatprep.subr.bf16.mxu0 0
      %1504 = vmatpush1.bf16.msra.mxu0 %v766
      %1505 = vmatprep.subr.bf16.mxu0 0
      %1506 = vmatpush1.bf16.msra.mxu0 %v765
      %1507 = vmatprep.subr.bf16.mxu0 0
      %1508 = vmatpush1.bf16.msra.mxu0 %v764
      %1509 = vmatprep.subr.bf16.mxu0 0
      %1510 = vmatpush1.bf16.msra.mxu0 %v763
      %1511 = vmatprep.subr.bf16.mxu0 0
      %1512 = vmatpush1.bf16.msra.mxu0 %v762
      %1513 = vmatprep.subr.bf16.mxu0 0
      %1514 = vmatpush1.bf16.msra.mxu0 %v761
      %1515 = vmatprep.subr.bf16.mxu0 0
      %1516 = vmatpush1.bf16.msra.mxu0 %v760
      %1517 = vmatprep.subr.bf16.mxu0 0
      %1518 = vmatpush2.bf16.msra.mxu0 %v775
      %1519 = vmatprep.subr.bf16.mxu0 0
      %1520 = vmatpush2.bf16.msra.mxu0 %v774
      %1521 = vmatprep.subr.bf16.mxu0 0
      %1522 = vmatpush2.bf16.msra.mxu0 %v773
      %1523 = vmatprep.subr.bf16.mxu0 0
      %1524 = vmatpush2.bf16.msra.mxu0 %v772
      %1525 = vmatprep.subr.bf16.mxu0 0
      %1526 = vmatpush2.bf16.msra.mxu0 %v771
      %1527 = vmatprep.subr.bf16.mxu0 0
      %1528 = vmatpush2.bf16.msra.mxu0 %v770
      %1529 = vmatprep.subr.bf16.mxu0 0
      %1530 = vmatpush2.bf16.msra.mxu0 %v769
      %1531 = vmatprep.subr.bf16.mxu0 0
      %1532 = vmatpush2.bf16.msra.mxu0 %v768
      %1533 = vmatprep.mubr.bf16.mxu0 %v1311
      %1534 = vmatmul.mubr.bf16.gmra.mxu0 %v1310
      %v1535 = vpop.f32.mrf.mxu0
      %v1536 = vadd.f32 %v1439, %v1535
      %v1537 = vpop.f32.mrf.mxu0
      %v1538 = vpop.f32.mrf.mxu0
      %v1539 = vadd.f32 %v1442, %v1538
      %v1540 = vpop.f32.mrf.mxu0
      %1541 = vmatprep.mubr.bf16.mxu0 %v1316
      %1542 = vmatmul.mubr.bf16.gmra.mxu0 %v1315
      %v1543 = vpop.f32.mrf.mxu0
      %v1544 = vadd.f32 %v1447, %v1543
      %v1545 = vpop.f32.mrf.mxu0
      %v1546 = vpop.f32.mrf.mxu0
      %v1547 = vadd.f32 %v1450, %v1546
      %v1548 = vpop.f32.mrf.mxu0
      %1549 = vmatprep.mubr.bf16.mxu0 %v1321
      %1550 = vmatmul.mubr.bf16.gmra.mxu0 %v1320
      %v1551 = vpop.f32.mrf.mxu0
      %v1552 = vadd.f32 %v1455, %v1551
      %v1553 = vpop.f32.mrf.mxu0
      %v1554 = vpop.f32.mrf.mxu0
      %v1555 = vadd.f32 %v1458, %v1554
      %v1556 = vpop.f32.mrf.mxu0
      %1557 = vmatprep.mubr.bf16.mxu0 %v1326
      %1558 = vmatmul.mubr.bf16.gmra.mxu0 %v1325
      %v1559 = vpop.f32.mrf.mxu0
      %v1560 = vadd.f32 %v1463, %v1559
      %v1561 = vpop.f32.mrf.mxu0
      %v1562 = vpop.f32.mrf.mxu0
      %v1563 = vadd.f32 %v1466, %v1562
      %v1564 = vpop.f32.mrf.mxu0
      %1565 = vmatprep.mubr.bf16.mxu0 %v1331
      %1566 = vmatmul.mubr.bf16.gmra.mxu0 %v1330
      %v1567 = vpop.f32.mrf.mxu0
      %v1568 = vadd.f32 %v1471, %v1567
      %v1569 = vpop.f32.mrf.mxu0
      %v1570 = vpop.f32.mrf.mxu0
      %v1571 = vadd.f32 %v1474, %v1570
      %v1572 = vpop.f32.mrf.mxu0
      %1573 = vmatprep.mubr.bf16.mxu0 %v1336
      %1574 = vmatmul.mubr.bf16.gmra.mxu0 %v1335
      %v1575 = vpop.f32.mrf.mxu0
      %v1576 = vadd.f32 %v1479, %v1575
      %v1577 = vpop.f32.mrf.mxu0
      %v1578 = vpop.f32.mrf.mxu0
      %v1579 = vadd.f32 %v1482, %v1578
      %v1580 = vpop.f32.mrf.mxu0
      %1581 = vmatprep.mubr.bf16.mxu0 %v1341
      %1582 = vmatmul.mubr.bf16.gmra.mxu0 %v1340
      %v1583 = vpop.f32.mrf.mxu0
      %v1584 = vadd.f32 %v1487, %v1583
      %v1585 = vpop.f32.mrf.mxu0
      %v1586 = vpop.f32.mrf.mxu0
      %v1587 = vadd.f32 %v1490, %v1586
      %v1588 = vpop.f32.mrf.mxu0
      %1589 = vmatprep.mubr.bf16.mxu0 %v1346
      %1590 = vmatmul.mubr.bf16.gmra.mxu0 %v1345
      %v1591 = vpop.f32.mrf.mxu0
      %v1592 = vadd.f32 %v1495, %v1591
      %v1593 = vpop.f32.mrf.mxu0
      %v1594 = vpop.f32.mrf.mxu0
      %v1595 = vadd.f32 %v1498, %v1594
      %v1596 = vpop.f32.mrf.mxu0
      %1597 = vdwg.mxu0
      %1598 = vmatprep.subr.bf16.mxu0 0
      %1599 = vmatpush1.bf16.msra.mxu0 0
      %1600 = vmatprep.subr.bf16.mxu0 0
      %1601 = vmatpush1.bf16.msra.mxu0 0
      %1602 = vmatprep.subr.bf16.mxu0 0
      %1603 = vmatpush1.bf16.msra.mxu0 0
      %1604 = vmatprep.subr.bf16.mxu0 0
      %1605 = vmatpush1.bf16.msra.mxu0 0
      %1606 = vmatprep.subr.bf16.mxu0 0
      %1607 = vmatpush1.bf16.msra.mxu0 %v779
      %1608 = vmatprep.subr.bf16.mxu0 0
      %1609 = vmatpush1.bf16.msra.mxu0 %v778
      %1610 = vmatprep.subr.bf16.mxu0 0
      %1611 = vmatpush1.bf16.msra.mxu0 %v777
      %1612 = vmatprep.subr.bf16.mxu0 0
      %1613 = vmatpush1.bf16.msra.mxu0 %v776
      %1614 = vmatprep.subr.bf16.mxu0 0
      %1615 = vmatpush2.bf16.msra.mxu0 0
      %1616 = vmatprep.subr.bf16.mxu0 0
      %1617 = vmatpush2.bf16.msra.mxu0 0
      %1618 = vmatprep.subr.bf16.mxu0 0
      %1619 = vmatpush2.bf16.msra.mxu0 0
      %1620 = vmatprep.subr.bf16.mxu0 0
      %1621 = vmatpush2.bf16.msra.mxu0 0
      %1622 = vmatprep.subr.bf16.mxu0 0
      %1623 = vmatpush2.bf16.msra.mxu0 0
      %1624 = vmatprep.subr.bf16.mxu0 0
      %1625 = vmatpush2.bf16.msra.mxu0 0
      %1626 = vmatprep.subr.bf16.mxu0 0
      %1627 = vmatpush2.bf16.msra.mxu0 0
      %1628 = vmatprep.subr.bf16.mxu0 0
      %1629 = vmatpush2.bf16.msra.mxu0 0
      %1630 = vmatprep.mubr.bf16.mxu0 0
      %1631 = vmatmul.mubr.bf16.gmra.mxu0 %v1381
      %v1632 = vpop.f32.mrf.mxu0
      %v1633 = vadd.f32 %v1536, %v1632
      %v1634 = vpop.f32.mrf.mxu0
      %v1635 = vpop.f32.mrf.mxu0
      %v1636 = vadd.f32 %v1539, %v1635
      %v1637 = vpop.f32.mrf.mxu0
      %1638 = vmatprep.mubr.bf16.mxu0 0
      %1639 = vmatmul.mubr.bf16.gmra.mxu0 %v1384
      %v1640 = vpop.f32.mrf.mxu0
      %v1641 = vadd.f32 %v1544, %v1640
      %v1642 = vpop.f32.mrf.mxu0
      %v1643 = vpop.f32.mrf.mxu0
      %v1644 = vadd.f32 %v1547, %v1643
      %v1645 = vpop.f32.mrf.mxu0
      %1646 = vmatprep.mubr.bf16.mxu0 0
      %1647 = vmatmul.mubr.bf16.gmra.mxu0 %v1387
      %v1648 = vpop.f32.mrf.mxu0
      %v1649 = vadd.f32 %v1552, %v1648
      %v1650 = vpop.f32.mrf.mxu0
      %v1651 = vpop.f32.mrf.mxu0
      %v1652 = vadd.f32 %v1555, %v1651
      %v1653 = vpop.f32.mrf.mxu0
      %1654 = vmatprep.mubr.bf16.mxu0 0
      %1655 = vmatmul.mubr.bf16.gmra.mxu0 %v1390
      %v1656 = vpop.f32.mrf.mxu0
      %v1657 = vadd.f32 %v1560, %v1656
      %v1658 = vpop.f32.mrf.mxu0
      %v1659 = vpop.f32.mrf.mxu0
      %v1660 = vadd.f32 %v1563, %v1659
      %v1661 = vpop.f32.mrf.mxu0
      %1662 = vmatprep.mubr.bf16.mxu0 0
      %1663 = vmatmul.mubr.bf16.gmra.mxu0 %v1393
      %v1664 = vpop.f32.mrf.mxu0
      %v1665 = vadd.f32 %v1568, %v1664
      %v1666 = vpop.f32.mrf.mxu0
      %v1667 = vpop.f32.mrf.mxu0
      %v1668 = vadd.f32 %v1571, %v1667
      %v1669 = vpop.f32.mrf.mxu0
      %1670 = vmatprep.mubr.bf16.mxu0 0
      %1671 = vmatmul.mubr.bf16.gmra.mxu0 %v1396
      %v1672 = vpop.f32.mrf.mxu0
      %v1673 = vadd.f32 %v1576, %v1672
      %v1674 = vpop.f32.mrf.mxu0
      %v1675 = vpop.f32.mrf.mxu0
      %v1676 = vadd.f32 %v1579, %v1675
      %v1677 = vpop.f32.mrf.mxu0
      %1678 = vmatprep.mubr.bf16.mxu0 0
      %1679 = vmatmul.mubr.bf16.gmra.mxu0 %v1399
      %v1680 = vpop.f32.mrf.mxu0
      %v1681 = vadd.f32 %v1584, %v1680
      %v1682 = vpop.f32.mrf.mxu0
      %v1683 = vpop.f32.mrf.mxu0
      %v1684 = vadd.f32 %v1587, %v1683
      %v1685 = vpop.f32.mrf.mxu0
      %1686 = vmatprep.mubr.bf16.mxu0 0
      %1687 = vmatmul.mubr.bf16.gmra.mxu0 %v1402
      %v1688 = vpop.f32.mrf.mxu0
      %v1689 = vadd.f32 %v1592, %v1688
      %v1690 = vpop.f32.mrf.mxu0
      %v1691 = vpop.f32.mrf.mxu0
      %v1692 = vadd.f32 %v1595, %v1691
      %v1693 = vpop.f32.mrf.mxu0
      %1694 = vdwg.mxu0
      %v1695 = vmax.f32 %v1070, %v1633
      %v1696 = vmax.f32 %v1073, %v1636
      %v1697 = vmax.f32 %v1078, %v1641
      %v1698 = vmax.f32 %v1081, %v1644
      %v1699 = vmax.f32 %v1086, %v1649
      %v1700 = vmax.f32 %v1089, %v1652
      %v1701 = vmax.f32 %v1094, %v1657
      %v1702 = vmax.f32 %v1097, %v1660
      %v1703 = vmax.f32 %v1102, %v1665
      %v1704 = vmax.f32 %v1105, %v1668
      %v1705 = vmax.f32 %v1110, %v1673
      %v1706 = vmax.f32 %v1113, %v1676
      %v1707 = vmax.f32 %v1118, %v1681
      %v1708 = vmax.f32 %v1121, %v1684
      %v1709 = vmax.f32 %v1126, %v1689
      %v1710 = vmax.f32 %v1129, %v1692
      %v1711 = vmax.f32 %v1695, %v1696
      %v1712 = vmax.f32 %v1697, %v1698
      %v1713 = vmax.f32 %v1699, %v1700
      %v1714 = vmax.f32 %v1701, %v1702
      %v1715 = vmax.f32 %v1703, %v1704
      %v1716 = vmax.f32 %v1705, %v1706
      %v1717 = vmax.f32 %v1707, %v1708
      %v1718 = vmax.f32 %v1709, %v1710
      %v1719 = vld [vmem:[%s3] sm:$0x1]
      %v1721 = vlaneseq
      %v1722 = vshrl.u32 %v1721, 7
      %v1723 = vsub.s32 0, %v1722
      %v1724 = vrot.slane %v1719, %v1723
      %v1726 = vadd.f32 %v1711, %v1724
      %v1727 = vadd.f32 %v1712, %v1724
      %v1728 = vadd.f32 %v1713, %v1724
      %v1729 = vadd.f32 %v1714, %v1724
      %v1730 = vadd.f32 %v1715, %v1724
      %v1731 = vadd.f32 %v1716, %v1724
      %v1732 = vadd.f32 %v1717, %v1724
      %v1733 = vadd.f32 %v1718, %v1724
      %v1734 = vmax.f32 %v1726, 0.0
      %v1735 = vmax.f32 %v1727, 0.0
      %v1736 = vmax.f32 %v1728, 0.0
      %v1737 = vmax.f32 %v1729, 0.0
      %v1738 = vmax.f32 %v1730, 0.0
      %v1739 = vmax.f32 %v1731, 0.0
      %v1740 = vmax.f32 %v1732, 0.0
      %v1741 = vmax.f32 %v1733, 0.0
      %v1742 = vpack.c.bf16 %v1734, %v1734
      %v1743 = vpack.c.bf16 %v1735, %v1735
      %v1744 = vpack.c.bf16 %v1736, %v1736
      %v1745 = vpack.c.bf16 %v1737, %v1737
      %v1746 = vpack.c.bf16 %v1738, %v1738
      %v1747 = vpack.c.bf16 %v1739, %v1739
      %v1748 = vpack.c.bf16 %v1740, %v1740
      %v1749 = vpack.c.bf16 %v1741, %v1741
      %1750 = vst [vmem:[%s277] sm:$0xf] %v1742
      %1751 = vst [vmem:[%s277 + $0x4] sm:$0xf] %v1743
      %1752 = vst [vmem:[%s277 + $0x8] sm:$0xf] %v1744
      %1753 = vst [vmem:[%s277 + $0xc] sm:$0xf] %v1745
      %1754 = vst [vmem:[%s277 + $0x10] sm:$0xf] %v1746
      %1755 = vst [vmem:[%s277 + $0x14] sm:$0xf] %v1747
      %1756 = vst [vmem:[%s277 + $0x18] sm:$0xf] %v1748
      %1757 = vst [vmem:[%s277 + $0x1c] sm:$0xf] %v1749
      %s1758 = smul.u32 8, %s20
      %p1759 = scmp.lt.s32.totalorder %s19, 1
      %s1760 = scalar_select %p1759, %s19, 1
      %p1761 = scmp.lt.s32.totalorder %s1758, 7
      %s1762 = scalar_select %p1761, %s1758, 7
      %s1763 = smul.addr %s1760, 8
      %s1764 = sadd.s32 %s1762, %s1763
      %s1765 = smul.addr %s1764, 4
      %s1766 = scalar_lea.vmem %s4, %s1765
      // Predicated region
      $region37: #{cifar10_forward.6} parent=35 // pred_check
        %p1767 = pneg %p145
      $region38: #{cifar10_forward.6} parent=35 // pred_check_branch
        %1769 = sbr.rel (%p1767) target = $region40
      $region39: #{cifar10_forward.6} parent=35 // pred_region
        %s1770 = smul.u32 8, %s20
      $region40: #{cifar10_forward.6} parent=35 // pred_fallthru
        _
    $region36: #{cifar10_forward.6} parent=5 // pred_fallthru
      _
    %p1771 = scmp.le.s32.totalorder 2, %s10
    // Predicated region
    $region41: #{cifar10_forward.6} parent=5 // pred_check
      %p1772 = pneg %p1771
    $region42: #{cifar10_forward.6} parent=5 // pred_check_branch
      %1774 = sbr.rel (%p1772) target = $region44
    $region43: #{cifar10_forward.6} parent=5 // pred_region
      %s1775 = ssub.s32 %s10, 2
      // Predicated region
      $region45: #{cifar10_forward.6} parent=43 // pred_check
        %p1776 = pneg %p151
      $region46: #{cifar10_forward.6} parent=43 // pred_check_branch
        %1778 = sbr.rel (%p1776) target = $region48
      $region47: #{cifar10_forward.6} parent=43 // pred_region
        %s1779 = smul.u32 8, %s22
        %p1780 = scmp.lt.s32.totalorder %s21, 1
        %s1781 = scalar_select %p1780, %s21, 1
        %p1782 = scmp.lt.s32.totalorder %s1779, 7
        %s1783 = scalar_select %p1782, %s1779, 7
        %s1784 = smul.addr %s1781, 8
        %s1785 = sadd.s32 %s1783, %s1784
        %s1786 = smul.addr %s1785, 4
        %s1787 = scalar_lea.vmem %s4, %s1786
      $region48: #{cifar10_forward.6} parent=43 // pred_fallthru
        _
    $region44: #{cifar10_forward.6} parent=5 // pred_fallthru
      _
  $region6: #{cifar10_forward.6} parent=0 // loop_footer
    %s14 = sadd.s32 1, %s10
  $region7: #{cifar10_forward.6} parent=0 // loop_footer_branch
    %9 = sbr.rel target = $region3
  $region8: #{cifar10_forward.6} parent=0 // loop_exit
    _

// kernel: cifar10_forward.7
$region0: #{cifar10_forward.7}
  #allocation0 [shape = 'u32[]', space=smem, size = 0x4, offset = 0x4, fixed_abs, tag = 'smem constant byte address 0x4 - core index']
  #allocation1 [shape = 'u32[144,128]{1,0:T(1,128)}', space=vmem, size = 0x12000, scoped, tag = 'internal scratch']
  #allocation2 [shape = 'f32[2,128]{1,0:T(2,128)}', space=vmem, size = 0x400, scoped, tag = 'scratch operand']
  %s0 = inlined_call_operand.vmem [shape: bf16[2,8192], index: 0, kind: input, shape index: {}]
  %s1 = inlined_call_operand.vmem [shape: bf16[8192,128], index: 1, kind: input, shape index: {}]
  %s2 = inlined_call_operand.vmem [shape: f32[1,128], index: 2, kind: input, shape index: {}]
  %s3 = inlined_call_operand.vmem [shape: f32[128,10], index: 3, kind: input, shape index: {}]
  %s4 = inlined_call_operand.vmem [shape: f32[1,10], index: 4, kind: input, shape index: {}]
  %s5 = inlined_call_operand.hbm [shape: f32[2,10], index: 5, kind: output, shape index: {}]
  %s6 = sld [smem:[#allocation0]]
  $region61: #{cifar10_forward.7} parent=0
    _
  %s8 = ssub.s32 1, %s6
  %s9 = scalar_select 0, %s8, %s6
  $region1: #{cifar10_forward.7} parent=0
    #allocation3 [shape = 'u8[1024]{0}', space=vmem, size = 0x400, scoped, tag = 'output window, operand 0, single buffered']
    #allocation4 [shape = 's32[2]{0}', space=sflag, size = 0x8, scoped, tag = 'scoped memory for cifar10_forward.7']
    %10 = vsyncpa [#allocation4], 0
    loop: start=0, step=1, limit=10
    $region2: #{cifar10_forward.7} parent=1 // loop_pre_header
      _
    $region3: #{cifar10_forward.7} parent=1 // loop_header
      %s12 = sphi 0, %s16
      %p13 = scmp.ge.s32.totalorder %s12, 10
      %s19 = sphi 0, %s31
      %s20 = sphi 0, %s27
      %s21 = sphi 0, %s19
      %s22 = sphi 0, %s20
      %s23 = sphi 0, %s21
      %s24 = sphi 0, %s22
      %s36 = sphi 0, %s38
      %s39 = sphi 0, %s36
      %s40 = sphi 0, %s39
      %s56 = sphi 0, %s40
      %s62 = sphi 0, %s64
      %s65 = sphi 0, %s62
      %s66 = sphi 0, %s65
      %s82 = sphi 0, %s66
      %s86 = sphi 0, %s86
      %s88 = sphi 0, %s86
      %s89 = sphi 0, %s88
      %s103 = sphi 0, %s89
      %s107 = sphi 0, %s107
      %s109 = sphi 0, %s107
      %s110 = sphi 0, %s109
      %s124 = sphi 0, %s110
      %s128 = sphi 0, %s128
      %s130 = sphi 0, %s128
      %s131 = sphi 0, %s130
      %s145 = sphi 0, %s131
      %s151 = sphi 0, %s153
      %s154 = sphi 0, %s151
      %s155 = sphi 0, %s154
      %s171 = sphi 0, %s155
    $region4: #{cifar10_forward.7} parent=1 // loop_header_branch
      %15 = sbr.rel (%p13) target = $region8
    $region5: #{cifar10_forward.7} parent=1 // loop_body
      %s17 = ssub.s32 %s12, 1
      %s18 = ssub.s32 %s12, 2
      %s25 = sadd.s32 1, %s20
      %p26 = scmp.ge.s32.totalorder %s25, 8
      %s27 = scalar_select %p26, 0, %s25
      %s28 = sadd.s32 1, %s19
      %s29 = scalar_select %p26, %s28, %s19
      %p30 = scmp.ge.s32.totalorder %s29, 1
      %s31 = scalar_select %p30, 0, %s29
      %s32 = ssub.s32 %s19, %s31
      %s33 = ssub.s32 %s20, %s27
      %s34 = sor.u32 %s32, %s33
      %p35 = scmp.eq.s32.totalorder %s34, 0
      %s37 = sadd.s32 %s36, 1
      %s38 = scalar_select %p35, %s36, %s37
      %p41 = pneg %p35
      %p42 = scmp.eq.s32.totalorder %s12, 7
      %p43 = por %p41, %p42
      %p44 = scmp.ne.s32.totalorder %s36, %s39
      %p45 = scmp.eq.s32.totalorder %s12, 0
      %p46 = por %p44, %p45
      %p47 = scmp.ne.s32.totalorder %s36, %s39
      %p48 = scmp.eq.s32.totalorder %s17, 7
      %p49 = por %p47, %p48
      %p50 = scmp.ne.s32.totalorder %s39, %s40
      %p51 = scmp.eq.s32.totalorder %s17, 0
      %p52 = por %p50, %p51
      %p53 = scmp.ne.s32.totalorder %s39, %s40
      %p54 = scmp.eq.s32.totalorder %s18, 7
      %p55 = por %p53, %p54
      %p57 = scmp.ne.s32.totalorder %s40, %s56
      %p58 = scmp.eq.s32.totalorder %s18, 0
      %p59 = por %p57, %p58
      %s60 = ssub.s32 %s20, %s27
      %p61 = scmp.eq.s32.totalorder %s60, 0
      %s63 = sadd.s32 %s62, 1
      %s64 = scalar_select %p61, %s62, %s63
      %p67 = pneg %p61
      %p68 = scmp.eq.s32.totalorder %s12, 7
      %p69 = por %p67, %p68
      %p70 = scmp.ne.s32.totalorder %s62, %s65
      %p71 = scmp.eq.s32.totalorder %s12, 0
      %p72 = por %p70, %p71
      %p73 = scmp.ne.s32.totalorder %s62, %s65
      %p74 = scmp.eq.s32.totalorder %s17, 7
      %p75 = por %p73, %p74
      %p76 = scmp.ne.s32.totalorder %s65, %s66
      %p77 = scmp.eq.s32.totalorder %s17, 0
      %p78 = por %p76, %p77
      %p79 = scmp.ne.s32.totalorder %s65, %s66
      %p80 = scmp.eq.s32.totalorder %s18, 7
      %p81 = por %p79, %p80
      %p83 = scmp.ne.s32.totalorder %s66, %s82
      %p84 = scmp.eq.s32.totalorder %s18, 0
      %p85 = por %p83, %p84
      %s87 = sadd.s32 %s86, 1
      %p90 = scmp.eq.s32.totalorder %s12, 7
      %p91 = scmp.ne.s32.totalorder %s86, %s88
      %p92 = scmp.eq.s32.totalorder %s12, 0
      %p93 = por %p91, %p92
      %p94 = scmp.ne.s32.totalorder %s86, %s88
      %p95 = scmp.eq.s32.totalorder %s17, 7
      %p96 = por %p94, %p95
      %p97 = scmp.ne.s32.totalorder %s88, %s89
      %p98 = scmp.eq.s32.totalorder %s17, 0
      %p99 = por %p97, %p98
      %p100 = scmp.ne.s32.totalorder %s88, %s89
      %p101 = scmp.eq.s32.totalorder %s18, 7
      %p102 = por %p100, %p101
      %p104 = scmp.ne.s32.totalorder %s89, %s103
      %p105 = scmp.eq.s32.totalorder %s18, 0
      %p106 = por %p104, %p105
      %s108 = sadd.s32 %s107, 1
      %p111 = scmp.eq.s32.totalorder %s12, 7
      %p112 = scmp.ne.s32.totalorder %s107, %s109
      %p113 = scmp.eq.s32.totalorder %s12, 0
      %p114 = por %p112, %p113
      %p115 = scmp.ne.s32.totalorder %s107, %s109
      %p116 = scmp.eq.s32.totalorder %s17, 7
      %p117 = por %p115, %p116
      %p118 = scmp.ne.s32.totalorder %s109, %s110
      %p119 = scmp.eq.s32.totalorder %s17, 0
      %p120 = por %p118, %p119
      %p121 = scmp.ne.s32.totalorder %s109, %s110
      %p122 = scmp.eq.s32.totalorder %s18, 7
      %p123 = por %p121, %p122
      %p125 = scmp.ne.s32.totalorder %s110, %s124
      %p126 = scmp.eq.s32.totalorder %s18, 0
      %p127 = por %p125, %p126
      %s129 = sadd.s32 %s128, 1
      %p132 = scmp.eq.s32.totalorder %s12, 7
      %p133 = scmp.ne.s32.totalorder %s128, %s130
      %p134 = scmp.eq.s32.totalorder %s12, 0
      %p135 = por %p133, %p134
      %p136 = scmp.ne.s32.totalorder %s128, %s130
      %p137 = scmp.eq.s32.totalorder %s17, 7
      %p138 = por %p136, %p137
      %p139 = scmp.ne.s32.totalorder %s130, %s131
      %p140 = scmp.eq.s32.totalorder %s17, 0
      %p141 = por %p139, %p140
      %p142 = scmp.ne.s32.totalorder %s130, %s131
      %p143 = scmp.eq.s32.totalorder %s18, 7
      %p144 = por %p142, %p143
      %p146 = scmp.ne.s32.totalorder %s131, %s145
      %p147 = scmp.eq.s32.totalorder %s18, 0
      %p148 = por %p146, %p147
      %s149 = ssub.s32 %s19, %s31
      %p150 = scmp.eq.s32.totalorder %s149, 0
      %s152 = sadd.s32 %s151, 1
      %s153 = scalar_select %p150, %s151, %s152
      %p156 = pneg %p150
      %p157 = scmp.eq.s32.totalorder %s12, 7
      %p158 = por %p156, %p157
      %p159 = scmp.ne.s32.totalorder %s151, %s154
      %p160 = scmp.eq.s32.totalorder %s12, 0
      %p161 = por %p159, %p160
      %p162 = scmp.ne.s32.totalorder %s151, %s154
      %p163 = scmp.eq.s32.totalorder %s17, 7
      %p164 = por %p162, %p163
      %p165 = scmp.ne.s32.totalorder %s154, %s155
      %p166 = scmp.eq.s32.totalorder %s17, 0
      %p167 = por %p165, %p166
      %p168 = scmp.ne.s32.totalorder %s154, %s155
      %p169 = scmp.eq.s32.totalorder %s18, 7
      %p170 = por %p168, %p169
      %p172 = scmp.ne.s32.totalorder %s155, %s171
      %p173 = scmp.eq.s32.totalorder %s18, 0
      %p174 = por %p172, %p173
      %p175 = scmp.le.s32.totalorder 1, %s12
      %p176 = scmp.lt.s32.totalorder %s12, 9
      %p177 = pnand %p175, %p176
      %p178 = pneg %p177
      // Predicated region
      $region9: #{cifar10_forward.7} parent=5 // pred_check
        _
      $region10: #{cifar10_forward.7} parent=5 // pred_check_branch
        %180 = sbr.rel (%p177) target = $region12
      $region11: #{cifar10_forward.7} parent=5 // pred_region
        %s181 = ssub.s32 %s12, 1
        // Predicated region
        $region13: #{cifar10_forward.7} parent=11 // pred_check
          %p182 = pneg %p99
        $region14: #{cifar10_forward.7} parent=11 // pred_check_branch
          %184 = sbr.rel (%p182) target = $region16
        $region15: #{cifar10_forward.7} parent=11 // pred_region
          _
        $region16: #{cifar10_forward.7} parent=11 // pred_fallthru
          _
        // Predicated region
        $region17: #{cifar10_forward.7} parent=11 // pred_check
          %p185 = pneg %p120
        $region18: #{cifar10_forward.7} parent=11 // pred_check_branch
          %187 = sbr.rel (%p185) target = $region20
        $region19: #{cifar10_forward.7} parent=11 // pred_region
          _
        $region20: #{cifar10_forward.7} parent=11 // pred_fallthru
          _
        // Predicated region
        $region21: #{cifar10_forward.7} parent=11 // pred_check
          %p188 = pneg %p141
        $region22: #{cifar10_forward.7} parent=11 // pred_check_branch
          %190 = sbr.rel (%p188) target = $region24
        $region23: #{cifar10_forward.7} parent=11 // pred_region
          _
        $region24: #{cifar10_forward.7} parent=11 // pred_fallthru
          _
      $region12: #{cifar10_forward.7} parent=5 // pred_fallthru
        _
      %p191 = scmp.lt.s32.totalorder %s12, 8
      // Predicated region
      $region25: #{cifar10_forward.7} parent=5 // pred_check
        %p192 = pneg %p191
      $region26: #{cifar10_forward.7} parent=5 // pred_check_branch
        %194 = sbr.rel (%p192) target = $region28
      $region27: #{cifar10_forward.7} parent=5 // pred_region
        // Predicated region
        $region29: #{cifar10_forward.7} parent=27 // pred_check
          %p195 = pneg %p46
        $region30: #{cifar10_forward.7} parent=27 // pred_check_branch
          %197 = sbr.rel (%p195) target = $region32
        $region31: #{cifar10_forward.7} parent=27 // pred_region
          %s198 = smul.u32 8, %s20
          %p199 = scmp.lt.s32.totalorder %s19, 0
          %s200 = scalar_select %p199, %s19, 0
          %p201 = scmp.lt.s32.totalorder %s198, 63
          %s202 = scalar_select %p201, %s198, 63
          %s203 = smul.addr %s200, 64
          %s204 = sadd.s32 %s202, %s203
          %s205 = scalar_lea.vmem %s0, %s204
          %s206 = smul.u32 8, %s20
        $region32: #{cifar10_forward.7} parent=27 // pred_fallthru
          _
        // Predicated region
        $region33: #{cifar10_forward.7} parent=27 // pred_check
          %p207 = pneg %p72
        $region34: #{cifar10_forward.7} parent=27 // pred_check_branch
          %209 = sbr.rel (%p207) target = $region36
        $region35: #{cifar10_forward.7} parent=27 // pred_region
          %s210 = smul.u32 128, %s20
          %p211 = scmp.lt.s32.totalorder %s210, 1023
          %s212 = scalar_select %p211, %s210, 1023
          %s213 = smul.addr %s212, 4
          %s214 = scalar_lea.vmem %s1, %s213
          %s215 = smul.u32 128, %s20
        $region36: #{cifar10_forward.7} parent=27 // pred_fallthru
          _
      $region28: #{cifar10_forward.7} parent=5 // pred_fallthru
        _
      %p216 = scmp.le.s32.totalorder 1, %s12
      %p217 = scmp.lt.s32.totalorder %s12, 9
      %p218 = pnand %p216, %p217
      %p219 = pneg %p218
      // Predicated region
      $region37: #{cifar10_forward.7} parent=5 // pred_check
        _
      $region38: #{cifar10_forward.7} parent=5 // pred_check_branch
        %221 = sbr.rel (%p218) target = $region40
      $region39: #{cifar10_forward.7} parent=5 // pred_region
        %s222 = ssub.s32 %s12, 1
        %s223 = smul.u32 8, %s22
        %p224 = scmp.lt.s32.totalorder %s21, 0
        %s225 = scalar_select %p224, %s21, 0
        %p226 = scmp.lt.s32.totalorder %s223, 63
        %s227 = scalar_select %p226, %s223, 63
        %s228 = smul.addr %s225, 64
        %s229 = sadd.s32 %s227, %s228
        %s230 = scalar_lea.vmem %s0, %s229
        %p231 = pneg %p52
        %p232 = pneg %p49
        %s233 = smul.u32 128, %s22
        %p234 = scmp.lt.s32.totalorder %s233, 1023
        %s235 = scalar_select %p234, %s233, 1023
        %s236 = smul.addr %s235, 4
        %s237 = scalar_lea.vmem %s1, %s236
        %p238 = pneg %p78
        %p239 = pneg %p75
        %p240 = pneg %p99
        %p241 = pneg %p96
        %p242 = pneg %p120
        %p243 = pneg %p117
        %p244 = pneg %p141
        %p245 = pneg %p138
        %p246 = pneg %p167
        %p247 = pneg %p164
        %s248 = smul.u32 8, %s22
        %p249 = scmp.lt.s32.totalorder %s21, 0
        %s250 = scalar_select %p249, %s21, 0
        %p251 = scmp.lt.s32.totalorder %s248, 63
        %s252 = scalar_select %p251, %s248, 63
        %s253 = smul.addr %s250, 64
        %s254 = sadd.s32 %s252, %s253
        %s255 = scalar_lea.vmem %s0, %s254
        %s256 = smul.u32 8, %s22
        %s257 = smul.u32 128, %s22
        %p258 = scmp.lt.s32.totalorder %s257, 1023
        %s259 = scalar_select %p258, %s257, 1023
        %s260 = smul.addr %s259, 4
        %s261 = scalar_lea.vmem %s1, %s260
        %s262 = smul.u32 128, %s22
        %p264 = scmp.eq.s32.totalorder %s22, 0
        // Predicated region
        $region41: #{cifar10_forward.7} parent=39 // pred_check
          %p265 = pneg %p264
        $region42: #{cifar10_forward.7} parent=39 // pred_check_branch
          %267 = sbr.rel (%p265) target = $region44
        $region43: #{cifar10_forward.7} parent=39 // pred_region
          %268 = vst [vmem:[#allocation2] sm:$0x3] 0.0
        $region44: #{cifar10_forward.7} parent=39 // pred_fallthru
          _
        %v269 = vld [vmem:[#allocation2] sm:$0x3]
        %v270 = vld [vmem:[%s255] sm:$0xff]
        %v271 = vld [vmem:[%s261] sm:$0xf]
        %v272 = vld [vmem:[%s261 + $0x4] sm:$0xf]
        %v273 = vld [vmem:[%s261 + $0x8] sm:$0xf]
        %v274 = vld [vmem:[%s261 + $0xc] sm:$0xf]
        %v275 = vld [vmem:[%s261 + $0x10] sm:$0xf]
        %v276 = vld [vmem:[%s261 + $0x14] sm:$0xf]
        %v277 = vld [vmem:[%s261 + $0x18] sm:$0xf]
        %v278 = vld [vmem:[%s261 + $0x1c] sm:$0xf]
        %v279 = vld [vmem:[%s261 + $0x20] sm:$0xf]
        %v280 = vld [vmem:[%s261 + $0x24] sm:$0xf]
        %v281 = vld [vmem:[%s261 + $0x28] sm:$0xf]
        %v282 = vld [vmem:[%s261 + $0x2c] sm:$0xf]
        %v283 = vld [vmem:[%s261 + $0x30] sm:$0xf]
        %v284 = vld [vmem:[%s261 + $0x34] sm:$0xf]
        %v285 = vld [vmem:[%s261 + $0x38] sm:$0xf]
        %v286 = vld [vmem:[%s261 + $0x3c] sm:$0xf]
        %v287 = vld [vmem:[%s261 + $0x40] sm:$0xf]
        %v288 = vld [vmem:[%s261 + $0x44] sm:$0xf]
        %v289 = vld [vmem:[%s261 + $0x48] sm:$0xf]
        %v290 = vld [vmem:[%s261 + $0x4c] sm:$0xf]
        %v291 = vld [vmem:[%s261 + $0x50] sm:$0xf]
        %v292 = vld [vmem:[%s261 + $0x54] sm:$0xf]
        %v293 = vld [vmem:[%s261 + $0x58] sm:$0xf]
        %v294 = vld [vmem:[%s261 + $0x5c] sm:$0xf]
        %v295 = vld [vmem:[%s261 + $0x60] sm:$0xf]
        %v296 = vld [vmem:[%s261 + $0x64] sm:$0xf]
        %v297 = vld [vmem:[%s261 + $0x68] sm:$0xf]
        %v298 = vld [vmem:[%s261 + $0x6c] sm:$0xf]
        %v299 = vld [vmem:[%s261 + $0x70] sm:$0xf]
        %v300 = vld [vmem:[%s261 + $0x74] sm:$0xf]
        %v301 = vld [vmem:[%s261 + $0x78] sm:$0xf]
        %v302 = vld [vmem:[%s261 + $0x7c] sm:$0xf]
        %v303 = vld [vmem:[%s261 + $0x80] sm:$0xf]
        %v304 = vld [vmem:[%s261 + $0x84] sm:$0xf]
        %v305 = vld [vmem:[%s261 + $0x88] sm:$0xf]
        %v306 = vld [vmem:[%s261 + $0x8c] sm:$0xf]
        %v307 = vld [vmem:[%s261 + $0x90] sm:$0xf]
        %v308 = vld [vmem:[%s261 + $0x94] sm:$0xf]
        %v309 = vld [vmem:[%s261 + $0x98] sm:$0xf]
        %v310 = vld [vmem:[%s261 + $0x9c] sm:$0xf]
        %v311 = vld [vmem:[%s261 + $0xa0] sm:$0xf]
        %v312 = vld [vmem:[%s261 + $0xa4] sm:$0xf]
        %v313 = vld [vmem:[%s261 + $0xa8] sm:$0xf]
        %v314 = vld [vmem:[%s261 + $0xac] sm:$0xf]
        %v315 = vld [vmem:[%s261 + $0xb0] sm:$0xf]
        %v316 = vld [vmem:[%s261 + $0xb4] sm:$0xf]
        %v317 = vld [vmem:[%s261 + $0xb8] sm:$0xf]
        %v318 = vld [vmem:[%s261 + $0xbc] sm:$0xf]
        %v319 = vld [vmem:[%s261 + $0xc0] sm:$0xf]
        %v320 = vld [vmem:[%s261 + $0xc4] sm:$0xf]
        %v321 = vld [vmem:[%s261 + $0xc8] sm:$0xf]
        %v322 = vld [vmem:[%s261 + $0xcc] sm:$0xf]
        %v323 = vld [vmem:[%s261 + $0xd0] sm:$0xf]
        %v324 = vld [vmem:[%s261 + $0xd4] sm:$0xf]
        %v325 = vld [vmem:[%s261 + $0xd8] sm:$0xf]
        %v326 = vld [vmem:[%s261 + $0xdc] sm:$0xf]
        %v327 = vld [vmem:[%s261 + $0xe0] sm:$0xf]
        %v328 = vld [vmem:[%s261 + $0xe4] sm:$0xf]
        %v329 = vld [vmem:[%s261 + $0xe8] sm:$0xf]
        %v330 = vld [vmem:[%s261 + $0xec] sm:$0xf]
        %v331 = vld [vmem:[%s261 + $0xf0] sm:$0xf]
        %v332 = vld [vmem:[%s261 + $0xf4] sm:$0xf]
        %v333 = vld [vmem:[%s261 + $0xf8] sm:$0xf]
        %v334 = vld [vmem:[%s261 + $0xfc] sm:$0xf]
        %v335 = vld [vmem:[%s261 + $0x100] sm:$0xf]
        %v336 = vld [vmem:[%s261 + $0x104] sm:$0xf]
        %v337 = vld [vmem:[%s261 + $0x108] sm:$0xf]
        %v338 = vld [vmem:[%s261 + $0x10c] sm:$0xf]
        %v339 = vld [vmem:[%s261 + $0x110] sm:$0xf]
        %v340 = vld [vmem:[%s261 + $0x114] sm:$0xf]
        %v341 = vld [vmem:[%s261 + $0x118] sm:$0xf]
        %v342 = vld [vmem:[%s261 + $0x11c] sm:$0xf]
        %v343 = vld [vmem:[%s261 + $0x120] sm:$0xf]
        %v344 = vld [vmem:[%s261 + $0x124] sm:$0xf]
        %v345 = vld [vmem:[%s261 + $0x128] sm:$0xf]
        %v346 = vld [vmem:[%s261 + $0x12c] sm:$0xf]
        %v347 = vld [vmem:[%s261 + $0x130] sm:$0xf]
        %v348 = vld [vmem:[%s261 + $0x134] sm:$0xf]
        %v349 = vld [vmem:[%s261 + $0x138] sm:$0xf]
        %v350 = vld [vmem:[%s261 + $0x13c] sm:$0xf]
        %v351 = vld [vmem:[%s261 + $0x140] sm:$0xf]
        %v352 = vld [vmem:[%s261 + $0x144] sm:$0xf]
        %v353 = vld [vmem:[%s261 + $0x148] sm:$0xf]
        %v354 = vld [vmem:[%s261 + $0x14c] sm:$0xf]
        %v355 = vld [vmem:[%s261 + $0x150] sm:$0xf]
        %v356 = vld [vmem:[%s261 + $0x154] sm:$0xf]
        %v357 = vld [vmem:[%s261 + $0x158] sm:$0xf]
        %v358 = vld [vmem:[%s261 + $0x15c] sm:$0xf]
        %v359 = vld [vmem:[%s261 + $0x160] sm:$0xf]
        %v360 = vld [vmem:[%s261 + $0x164] sm:$0xf]
        %v361 = vld [vmem:[%s261 + $0x168] sm:$0xf]
        %v362 = vld [vmem:[%s261 + $0x16c] sm:$0xf]
        %v363 = vld [vmem:[%s261 + $0x170] sm:$0xf]
        %v364 = vld [vmem:[%s261 + $0x174] sm:$0xf]
        %v365 = vld [vmem:[%s261 + $0x178] sm:$0xf]
        %v366 = vld [vmem:[%s261 + $0x17c] sm:$0xf]
        %v367 = vld [vmem:[%s261 + $0x180] sm:$0xf]
        %v368 = vld [vmem:[%s261 + $0x184] sm:$0xf]
        %v369 = vld [vmem:[%s261 + $0x188] sm:$0xf]
        %v370 = vld [vmem:[%s261 + $0x18c] sm:$0xf]
        %v371 = vld [vmem:[%s261 + $0x190] sm:$0xf]
        %v372 = vld [vmem:[%s261 + $0x194] sm:$0xf]
        %v373 = vld [vmem:[%s261 + $0x198] sm:$0xf]
        %v374 = vld [vmem:[%s261 + $0x19c] sm:$0xf]
        %v375 = vld [vmem:[%s261 + $0x1a0] sm:$0xf]
        %v376 = vld [vmem:[%s261 + $0x1a4] sm:$0xf]
        %v377 = vld [vmem:[%s261 + $0x1a8] sm:$0xf]
        %v378 = vld [vmem:[%s261 + $0x1ac] sm:$0xf]
        %v379 = vld [vmem:[%s261 + $0x1b0] sm:$0xf]
        %v380 = vld [vmem:[%s261 + $0x1b4] sm:$0xf]
        %v381 = vld [vmem:[%s261 + $0x1b8] sm:$0xf]
        %v382 = vld [vmem:[%s261 + $0x1bc] sm:$0xf]
        %v383 = vld [vmem:[%s261 + $0x1c0] sm:$0xf]
        %v384 = vld [vmem:[%s261 + $0x1c4] sm:$0xf]
        %v385 = vld [vmem:[%s261 + $0x1c8] sm:$0xf]
        %v386 = vld [vmem:[%s261 + $0x1cc] sm:$0xf]
        %v387 = vld [vmem:[%s261 + $0x1d0] sm:$0xf]
        %v388 = vld [vmem:[%s261 + $0x1d4] sm:$0xf]
        %v389 = vld [vmem:[%s261 + $0x1d8] sm:$0xf]
        %v390 = vld [vmem:[%s261 + $0x1dc] sm:$0xf]
        %v391 = vld [vmem:[%s261 + $0x1e0] sm:$0xf]
        %v392 = vld [vmem:[%s261 + $0x1e4] sm:$0xf]
        %v393 = vld [vmem:[%s261 + $0x1e8] sm:$0xf]
        %v394 = vld [vmem:[%s261 + $0x1ec] sm:$0xf]
        %v395 = vld [vmem:[%s261 + $0x1f0] sm:$0xf]
        %v396 = vld [vmem:[%s261 + $0x1f4] sm:$0xf]
        %v397 = vld [vmem:[%s261 + $0x1f8] sm:$0xf]
        %v398 = vld [vmem:[%s261 + $0x1fc] sm:$0xf]
        %v400 = vcombine.high %v270, %v270
        %v402 = vunpack.c.l.s4 1966171168
        %v403 = vunpack.c.0.s8 %v402
        %v404 = vlaneseq
        %v405 = vshrl.u32 %v404, 7
        %v406 = vsub.s32 %v403, %v405
        %v407 = vrot.slane %v270, %v406
        %v409 = vunpack.c.l.s4 1966171168
        %v410 = vunpack.c.0.s8 %v409
        %v411 = vlaneseq
        %v412 = vshrl.u32 %v411, 7
        %v413 = vsub.s32 %v410, %v412
        %v414 = vrot.slane %v400, %v413
        %v415 = vcombine.high %v407, %v407
        %v416 = vcombine.high %v414, %v414
        %v418 = vunpack.c.l.s4 1966171168
        %v419 = vunpack.c.0.s8 %v418
        %v420 = vlaneseq
        %v421 = vshrl.u32 %v420, 7
        %v422 = vsub.s32 %v419, %v421
        %v423 = vrot.slane %v407, %v422
        %v425 = vunpack.c.l.s4 1966171168
        %v426 = vunpack.c.0.s8 %v425
        %v427 = vlaneseq
        %v428 = vshrl.u32 %v427, 7
        %v429 = vsub.s32 %v426, %v428
        %v430 = vrot.slane %v414, %v429
        %v432 = vunpack.c.l.s4 1966171168
        %v433 = vunpack.c.0.s8 %v432
        %v434 = vlaneseq
        %v435 = vshrl.u32 %v434, 7
        %v436 = vsub.s32 %v433, %v435
        %v437 = vrot.slane %v415, %v436
        %v439 = vunpack.c.l.s4 1966171168
        %v440 = vunpack.c.0.s8 %v439
        %v441 = vlaneseq
        %v442 = vshrl.u32 %v441, 7
        %v443 = vsub.s32 %v440, %v442
        %v444 = vrot.slane %v416, %v443
        %v445 = vcombine.high %v423, %v423
        %v446 = vcombine.high %v430, %v430
        %v447 = vcombine.high %v437, %v437
        %v448 = vcombine.high %v444, %v444
        %v585 = vunpack.c.l.b16 %v271
        %v586 = vunpack.c.l.b16 %v272
        %v587 = vunpack.c.l.b16 %v273
        %v588 = vunpack.c.l.b16 %v274
        %v589 = vunpack.c.l.b16 %v275
        %v590 = vunpack.c.l.b16 %v276
        %v591 = vunpack.c.l.b16 %v277
        %v592 = vunpack.c.l.b16 %v278
        %v593 = vunpack.c.l.b16 %v279
        %v594 = vunpack.c.l.b16 %v280
        %v595 = vunpack.c.l.b16 %v281
        %v596 = vunpack.c.l.b16 %v282
        %v597 = vunpack.c.l.b16 %v283
        %v598 = vunpack.c.l.b16 %v284
        %v599 = vunpack.c.l.b16 %v285
        %v600 = vunpack.c.l.b16 %v286
        %v601 = vunpack.c.l.b16 %v287
        %v602 = vunpack.c.l.b16 %v288
        %v603 = vunpack.c.l.b16 %v289
        %v604 = vunpack.c.l.b16 %v290
        %v605 = vunpack.c.l.b16 %v291
        %v606 = vunpack.c.l.b16 %v292
        %v607 = vunpack.c.l.b16 %v293
        %v608 = vunpack.c.l.b16 %v294
        %v609 = vunpack.c.l.b16 %v295
        %v610 = vunpack.c.l.b16 %v296
        %v611 = vunpack.c.l.b16 %v297
        %v612 = vunpack.c.l.b16 %v298
        %v613 = vunpack.c.l.b16 %v299
        %v614 = vunpack.c.l.b16 %v300
        %v615 = vunpack.c.l.b16 %v301
        %v616 = vunpack.c.l.b16 %v302
        %v617 = vunpack.c.l.b16 %v303
        %v618 = vunpack.c.l.b16 %v304
        %v619 = vunpack.c.l.b16 %v305
        %v620 = vunpack.c.l.b16 %v306
        %v621 = vunpack.c.l.b16 %v307
        %v622 = vunpack.c.l.b16 %v308
        %v623 = vunpack.c.l.b16 %v309
        %v624 = vunpack.c.l.b16 %v310
        %v625 = vunpack.c.l.b16 %v311
        %v626 = vunpack.c.l.b16 %v312
        %v627 = vunpack.c.l.b16 %v313
        %v628 = vunpack.c.l.b16 %v314
        %v629 = vunpack.c.l.b16 %v315
        %v630 = vunpack.c.l.b16 %v316
        %v631 = vunpack.c.l.b16 %v317
        %v632 = vunpack.c.l.b16 %v318
        %v633 = vunpack.c.l.b16 %v319
        %v634 = vunpack.c.l.b16 %v320
        %v635 = vunpack.c.l.b16 %v321
        %v636 = vunpack.c.l.b16 %v322
        %v637 = vunpack.c.l.b16 %v323
        %v638 = vunpack.c.l.b16 %v324
        %v639 = vunpack.c.l.b16 %v325
        %v640 = vunpack.c.l.b16 %v326
        %v641 = vunpack.c.l.b16 %v327
        %v642 = vunpack.c.l.b16 %v328
        %v643 = vunpack.c.l.b16 %v329
        %v644 = vunpack.c.l.b16 %v330
        %v645 = vunpack.c.l.b16 %v331
        %v646 = vunpack.c.l.b16 %v332
        %v647 = vunpack.c.l.b16 %v333
        %v648 = vunpack.c.l.b16 %v334
        %v649 = vunpack.c.l.b16 %v335
        %v650 = vunpack.c.l.b16 %v336
        %v651 = vunpack.c.l.b16 %v337
        %v652 = vunpack.c.l.b16 %v338
        %v653 = vunpack.c.l.b16 %v339
        %v654 = vunpack.c.l.b16 %v340
        %v655 = vunpack.c.l.b16 %v341
        %v656 = vunpack.c.l.b16 %v342
        %v657 = vunpack.c.l.b16 %v343
        %v658 = vunpack.c.l.b16 %v344
        %v659 = vunpack.c.l.b16 %v345
        %v660 = vunpack.c.l.b16 %v346
        %v661 = vunpack.c.l.b16 %v347
        %v662 = vunpack.c.l.b16 %v348
        %v663 = vunpack.c.l.b16 %v349
        %v664 = vunpack.c.l.b16 %v350
        %v665 = vunpack.c.l.b16 %v351
        %v666 = vunpack.c.l.b16 %v352
        %v667 = vunpack.c.l.b16 %v353
        %v668 = vunpack.c.l.b16 %v354
        %v669 = vunpack.c.l.b16 %v355
        %v670 = vunpack.c.l.b16 %v356
        %v671 = vunpack.c.l.b16 %v357
        %v672 = vunpack.c.l.b16 %v358
        %v673 = vunpack.c.l.b16 %v359
        %v674 = vunpack.c.l.b16 %v360
        %v675 = vunpack.c.l.b16 %v361
        %v676 = vunpack.c.l.b16 %v362
        %v677 = vunpack.c.l.b16 %v363
        %v678 = vunpack.c.l.b16 %v364
        %v679 = vunpack.c.l.b16 %v365
        %v680 = vunpack.c.l.b16 %v366
        %v681 = vunpack.c.l.b16 %v367
        %v682 = vunpack.c.l.b16 %v368
        %v683 = vunpack.c.l.b16 %v369
        %v684 = vunpack.c.l.b16 %v370
        %v685 = vunpack.c.l.b16 %v371
        %v686 = vunpack.c.l.b16 %v372
        %v687 = vunpack.c.l.b16 %v373
        %v688 = vunpack.c.l.b16 %v374
        %v689 = vunpack.c.l.b16 %v375
        %v690 = vunpack.c.l.b16 %v376
        %v691 = vunpack.c.l.b16 %v377
        %v692 = vunpack.c.l.b16 %v378
        %v693 = vunpack.c.l.b16 %v379
        %v694 = vunpack.c.l.b16 %v380
        %v695 = vunpack.c.l.b16 %v381
        %v696 = vunpack.c.l.b16 %v382
        %v697 = vunpack.c.l.b16 %v383
        %v698 = vunpack.c.l.b16 %v384
        %v699 = vunpack.c.l.b16 %v385
        %v700 = vunpack.c.l.b16 %v386
        %v701 = vunpack.c.l.b16 %v387
        %v702 = vunpack.c.l.b16 %v388
        %v703 = vunpack.c.l.b16 %v389
        %v704 = vunpack.c.l.b16 %v390
        %v705 = vunpack.c.l.b16 %v391
        %v706 = vunpack.c.l.b16 %v392
        %v707 = vunpack.c.l.b16 %v393
        %v708 = vunpack.c.l.b16 %v394
        %v709 = vunpack.c.l.b16 %v395
        %v710 = vunpack.c.l.b16 %v396
        %v711 = vunpack.c.l.b16 %v397
        %v712 = vunpack.c.l.b16 %v398
        %v713 = vpack.c.b16 %v586, %v585
        %v714 = vpack.c.b16 %v588, %v587
        %v715 = vpack.c.b16 %v590, %v589
        %v716 = vpack.c.b16 %v592, %v591
        %v717 = vpack.c.b16 %v594, %v593
        %v718 = vpack.c.b16 %v596, %v595
        %v719 = vpack.c.b16 %v598, %v597
        %v720 = vpack.c.b16 %v600, %v599
        %v721 = vpack.c.b16 %v602, %v601
        %v722 = vpack.c.b16 %v604, %v603
        %v723 = vpack.c.b16 %v606, %v605
        %v724 = vpack.c.b16 %v608, %v607
        %v725 = vpack.c.b16 %v610, %v609
        %v726 = vpack.c.b16 %v612, %v611
        %v727 = vpack.c.b16 %v614, %v613
        %v728 = vpack.c.b16 %v616, %v615
        %v729 = vpack.c.b16 %v618, %v617
        %v730 = vpack.c.b16 %v620, %v619
        %v731 = vpack.c.b16 %v622, %v621
        %v732 = vpack.c.b16 %v624, %v623
        %v733 = vpack.c.b16 %v626, %v625
        %v734 = vpack.c.b16 %v628, %v627
        %v735 = vpack.c.b16 %v630, %v629
        %v736 = vpack.c.b16 %v632, %v631
        %v737 = vpack.c.b16 %v634, %v633
        %v738 = vpack.c.b16 %v636, %v635
        %v739 = vpack.c.b16 %v638, %v637
        %v740 = vpack.c.b16 %v640, %v639
        %v741 = vpack.c.b16 %v642, %v641
        %v742 = vpack.c.b16 %v644, %v643
        %v743 = vpack.c.b16 %v646, %v645
        %v744 = vpack.c.b16 %v648, %v647
        %v745 = vpack.c.b16 %v650, %v649
        %v746 = vpack.c.b16 %v652, %v651
        %v747 = vpack.c.b16 %v654, %v653
        %v748 = vpack.c.b16 %v656, %v655
        %v749 = vpack.c.b16 %v658, %v657
        %v750 = vpack.c.b16 %v660, %v659
        %v751 = vpack.c.b16 %v662, %v661
        %v752 = vpack.c.b16 %v664, %v663
        %v753 = vpack.c.b16 %v666, %v665
        %v754 = vpack.c.b16 %v668, %v667
        %v755 = vpack.c.b16 %v670, %v669
        %v756 = vpack.c.b16 %v672, %v671
        %v757 = vpack.c.b16 %v674, %v673
        %v758 = vpack.c.b16 %v676, %v675
        %v759 = vpack.c.b16 %v678, %v677
        %v760 = vpack.c.b16 %v680, %v679
        %v761 = vpack.c.b16 %v682, %v681
        %v762 = vpack.c.b16 %v684, %v683
        %v763 = vpack.c.b16 %v686, %v685
        %v764 = vpack.c.b16 %v688, %v687
        %v765 = vpack.c.b16 %v690, %v689
        %v766 = vpack.c.b16 %v692, %v691
        %v767 = vpack.c.b16 %v694, %v693
        %v768 = vpack.c.b16 %v696, %v695
        %v769 = vpack.c.b16 %v698, %v697
        %v770 = vpack.c.b16 %v700, %v699
        %v771 = vpack.c.b16 %v702, %v701
        %v772 = vpack.c.b16 %v704, %v703
        %v773 = vpack.c.b16 %v706, %v705
        %v774 = vpack.c.b16 %v708, %v707
        %v775 = vpack.c.b16 %v710, %v709
        %v776 = vpack.c.b16 %v712, %v711
        %841 = vmatprep.subr.bf16.mxu0 0
        %842 = vmatpush1.bf16.msra.mxu0 %v720
        %843 = vmatprep.subr.bf16.mxu0 0
        %844 = vmatpush1.bf16.msra.mxu0 %v719
        %845 = vmatprep.subr.bf16.mxu0 0
        %846 = vmatpush1.bf16.msra.mxu0 %v718
        %847 = vmatprep.subr.bf16.mxu0 0
        %848 = vmatpush1.bf16.msra.mxu0 %v717
        %849 = vmatprep.subr.bf16.mxu0 0
        %850 = vmatpush1.bf16.msra.mxu0 %v716
        %851 = vmatprep.subr.bf16.mxu0 0
        %852 = vmatpush1.bf16.msra.mxu0 %v715
        %853 = vmatprep.subr.bf16.mxu0 0
        %854 = vmatpush1.bf16.msra.mxu0 %v714
        %855 = vmatprep.subr.bf16.mxu0 0
        %856 = vmatpush1.bf16.msra.mxu0 %v713
        %857 = vmatprep.subr.bf16.mxu0 0
        %858 = vmatpush2.bf16.msra.mxu0 %v728
        %859 = vmatprep.subr.bf16.mxu0 0
        %860 = vmatpush2.bf16.msra.mxu0 %v727
        %861 = vmatprep.subr.bf16.mxu0 0
        %862 = vmatpush2.bf16.msra.mxu0 %v726
        %863 = vmatprep.subr.bf16.mxu0 0
        %864 = vmatpush2.bf16.msra.mxu0 %v725
        %865 = vmatprep.subr.bf16.mxu0 0
        %866 = vmatpush2.bf16.msra.mxu0 %v724
        %867 = vmatprep.subr.bf16.mxu0 0
        %868 = vmatpush2.bf16.msra.mxu0 %v723
        %869 = vmatprep.subr.bf16.mxu0 0
        %870 = vmatpush2.bf16.msra.mxu0 %v722
        %871 = vmatprep.subr.bf16.mxu0 0
        %872 = vmatpush2.bf16.msra.mxu0 %v721
        %873 = vmatprep.mubr.bf16.mxu0 %v437
        %874 = vmatmul.mubr.bf16.gmra.mxu0 %v423
        %v875 = vpop.f32.mrf.mxu0
        %v876 = vadd.f32 0.0, %v875
        %v877 = vpop.f32.mrf.mxu0
        %v878 = vpop.f32.mrf.mxu0
        %v879 = vpop.f32.mrf.mxu0
        %880 = vdwg.mxu0
        %881 = vmatprep.subr.bf16.mxu0 0
        %882 = vmatpush1.bf16.msra.mxu0 %v736
        %883 = vmatprep.subr.bf16.mxu0 0
        %884 = vmatpush1.bf16.msra.mxu0 %v735
        %885 = vmatprep.subr.bf16.mxu0 0
        %886 = vmatpush1.bf16.msra.mxu0 %v734
        %887 = vmatprep.subr.bf16.mxu0 0
        %888 = vmatpush1.bf16.msra.mxu0 %v733
        %889 = vmatprep.subr.bf16.mxu0 0
        %890 = vmatpush1.bf16.msra.mxu0 %v732
        %891 = vmatprep.subr.bf16.mxu0 0
        %892 = vmatpush1.bf16.msra.mxu0 %v731
        %893 = vmatprep.subr.bf16.mxu0 0
        %894 = vmatpush1.bf16.msra.mxu0 %v730
        %895 = vmatprep.subr.bf16.mxu0 0
        %896 = vmatpush1.bf16.msra.mxu0 %v729
        %897 = vmatprep.subr.bf16.mxu0 0
        %898 = vmatpush2.bf16.msra.mxu0 %v744
        %899 = vmatprep.subr.bf16.mxu0 0
        %900 = vmatpush2.bf16.msra.mxu0 %v743
        %901 = vmatprep.subr.bf16.mxu0 0
        %902 = vmatpush2.bf16.msra.mxu0 %v742
        %903 = vmatprep.subr.bf16.mxu0 0
        %904 = vmatpush2.bf16.msra.mxu0 %v741
        %905 = vmatprep.subr.bf16.mxu0 0
        %906 = vmatpush2.bf16.msra.mxu0 %v740
        %907 = vmatprep.subr.bf16.mxu0 0
        %908 = vmatpush2.bf16.msra.mxu0 %v739
        %909 = vmatprep.subr.bf16.mxu0 0
        %910 = vmatpush2.bf16.msra.mxu0 %v738
        %911 = vmatprep.subr.bf16.mxu0 0
        %912 = vmatpush2.bf16.msra.mxu0 %v737
        %913 = vmatprep.mubr.bf16.mxu0 %v447
        %914 = vmatmul.mubr.bf16.gmra.mxu0 %v445
        %v915 = vpop.f32.mrf.mxu0
        %v916 = vadd.f32 %v876, %v915
        %v917 = vpop.f32.mrf.mxu0
        %v918 = vpop.f32.mrf.mxu0
        %v919 = vpop.f32.mrf.mxu0
        %920 = vdwg.mxu0
        %921 = vmatprep.subr.bf16.mxu0 0
        %922 = vmatpush1.bf16.msra.mxu0 %v752
        %923 = vmatprep.subr.bf16.mxu0 0
        %924 = vmatpush1.bf16.msra.mxu0 %v751
        %925 = vmatprep.subr.bf16.mxu0 0
        %926 = vmatpush1.bf16.msra.mxu0 %v750
        %927 = vmatprep.subr.bf16.mxu0 0
        %928 = vmatpush1.bf16.msra.mxu0 %v749
        %929 = vmatprep.subr.bf16.mxu0 0
        %930 = vmatpush1.bf16.msra.mxu0 %v748
        %931 = vmatprep.subr.bf16.mxu0 0
        %932 = vmatpush1.bf16.msra.mxu0 %v747
        %933 = vmatprep.subr.bf16.mxu0 0
        %934 = vmatpush1.bf16.msra.mxu0 %v746
        %935 = vmatprep.subr.bf16.mxu0 0
        %936 = vmatpush1.bf16.msra.mxu0 %v745
        %937 = vmatprep.subr.bf16.mxu0 0
        %938 = vmatpush2.bf16.msra.mxu0 %v760
        %939 = vmatprep.subr.bf16.mxu0 0
        %940 = vmatpush2.bf16.msra.mxu0 %v759
        %941 = vmatprep.subr.bf16.mxu0 0
        %942 = vmatpush2.bf16.msra.mxu0 %v758
        %943 = vmatprep.subr.bf16.mxu0 0
        %944 = vmatpush2.bf16.msra.mxu0 %v757
        %945 = vmatprep.subr.bf16.mxu0 0
        %946 = vmatpush2.bf16.msra.mxu0 %v756
        %947 = vmatprep.subr.bf16.mxu0 0
        %948 = vmatpush2.bf16.msra.mxu0 %v755
        %949 = vmatprep.subr.bf16.mxu0 0
        %950 = vmatpush2.bf16.msra.mxu0 %v754
        %951 = vmatprep.subr.bf16.mxu0 0
        %952 = vmatpush2.bf16.msra.mxu0 %v753
        %953 = vmatprep.mubr.bf16.mxu0 %v444
        %954 = vmatmul.mubr.bf16.gmra.mxu0 %v430
        %v955 = vpop.f32.mrf.mxu0
        %v956 = vadd.f32 %v916, %v955
        %v957 = vpop.f32.mrf.mxu0
        %v958 = vpop.f32.mrf.mxu0
        %v959 = vpop.f32.mrf.mxu0
        %960 = vdwg.mxu0
        %961 = vmatprep.subr.bf16.mxu0 0
        %962 = vmatpush1.bf16.msra.mxu0 %v768
        %963 = vmatprep.subr.bf16.mxu0 0
        %964 = vmatpush1.bf16.msra.mxu0 %v767
        %965 = vmatprep.subr.bf16.mxu0 0
        %966 = vmatpush1.bf16.msra.mxu0 %v766
        %967 = vmatprep.subr.bf16.mxu0 0
        %968 = vmatpush1.bf16.msra.mxu0 %v765
        %969 = vmatprep.subr.bf16.mxu0 0
        %970 = vmatpush1.bf16.msra.mxu0 %v764
        %971 = vmatprep.subr.bf16.mxu0 0
        %972 = vmatpush1.bf16.msra.mxu0 %v763
        %973 = vmatprep.subr.bf16.mxu0 0
        %974 = vmatpush1.bf16.msra.mxu0 %v762
        %975 = vmatprep.subr.bf16.mxu0 0
        %976 = vmatpush1.bf16.msra.mxu0 %v761
        %977 = vmatprep.subr.bf16.mxu0 0
        %978 = vmatpush2.bf16.msra.mxu0 %v776
        %979 = vmatprep.subr.bf16.mxu0 0
        %980 = vmatpush2.bf16.msra.mxu0 %v775
        %981 = vmatprep.subr.bf16.mxu0 0
        %982 = vmatpush2.bf16.msra.mxu0 %v774
        %983 = vmatprep.subr.bf16.mxu0 0
        %984 = vmatpush2.bf16.msra.mxu0 %v773
        %985 = vmatprep.subr.bf16.mxu0 0
        %986 = vmatpush2.bf16.msra.mxu0 %v772
        %987 = vmatprep.subr.bf16.mxu0 0
        %988 = vmatpush2.bf16.msra.mxu0 %v771
        %989 = vmatprep.subr.bf16.mxu0 0
        %990 = vmatpush2.bf16.msra.mxu0 %v770
        %991 = vmatprep.subr.bf16.mxu0 0
        %992 = vmatpush2.bf16.msra.mxu0 %v769
        %993 = vmatprep.mubr.bf16.mxu0 %v448
        %994 = vmatmul.mubr.bf16.gmra.mxu0 %v446
        %v995 = vpop.f32.mrf.mxu0
        %v996 = vadd.f32 %v956, %v995
        %v997 = vpop.f32.mrf.mxu0
        %v998 = vpop.f32.mrf.mxu0
        %v999 = vpop.f32.mrf.mxu0
        %1000 = vdwg.mxu0
        %v1001 = vadd.f32 %v269, %v996
        %1002 = vst [vmem:[#allocation2] sm:$0x3] %v1001
        %p1003 = scmp.eq.s32.totalorder %s22, 7
        // Predicated region
        $region45: #{cifar10_forward.7} parent=39 // pred_check
          %p1004 = pneg %p1003
        $region46: #{cifar10_forward.7} parent=39 // pred_check_branch
          %1006 = sbr.rel (%p1004) target = $region48
        $region47: #{cifar10_forward.7} parent=39 // pred_region
          %v1007 = vld [vmem:[#allocation2] sm:$0x3]
          %v1008 = vld [vmem:[%s2] sm:$0x1]
          %v1010 = vlaneseq
          %v1011 = vshrl.u32 %v1010, 7
          %v1012 = vsub.s32 0, %v1011
          %v1013 = vrot.slane %v1008, %v1012
          %v1015 = vadd.f32 %v1007, %v1013
          %v1016 = vmax.f32 %v1015, 0.0
          %v1017 = vld [vmem:[%s3] sm:$0xff]
          %v1018 = vld [vmem:[%s3 + $0x8] sm:$0xff]
          %v1019 = vld [vmem:[%s3 + $0x10] sm:$0xff]
          %v1020 = vld [vmem:[%s3 + $0x18] sm:$0xff]
          %v1021 = vld [vmem:[%s3 + $0x20] sm:$0xff]
          %v1022 = vld [vmem:[%s3 + $0x28] sm:$0xff]
          %v1023 = vld [vmem:[%s3 + $0x30] sm:$0xff]
          %v1024 = vld [vmem:[%s3 + $0x38] sm:$0xff]
          %v1025 = vld [vmem:[%s3 + $0x40] sm:$0xff]
          %v1026 = vld [vmem:[%s3 + $0x48] sm:$0xff]
          %v1027 = vld [vmem:[%s3 + $0x50] sm:$0xff]
          %v1028 = vld [vmem:[%s3 + $0x58] sm:$0xff]
          %v1029 = vld [vmem:[%s3 + $0x60] sm:$0xff]
          %v1030 = vld [vmem:[%s3 + $0x68] sm:$0xff]
          %v1031 = vld [vmem:[%s3 + $0x70] sm:$0xff]
          %v1032 = vld [vmem:[%s3 + $0x78] sm:$0xff]
          %v1033 = vld [vmem:[%s4] sm:$0x1]
          %v1035 = vlaneseq
          %v1036 = vshrl.u32 %v1035, 7
          %v1037 = vsub.s32 0, %v1036
          %v1038 = vrot.slane %v1033, %v1037
          %1040 = vmatprep.subr.mxu0 0.0
          %1041 = vmatpush1.msra.mxu0 %v1032
          %1042 = vmatprep.subr.mxu0 0.0
          %1043 = vmatpush1.msra.mxu0 %v1031
          %1044 = vmatprep.subr.mxu0 0.0
          %1045 = vmatpush1.msra.mxu0 %v1030
          %1046 = vmatprep.subr.mxu0 0.0
          %1047 = vmatpush1.msra.mxu0 %v1029
          %1048 = vmatprep.subr.mxu0 0.0
          %1049 = vmatpush1.msra.mxu0 %v1028
          %1050 = vmatprep.subr.mxu0 0.0
          %1051 = vmatpush1.msra.mxu0 %v1027
          %1052 = vmatprep.subr.mxu0 0.0
          %1053 = vmatpush1.msra.mxu0 %v1026
          %1054 = vmatprep.subr.mxu0 0.0
          %1055 = vmatpush1.msra.mxu0 %v1025
          %1056 = vmatprep.subr.mxu0 0.0
          %1057 = vmatpush1.msra.mxu0 %v1024
          %1058 = vmatprep.subr.mxu0 0.0
          %1059 = vmatpush1.msra.mxu0 %v1023
          %1060 = vmatprep.subr.mxu0 0.0
          %1061 = vmatpush1.msra.mxu0 %v1022
          %1062 = vmatprep.subr.mxu0 0.0
          %1063 = vmatpush1.msra.mxu0 %v1021
          %1064 = vmatprep.subr.mxu0 0.0
          %1065 = vmatpush1.msra.mxu0 %v1020
          %1066 = vmatprep.subr.mxu0 0.0
          %1067 = vmatpush1.msra.mxu0 %v1019
          %1068 = vmatprep.subr.mxu0 0.0
          %1069 = vmatpush1.msra.mxu0 %v1018
          %1070 = vmatprep.subr.mxu0 0.0
          %1071 = vmatpush1.msra.mxu0 %v1017
          %1072 = vmatprep.subr.mxu0 0.0
          %1073 = vmatpush2.msra.mxu0 0.0
          %1074 = vmatprep.subr.mxu0 0.0
          %1075 = vmatpush2.msra.mxu0 0.0
          %1076 = vmatprep.subr.mxu0 0.0
          %1077 = vmatpush2.msra.mxu0 0.0
          %1078 = vmatprep.subr.mxu0 0.0
          %1079 = vmatpush2.msra.mxu0 0.0
          %1080 = vmatprep.subr.mxu0 0.0
          %1081 = vmatpush2.msra.mxu0 0.0
          %1082 = vmatprep.subr.mxu0 0.0
          %1083 = vmatpush2.msra.mxu0 0.0
          %1084 = vmatprep.subr.mxu0 0.0
          %1085 = vmatpush2.msra.mxu0 0.0
          %1086 = vmatprep.subr.mxu0 0.0
          %1087 = vmatpush2.msra.mxu0 0.0
          %1088 = vmatprep.subr.mxu0 0.0
          %1089 = vmatpush2.msra.mxu0 0.0
          %1090 = vmatprep.subr.mxu0 0.0
          %1091 = vmatpush2.msra.mxu0 0.0
          %1092 = vmatprep.subr.mxu0 0.0
          %1093 = vmatpush2.msra.mxu0 0.0
          %1094 = vmatprep.subr.mxu0 0.0
          %1095 = vmatpush2.msra.mxu0 0.0
          %1096 = vmatprep.subr.mxu0 0.0
          %1097 = vmatpush2.msra.mxu0 0.0
          %1098 = vmatprep.subr.mxu0 0.0
          %1099 = vmatpush2.msra.mxu0 0.0
          %1100 = vmatprep.subr.mxu0 0.0
          %1101 = vmatpush2.msra.mxu0 0.0
          %1102 = vmatprep.subr.mxu0 0.0
          %1103 = vmatpush2.msra.mxu0 0.0
          %1104 = vmatprep.mubr.f32.mxu0 0.0
          %1105 = vmatmul.mubr.f32.gmra.mxu0 %v1016
          %v1106 = vpop.f32.mrf.mxu0
          %v1107 = vadd.f32 %v1038, %v1106
          %v1108 = vpop.f32.mrf.mxu0
          %1109 = vdwg.mxu0
          %vm1110 = vcmask 74752
          %1111 = vst.msk [vmem:[#allocation3] sm:$0x3] %vm1110, %v1107
        $region48: #{cifar10_forward.7} parent=39 // pred_fallthru
          _
        // Predicated region
        $region49: #{cifar10_forward.7} parent=39 // pred_check
          %p1112 = pneg %p164
        $region50: #{cifar10_forward.7} parent=39 // pred_check_branch
          %1114 = sbr.rel (%p1112) target = $region52
        $region51: #{cifar10_forward.7} parent=39 // pred_region
          %s1116 = ssub.s32 32, 32
          %1117 = vsyncadd [#allocation4], %s1116
          %s1118 = smul.addr %s21, 32
          %s1119 = scalar_lea.hbm %s5, %s1118
          %s1121 = sshll.u32 [#allocation3], 4
          %s1122 = int_to_ptr.vmem [resolvable:$true] %s1121
          %1124 = dma.vmem_to_hbm [thread:$0]  %s1122, 32, %s1119, [#allocation4]
        $region52: #{cifar10_forward.7} parent=39 // pred_fallthru
          _
        // Predicated region
        $region53: #{cifar10_forward.7} parent=39 // pred_check
          %p1125 = pneg %p164
        $region54: #{cifar10_forward.7} parent=39 // pred_check_branch
          %1127 = sbr.rel (%p1125) target = $region56
        $region55: #{cifar10_forward.7} parent=39 // pred_region
          %1128 = dma.done [#allocation4], 32
        $region56: #{cifar10_forward.7} parent=39 // pred_fallthru
          _
      $region40: #{cifar10_forward.7} parent=5 // pred_fallthru
        _
      %p1129 = scmp.le.s32.totalorder 2, %s12
      // Predicated region
      $region57: #{cifar10_forward.7} parent=5 // pred_check
        %p1130 = pneg %p1129
      $region58: #{cifar10_forward.7} parent=5 // pred_check_branch
        %1132 = sbr.rel (%p1130) target = $region60
      $region59: #{cifar10_forward.7} parent=5 // pred_region
        %s1133 = ssub.s32 %s12, 2
      $region60: #{cifar10_forward.7} parent=5 // pred_fallthru
        _
    $region6: #{cifar10_forward.7} parent=1 // loop_footer
      %s16 = sadd.s32 1, %s12
    $region7: #{cifar10_forward.7} parent=1 // loop_footer_branch
      %11 = sbr.rel target = $region3
    $region8: #{cifar10_forward.7} parent=1 // loop_exit
      _
    %1134 = vsyncpa [#allocation4], 1
    %s1135 = scalar_lea.sflag [#allocation4], 1
    %1136 = vsyncpa %s1135, 1

</llo_original>
